<compile_context>
chip_gen: v5e
topology: v5e:2x2
jax: 0.10.0
libtpu: 0.0.40
codegen_flags: <defaults>
</compile_context>

<pallas_src>
import functools

import jax
import jax.numpy as jnp
from jax.experimental import pallas as pl
from jax.experimental.pallas import tpu as pltpu

LANE = 128


def _round_up(x, m):
    return (x + m - 1) // m * m


def _fold_bn(gamma, beta, mean, var, eps=1e-5):
    scale = gamma / jnp.sqrt(var + eps)
    bias = beta - mean * scale
    return scale, bias


def _bottleneck_kernel(x_ref, w1_ref, b1_ref, w2_ref, b2_ref, w3_ref, b3_ref,
                       *rest, stride, H, W, Cin_p, P_p, Cout_p, Ho, Wo,
                       has_shortcut):
    if has_shortcut:
        wsc_ref, bsc_ref, out_ref, pad_ref = rest
    else:
        out_ref, pad_ref = rest

    cdt = jnp.bfloat16  # matmul-input dtype (f32 accumulation on the MXU)

    # ---- conv1 (1x1) + bn1 (scale folded into w1) + relu --------------------
    x2d = x_ref[...].reshape(H * W, Cin_p)                       # bf16, lane-dense
    h1 = jnp.dot(x2d, w1_ref[...], preferred_element_type=jnp.float32)
    h1 = jnp.maximum(h1 + b1_ref[...], 0.0).astype(cdt)          # (H*W, P_p)

    # ---- conv2 (3x3, stride, pad=1) as a single im2col matmul ---------------
    # Zero only the 1-pixel halo ring; the interior is overwritten every step.
    pad_ref[0:1, :, :] = jnp.zeros((1, W + 2, P_p), cdt)
    pad_ref[H + 1:H + 2, :, :] = jnp.zeros((1, W + 2, P_p), cdt)
    pad_ref[:, 0:1, :] = jnp.zeros((H + 2, 1, P_p), cdt)
    pad_ref[:, W + 1:W + 2, :] = jnp.zeros((H + 2, 1, P_p), cdt)
    pad_ref[1:H + 1, 1:W + 1, :] = h1.reshape(H, W, P_p)

    def tap(dy, dx):
        if stride == 1:
            sl_y, sl_x = pl.ds(dy, Ho), pl.ds(dx, Wo)
        else:  # strided ref loads instead of slicing a materialized array
            sl_y, sl_x = pl.ds(dy, Ho, stride), pl.ds(dx, Wo, stride)
        return pad_ref[sl_y, sl_x, :].reshape(Ho * Wo, P_p)

    patches = jnp.concatenate(
        [tap(dy, dx) for dy in range(3) for dx in range(3)], axis=-1)
    h2 = jnp.dot(patches, w2_ref[...], preferred_element_type=jnp.float32)
    h2 = jnp.maximum(h2 + b2_ref[...], 0.0).astype(cdt)          # (Ho*Wo, P_p)

    # ---- conv3 (1x1) + bn3 ---------------------------------------------------
    h3 = jnp.dot(h2, w3_ref[...], preferred_element_type=jnp.float32)
    h3 = h3 + b3_ref[...]                                        # (Ho*Wo, Cout_p)

    # ---- shortcut ------------------------------------------------------------
    if has_shortcut:
        if stride == 1:
            xs = x2d
        else:
            xs = x_ref[pl.ds(0, Ho, stride), pl.ds(0, Wo, stride), :]
            xs = xs.reshape(Ho * Wo, Cin_p)
        sc = jnp.dot(xs, wsc_ref[...], preferred_element_type=jnp.float32)
        sc = sc + bsc_ref[...]
    else:
        # identity shortcut: stride == 1 and Cin_p == Cout_p (static guarantee)
        sc = x2d.astype(jnp.float32)

    out_ref[...] = jnp.maximum(h3 + sc, 0.0)                     # (Ho*Wo, Cout_p)


def bottleneck_forward(x_nchw, params, stride):
    """NCHW in / NCHW out, matching the PyTorch module (eval-mode BatchNorm)."""
    N, Cin, H, W = x_nchw.shape
    P = params['conv1_w'].shape[0]
    Cout = 4 * P
    Ho = (H + 2 - 3) // stride + 1
    Wo = (W + 2 - 3) // stride + 1

    Cin_p = _round_up(Cin, LANE)
    P_p = _round_up(P, LANE)
    Cout_p = _round_up(Cout, LANE)

    has_shortcut = 'sc_w' in params
    if not has_shortcut:
        assert stride == 1 and Cin == Cout, "identity shortcut requires matching shapes"

    # NHWC, channels zero-padded to the lane width, bf16 for the MXU path.
    x = jnp.transpose(x_nchw, (0, 2, 3, 1)).astype(jnp.float32)
    x = jnp.pad(x, ((0, 0), (0, 0), (0, 0), (0, Cin_p - Cin))).astype(jnp.bfloat16)

    s1, b1 = _fold_bn(*params['bn1'])
    s2, b2 = _fold_bn(*params['bn2'])
    s3, b3 = _fold_bn(*params['bn3'])

    # Fold BN scales into the conv weights (kernel only does bias + ReLU).
    w1 = params['conv1_w'][:, :, 0, 0].T * s1[None, :]                     # (Cin, P)
    w2 = jnp.transpose(params['conv2_w'], (2, 3, 1, 0)) * s2[None, None, None, :]
    w3 = params['conv3_w'][:, :, 0, 0].T * s3[None, :]                     # (P, 4P)

    w1p = jnp.zeros((Cin_p, P_p), jnp.float32).at[:Cin, :P].set(w1)
    w2p = jnp.zeros((3, 3, P_p, P_p), jnp.float32).at[:, :, :P, :P].set(w2)
    w2p = w2p.reshape(9 * P_p, P_p)
    w3p = jnp.zeros((P_p, Cout_p), jnp.float32).at[:P, :Cout].set(w3)
    b1p = jnp.zeros((1, P_p), jnp.float32).at[0, :P].set(b1)
    b2p = jnp.zeros((1, P_p), jnp.float32).at[0, :P].set(b2)
    b3p = jnp.zeros((1, Cout_p), jnp.float32).at[0, :Cout].set(b3)

    args = [x, w1p.astype(jnp.bfloat16), b1p, w2p.astype(jnp.bfloat16), b2p,
            w3p.astype(jnp.bfloat16), b3p]
    in_specs = [
        pl.BlockSpec((None, H, W, Cin_p), lambda n: (n, 0, 0, 0)),
        pl.BlockSpec((Cin_p, P_p), lambda n: (0, 0)),
        pl.BlockSpec((1, P_p), lambda n: (0, 0)),
        pl.BlockSpec((9 * P_p, P_p), lambda n: (0, 0)),
        pl.BlockSpec((1, P_p), lambda n: (0, 0)),
        pl.BlockSpec((P_p, Cout_p), lambda n: (0, 0)),
        pl.BlockSpec((1, Cout_p), lambda n: (0, 0)),
    ]

    weight_elems = Cin_p * P_p + 9 * P_p * P_p + P_p * Cout_p
    if has_shortcut:
        ssc, bsc = _fold_bn(*params['bn_sc'])
        wsc = params['sc_w'][:, :, 0, 0].T * ssc[None, :]                  # (Cin, 4P)
        wscp = jnp.zeros((Cin_p, Cout_p), jnp.float32).at[:Cin, :Cout].set(wsc)
        bscp = jnp.zeros((1, Cout_p), jnp.float32).at[0, :Cout].set(bsc)
        args += [wscp.astype(jnp.bfloat16), bscp]
        in_specs += [
            pl.BlockSpec((Cin_p, Cout_p), lambda n: (0, 0)),
            pl.BlockSpec((1, Cout_p), lambda n: (0, 0)),
        ]
        weight_elems += Cin_p * Cout_p

    rows = Ho * Wo
    flops = 2 * N * (H * W * Cin_p * P_p + rows * 9 * P_p * P_p
                     + rows * P_p * Cout_p
                     + (rows * Cin_p * Cout_p if has_shortcut else 0))
    bytes_accessed = (2 * N * H * W * Cin_p       # x (bf16)
                      + 2 * weight_elems          # weights (bf16)
                      + 4 * N * rows * Cout_p)    # out (f32)

    # VMEM budget: double-buffered x/out blocks + (double-buffered) weights +
    # pad scratch + working set.  Cap below v7x's 64 MiB physical VMEM.
    x_blk = 2 * H * W * Cin_p
    out_blk = 4 * rows * Cout_p
    pad_blk = 2 * (H + 2) * (W + 2) * P_p
    work = rows * (2 * 9 * P_p + 4 * (2 * P_p + 3 * Cout_p))
    need = 2 * (x_blk + out_blk) + 2 * 2 * weight_elems + pad_blk + work
    vmem_limit = int(min(max(2 * need, 32 * 1024 * 1024), 48 * 1024 * 1024))

    kernel = functools.partial(
        _bottleneck_kernel, stride=stride, H=H, W=W, Cin_p=Cin_p, P_p=P_p,
        Cout_p=Cout_p, Ho=Ho, Wo=Wo, has_shortcut=has_shortcut)

    out_flat = pl.pallas_call(
        kernel,
        grid=(N,),
        out_shape=jax.ShapeDtypeStruct((N, rows, Cout_p), jnp.float32),
        in_specs=in_specs,
        out_specs=pl.BlockSpec((None, rows, Cout_p), lambda n: (n, 0, 0)),
        scratch_shapes=[pltpu.VMEM((H + 2, W + 2, P_p), jnp.bfloat16)],
        compiler_params=pltpu.CompilerParams(
            dimension_semantics=("parallel",),
            vmem_limit_bytes=vmem_limit),
        cost_estimate=pl.CostEstimate(flops=int(flops), transcendentals=0,
                                      bytes_accessed=int(bytes_accessed)),
    )(*args)

    out = out_flat.reshape(N, Ho, Wo, Cout_p)[:, :, :, :Cout]
    return jnp.transpose(out, (0, 3, 1, 2))                       # back to NCHW


def init_params(key, in_planes, planes, stride):
    """Deterministic synthetic parameters (shapes match the PyTorch module)."""
    exp = 4
    ks = jax.random.split(key, 16)

    def bn_params(k, c):
        k1, k2, k3, k4 = jax.random.split(k, 4)
        gamma = 1.0 + 0.1 * jax.random.normal(k1, (c,), jnp.float32)
        beta = 0.1 * jax.random.normal(k2, (c,), jnp.float32)
        mean = 0.1 * jax.random.normal(k3, (c,), jnp.float32)
        var = 0.5 + 0.5 * jnp.abs(jax.random.normal(k4, (c,), jnp.float32))
        return (gamma, beta, mean, var)

    params = {
        'conv1_w': 0.1 * jax.random.normal(ks[0], (planes, in_planes, 1, 1),
                                           jnp.float32),
        'bn1': bn_params(ks[1], planes),
        'conv2_w': 0.1 * jax.random.normal(ks[2], (planes, planes, 3, 3),
                                           jnp.float32),
        'bn2': bn_params(ks[3], planes),
        'conv3_w': 0.1 * jax.random.normal(ks[4], (exp * planes, planes, 1, 1),
                                           jnp.float32),
        'bn3': bn_params(ks[5], exp * planes),
    }
    if stride != 1 or in_planes != exp * planes:
        params['sc_w'] = 0.1 * jax.random.normal(
            ks[6], (exp * planes, in_planes, 1, 1), jnp.float32)
        params['bn_sc'] = bn_params(ks[7], exp * planes)
    return params


def reference_forward(x, params, stride, eps=1e-5):
    """Plain-JAX reference mirroring the PyTorch forward (eval-mode BN)."""
    def conv(x, w, s, padding):
        return jax.lax.conv_general_dilated(
            x, w, (s, s), padding,
            dimension_numbers=('NCHW', 'OIHW', 'NCHW'),
            precision=jax.lax.Precision.HIGHEST)

    def bn(x, p):
        gamma, beta, mean, var = p
        return ((x - mean[None, :, None, None])
                / jnp.sqrt(var[None, :, None, None] + eps)
                * gamma[None, :, None, None] + beta[None, :, None, None])

    out = jax.nn.relu(bn(conv(x, params['conv1_w'], 1, 'VALID'), params['bn1']))
    out = jax.nn.relu(bn(conv(out, params['conv2_w'], stride, [(1, 1), (1, 1)]),
                         params['bn2']))
    out = bn(conv(out, params['conv3_w'], 1, 'VALID'), params['bn3'])
    if 'sc_w' in params:
        sc = bn(conv(x, params['sc_w'], stride, 'VALID'), params['bn_sc'])
    else:
        sc = x
    return jax.nn.relu(out + sc)


if __name__ == "__main__":
    key = jax.random.PRNGKey(0)
    k_x, k_p, k_x2, k_p2 = jax.random.split(key, 4)

    # Case 1: projection shortcut (in_planes != 4*planes), stride 1.
    N, in_planes, H, W = 2, 4, 16, 16
    planes, stride = 4, 1
    x = jax.random.normal(k_x, (N, in_planes, H, W), jnp.float32)
    params = init_params(k_p, in_planes, planes, stride)

    out = jax.block_until_ready(bottleneck_forward(x, params, stride))
    ref = jax.block_until_ready(reference_forward(x, params, stride))
    assert out.shape == (N, 4 * planes, H // stride, W // stride), out.shape
    assert jnp.allclose(out, ref, atol=3e-2, rtol=3e-2), \
        float(jnp.max(jnp.abs(out - ref)))

    # Case 2: identity shortcut (in_planes == 4*planes, stride 1) — exercises
    # the static specialization (no eye() matmul).
    in_planes2, planes2 = 16, 4
    x2 = jax.random.normal(k_x2, (N, in_planes2, H, W), jnp.float32)
    params2 = init_params(k_p2, in_planes2, planes2, 1)

    out2 = jax.block_until_ready(bottleneck_forward(x2, params2, 1))
    ref2 = jax.block_until_ready(reference_forward(x2, params2, 1))
    assert out2.shape == (N, 4 * planes2, H, W), out2.shape
    assert jnp.allclose(out2, ref2, atol=3e-2, rtol=3e-2), \
        float(jnp.max(jnp.abs(out2 - ref2)))

    print("KERNEL_OK")
</pallas_src>

<mosaic_0001>
module attributes {stable_mosaic.version = 11 : i64} {
  func.func @_bottleneck_kernel(%arg0: i32, %arg1: memref<1x16x16x128xbf16, #tpu.memory_space<vmem>>, %arg2: memref<128x128xbf16, #tpu.memory_space<vmem>>, %arg3: memref<1x128xf32, #tpu.memory_space<vmem>>, %arg4: memref<1152x128xbf16, #tpu.memory_space<vmem>>, %arg5: memref<1x128xf32, #tpu.memory_space<vmem>>, %arg6: memref<128x128xbf16, #tpu.memory_space<vmem>>, %arg7: memref<1x128xf32, #tpu.memory_space<vmem>>, %arg8: memref<128x128xbf16, #tpu.memory_space<vmem>>, %arg9: memref<1x128xf32, #tpu.memory_space<vmem>>, %arg10: memref<1x256x128xf32, #tpu.memory_space<vmem>>, %arg11: memref<18x18x128xbf16, #tpu.memory_space<vmem>>) attributes {dimension_semantics = [#tpu.dimension_semantics<parallel>], iteration_bounds = array<i64: 2>, scalar_prefetch = 0 : i64, scratch_operands = 1 : i64, tpu.core_type = #tpu.core_type<tc>, window_params = [{transform_indices = @transform_0, window_bounds = array<i64: 1, 16, 16, 128>}, {pipeline_mode = #tpu.pipeline_mode<synchronous>, transform_indices = @transform_1, window_bounds = array<i64: 128, 128>}, {pipeline_mode = #tpu.pipeline_mode<synchronous>, transform_indices = @transform_2, window_bounds = array<i64: 1, 128>}, {pipeline_mode = #tpu.pipeline_mode<synchronous>, transform_indices = @transform_3, window_bounds = array<i64: 1152, 128>}, {pipeline_mode = #tpu.pipeline_mode<synchronous>, transform_indices = @transform_4, window_bounds = array<i64: 1, 128>}, {pipeline_mode = #tpu.pipeline_mode<synchronous>, transform_indices = @transform_5, window_bounds = array<i64: 128, 128>}, {pipeline_mode = #tpu.pipeline_mode<synchronous>, transform_indices = @transform_6, window_bounds = array<i64: 1, 128>}, {pipeline_mode = #tpu.pipeline_mode<synchronous>, transform_indices = @transform_7, window_bounds = array<i64: 128, 128>}, {pipeline_mode = #tpu.pipeline_mode<synchronous>, transform_indices = @transform_8, window_bounds = array<i64: 1, 128>}, {transform_indices = @transform_9, window_bounds = array<i64: 1, 256, 128>}]} {
    %c0 = arith.constant 0 : index
    %c0_0 = arith.constant 0 : index
    %c0_1 = arith.constant 0 : index
    %c0_2 = arith.constant 0 : index
    %0 = vector.load %arg1[%c0, %c0_0, %c0_1, %c0_2] : memref<1x16x16x128xbf16, #tpu.memory_space<vmem>>, vector<1x16x16x128xbf16>
    %1 = vector.shape_cast %0 : vector<1x16x16x128xbf16> to vector<16x16x128xbf16>
    %2 = vector.shape_cast %1 : vector<16x16x128xbf16> to vector<256x128xbf16>
    %c0_3 = arith.constant 0 : index
    %c0_4 = arith.constant 0 : index
    %3 = vector.load %arg2[%c0_3, %c0_4] : memref<128x128xbf16, #tpu.memory_space<vmem>>, vector<128x128xbf16>
    %cst = arith.constant dense<0.000000e+00> : vector<256x128xf32>
    %4 = tpu.matmul %2, %3, %cst {dimension_numbers = #tpu.dot_dimension_numbers<[1], [0], [0], [1], [0, 0, 1, 1], [], []>} : vector<256x128xbf16>, vector<128x128xbf16>, vector<256x128xf32> -> vector<256x128xf32>
    %c0_5 = arith.constant 0 : index
    %c0_6 = arith.constant 0 : index
    %5 = vector.load %arg3[%c0_5, %c0_6] : memref<1x128xf32, #tpu.memory_space<vmem>>, vector<1x128xf32>
    %6 = vector.broadcast %5 : vector<1x128xf32> to vector<256x128xf32>
    %7 = arith.addf %4, %6 : vector<256x128xf32>
    %cst_7 = arith.constant 0.000000e+00 : f32
    %8 = vector.broadcast %cst_7 : f32 to vector<256x128xf32>
    %9 = arith.maximumf %7, %8 : vector<256x128xf32>
    %10 = arith.truncf %9 : vector<256x128xf32> to vector<256x128xbf16>
    %cst_8 = arith.constant 0.000000e+00 : bf16
    %11 = vector.broadcast %cst_8 : bf16 to vector<1x18x128xbf16>
    %c0_9 = arith.constant 0 : index
    %c0_10 = arith.constant 0 : index
    %c0_11 = arith.constant 0 : index
    %12 = vector.load %arg11[%c0_9, %c0_10, %c0_11] : memref<18x18x128xbf16, #tpu.memory_space<vmem>>, vector<1x18x128xbf16>
    tpu.vector_store %arg11[%c0_9, %c0_10, %c0_11], %11 {strides = array<i32>} : memref<18x18x128xbf16, #tpu.memory_space<vmem>>, vector<1x18x128xbf16>,
    %cst_12 = arith.constant 0.000000e+00 : bf16
    %13 = vector.broadcast %cst_12 : bf16 to vector<1x18x128xbf16>
    %c17 = arith.constant 17 : index
    %c0_13 = arith.constant 0 : index
    %c0_14 = arith.constant 0 : index
    %14 = vector.load %arg11[%c17, %c0_13, %c0_14] : memref<18x18x128xbf16, #tpu.memory_space<vmem>>, vector<1x18x128xbf16>
    tpu.vector_store %arg11[%c17, %c0_13, %c0_14], %13 {strides = array<i32>} : memref<18x18x128xbf16, #tpu.memory_space<vmem>>, vector<1x18x128xbf16>,
    %cst_15 = arith.constant 0.000000e+00 : bf16
    %15 = vector.broadcast %cst_15 : bf16 to vector<18x1x128xbf16>
    %c0_16 = arith.constant 0 : index
    %c0_17 = arith.constant 0 : index
    %c0_18 = arith.constant 0 : index
    %16 = vector.load %arg11[%c0_16, %c0_17, %c0_18] : memref<18x18x128xbf16, #tpu.memory_space<vmem>>, vector<18x1x128xbf16>
    tpu.vector_store %arg11[%c0_16, %c0_17, %c0_18], %15 {strides = array<i32>} : memref<18x18x128xbf16, #tpu.memory_space<vmem>>, vector<18x1x128xbf16>,
    %cst_19 = arith.constant 0.000000e+00 : bf16
    %17 = vector.broadcast %cst_19 : bf16 to vector<18x1x128xbf16>
    %c0_20 = arith.constant 0 : index
    %c17_21 = arith.constant 17 : index
    %c0_22 = arith.constant 0 : index
    %18 = vector.load %arg11[%c0_20, %c17_21, %c0_22] : memref<18x18x128xbf16, #tpu.memory_space<vmem>>, vector<18x1x128xbf16>
    tpu.vector_store %arg11[%c0_20, %c17_21, %c0_22], %17 {strides = array<i32>} : memref<18x18x128xbf16, #tpu.memory_space<vmem>>, vector<18x1x128xbf16>,
    %19 = vector.shape_cast %10 : vector<256x128xbf16> to vector<16x16x128xbf16>
    %c1 = arith.constant 1 : index
    %c1_23 = arith.constant 1 : index
    %c0_24 = arith.constant 0 : index
    %20 = vector.load %arg11[%c1, %c1_23, %c0_24] : memref<18x18x128xbf16, #tpu.memory_space<vmem>>, vector<16x16x128xbf16>
    tpu.vector_store %arg11[%c1, %c1_23, %c0_24], %19 {strides = array<i32>} : memref<18x18x128xbf16, #tpu.memory_space<vmem>>, vector<16x16x128xbf16>,
    %c0_25 = arith.constant 0 : index
    %c0_26 = arith.constant 0 : index
    %c0_27 = arith.constant 0 : index
    %21 = vector.load %arg11[%c0_25, %c0_26, %c0_27] : memref<18x18x128xbf16, #tpu.memory_space<vmem>>, vector<16x16x128xbf16>
    %22 = vector.shape_cast %21 : vector<16x16x128xbf16> to vector<256x128xbf16>
    %c0_28 = arith.constant 0 : index
    %c1_29 = arith.constant 1 : index
    %c0_30 = arith.constant 0 : index
    %23 = vector.load %arg11[%c0_28, %c1_29, %c0_30] : memref<18x18x128xbf16, #tpu.memory_space<vmem>>, vector<16x16x128xbf16>
    %24 = vector.shape_cast %23 : vector<16x16x128xbf16> to vector<256x128xbf16>
    %c0_31 = arith.constant 0 : index
    %c2 = arith.constant 2 : index
    %c0_32 = arith.constant 0 : index
    %25 = vector.load %arg11[%c0_31, %c2, %c0_32] : memref<18x18x128xbf16, #tpu.memory_space<vmem>>, vector<16x16x128xbf16>
    %26 = vector.shape_cast %25 : vector<16x16x128xbf16> to vector<256x128xbf16>
    %c1_33 = arith.constant 1 : index
    %c0_34 = arith.constant 0 : index
    %c0_35 = arith.constant 0 : index
    %27 = vector.load %arg11[%c1_33, %c0_34, %c0_35] : memref<18x18x128xbf16, #tpu.memory_space<vmem>>, vector<16x16x128xbf16>
    %28 = vector.shape_cast %27 : vector<16x16x128xbf16> to vector<256x128xbf16>
    %c1_36 = arith.constant 1 : index
    %c1_37 = arith.constant 1 : index
    %c0_38 = arith.constant 0 : index
    %29 = vector.load %arg11[%c1_36, %c1_37, %c0_38] : memref<18x18x128xbf16, #tpu.memory_space<vmem>>, vector<16x16x128xbf16>
    %30 = vector.shape_cast %29 : vector<16x16x128xbf16> to vector<256x128xbf16>
    %c1_39 = arith.constant 1 : index
    %c2_40 = arith.constant 2 : index
    %c0_41 = arith.constant 0 : index
    %31 = vector.load %arg11[%c1_39, %c2_40, %c0_41] : memref<18x18x128xbf16, #tpu.memory_space<vmem>>, vector<16x16x128xbf16>
    %32 = vector.shape_cast %31 : vector<16x16x128xbf16> to vector<256x128xbf16>
    %c2_42 = arith.constant 2 : index
    %c0_43 = arith.constant 0 : index
    %c0_44 = arith.constant 0 : index
    %33 = vector.load %arg11[%c2_42, %c0_43, %c0_44] : memref<18x18x128xbf16, #tpu.memory_space<vmem>>, vector<16x16x128xbf16>
    %34 = vector.shape_cast %33 : vector<16x16x128xbf16> to vector<256x128xbf16>
    %c2_45 = arith.constant 2 : index
    %c1_46 = arith.constant 1 : index
    %c0_47 = arith.constant 0 : index
    %35 = vector.load %arg11[%c2_45, %c1_46, %c0_47] : memref<18x18x128xbf16, #tpu.memory_space<vmem>>, vector<16x16x128xbf16>
    %36 = vector.shape_cast %35 : vector<16x16x128xbf16> to vector<256x128xbf16>
    %c2_48 = arith.constant 2 : index
    %c2_49 = arith.constant 2 : index
    %c0_50 = arith.constant 0 : index
    %37 = vector.load %arg11[%c2_48, %c2_49, %c0_50] : memref<18x18x128xbf16, #tpu.memory_space<vmem>>, vector<16x16x128xbf16>
    %38 = vector.shape_cast %37 : vector<16x16x128xbf16> to vector<256x128xbf16>
    %39 = tpu.concatenate %22, %24, %26, %28, %30, %32, %34, %36, %38 in 1 : vector<256x128xbf16>, vector<256x128xbf16>, vector<256x128xbf16>, vector<256x128xbf16>, vector<256x128xbf16>, vector<256x128xbf16>, vector<256x128xbf16>, vector<256x128xbf16>, vector<256x128xbf16> -> vector<256x1152xbf16>
    %c0_51 = arith.constant 0 : index
    %c0_52 = arith.constant 0 : index
    %40 = vector.load %arg4[%c0_51, %c0_52] : memref<1152x128xbf16, #tpu.memory_space<vmem>>, vector<1152x128xbf16>
    %cst_53 = arith.constant dense<0.000000e+00> : vector<256x128xf32>
    %41 = tpu.matmul %39, %40, %cst_53 {dimension_numbers = #tpu.dot_dimension_numbers<[1], [0], [0], [1], [0, 0, 1, 1], [], []>} : vector<256x1152xbf16>, vector<1152x128xbf16>, vector<256x128xf32> -> vector<256x128xf32>
    %c0_54 = arith.constant 0 : index
    %c0_55 = arith.constant 0 : index
    %42 = vector.load %arg5[%c0_54, %c0_55] : memref<1x128xf32, #tpu.memory_space<vmem>>, vector<1x128xf32>
    %43 = vector.broadcast %42 : vector<1x128xf32> to vector<256x128xf32>
    %44 = arith.addf %41, %43 : vector<256x128xf32>
    %cst_56 = arith.constant 0.000000e+00 : f32
    %45 = vector.broadcast %cst_56 : f32 to vector<256x128xf32>
    %46 = arith.maximumf %44, %45 : vector<256x128xf32>
    %47 = arith.truncf %46 : vector<256x128xf32> to vector<256x128xbf16>
    %c0_57 = arith.constant 0 : index
    %c0_58 = arith.constant 0 : index
    %48 = vector.load %arg6[%c0_57, %c0_58] : memref<128x128xbf16, #tpu.memory_space<vmem>>, vector<128x128xbf16>
    %cst_59 = arith.constant dense<0.000000e+00> : vector<256x128xf32>
    %49 = tpu.matmul %47, %48, %cst_59 {dimension_numbers = #tpu.dot_dimension_numbers<[1], [0], [0], [1], [0, 0, 1, 1], [], []>} : vector<256x128xbf16>, vector<128x128xbf16>, vector<256x128xf32> -> vector<256x128xf32>
    %c0_60 = arith.constant 0 : index
    %c0_61 = arith.constant 0 : index
    %50 = vector.load %arg7[%c0_60, %c0_61] : memref<1x128xf32, #tpu.memory_space<vmem>>, vector<1x128xf32>
    %51 = vector.broadcast %50 : vector<1x128xf32> to vector<256x128xf32>
    %52 = arith.addf %49, %51 : vector<256x128xf32>
    %c0_62 = arith.constant 0 : index
    %c0_63 = arith.constant 0 : index
    %53 = vector.load %arg8[%c0_62, %c0_63] : memref<128x128xbf16, #tpu.memory_space<vmem>>, vector<128x128xbf16>
    %cst_64 = arith.constant dense<0.000000e+00> : vector<256x128xf32>
    %54 = tpu.matmul %2, %53, %cst_64 {dimension_numbers = #tpu.dot_dimension_numbers<[1], [0], [0], [1], [0, 0, 1, 1], [], []>} : vector<256x128xbf16>, vector<128x128xbf16>, vector<256x128xf32> -> vector<256x128xf32>
    %c0_65 = arith.constant 0 : index
    %c0_66 = arith.constant 0 : index
    %55 = vector.load %arg9[%c0_65, %c0_66] : memref<1x128xf32, #tpu.memory_space<vmem>>, vector<1x128xf32>
    %56 = vector.broadcast %55 : vector<1x128xf32> to vector<256x128xf32>
    %57 = arith.addf %54, %56 : vector<256x128xf32>
    %58 = arith.addf %52, %57 : vector<256x128xf32>
    %cst_67 = arith.constant 0.000000e+00 : f32
    %59 = vector.broadcast %cst_67 : f32 to vector<256x128xf32>
    %60 = arith.maximumf %58, %59 : vector<256x128xf32>
    %c0_68 = arith.constant 0 : index
    %c0_69 = arith.constant 0 : index
    %c0_70 = arith.constant 0 : index
    %61 = vector.load %arg10[%c0_68, %c0_69, %c0_70] : memref<1x256x128xf32, #tpu.memory_space<vmem>>, vector<1x256x128xf32>
    %62 = vector.shape_cast %61 : vector<1x256x128xf32> to vector<256x128xf32>
    %63 = vector.shape_cast %60 : vector<256x128xf32> to vector<1x256x128xf32>
    tpu.vector_store %arg10[%c0_68, %c0_69, %c0_70], %63 {strides = array<i32>} : memref<1x256x128xf32, #tpu.memory_space<vmem>>, vector<1x256x128xf32>,
    return
  }
  func.func @transform_0(%arg0: i32) -> (i32, i32, i32, i32) {
    %c0_i32 = arith.constant 0 : i32
    %c0_i32_0 = arith.constant 0 : i32
    %c0_i32_1 = arith.constant 0 : i32
    %c0_i32_2 = arith.constant 0 : i32
    return %arg0, %c0_i32, %c0_i32_0, %c0_i32_1 : i32, i32, i32, i32
  }
  func.func @transform_1(%arg0: i32) -> (i32, i32) {
    %c0_i32 = arith.constant 0 : i32
    %c0_i32_0 = arith.constant 0 : i32
    %c0_i32_1 = arith.constant 0 : i32
    return %c0_i32, %c0_i32_0 : i32, i32
  }
  func.func @transform_2(%arg0: i32) -> (i32, i32) {
    %c0_i32 = arith.constant 0 : i32
    %c0_i32_0 = arith.constant 0 : i32
    %c0_i32_1 = arith.constant 0 : i32
    return %c0_i32, %c0_i32_0 : i32, i32
  }
  func.func @transform_3(%arg0: i32) -> (i32, i32) {
    %c0_i32 = arith.constant 0 : i32
    %c0_i32_0 = arith.constant 0 : i32
    %c0_i32_1 = arith.constant 0 : i32
    return %c0_i32, %c0_i32_0 : i32, i32
  }
  func.func @transform_4(%arg0: i32) -> (i32, i32) {
    %c0_i32 = arith.constant 0 : i32
    %c0_i32_0 = arith.constant 0 : i32
    %c0_i32_1 = arith.constant 0 : i32
    return %c0_i32, %c0_i32_0 : i32, i32
  }
  func.func @transform_5(%arg0: i32) -> (i32, i32) {
    %c0_i32 = arith.constant 0 : i32
    %c0_i32_0 = arith.constant 0 : i32
    %c0_i32_1 = arith.constant 0 : i32
    return %c0_i32, %c0_i32_0 : i32, i32
  }
  func.func @transform_6(%arg0: i32) -> (i32, i32) {
    %c0_i32 = arith.constant 0 : i32
    %c0_i32_0 = arith.constant 0 : i32
    %c0_i32_1 = arith.constant 0 : i32
    return %c0_i32, %c0_i32_0 : i32, i32
  }
  func.func @transform_7(%arg0: i32) -> (i32, i32) {
    %c0_i32 = arith.constant 0 : i32
    %c0_i32_0 = arith.constant 0 : i32
    %c0_i32_1 = arith.constant 0 : i32
    return %c0_i32, %c0_i32_0 : i32, i32
  }
  func.func @transform_8(%arg0: i32) -> (i32, i32) {
    %c0_i32 = arith.constant 0 : i32
    %c0_i32_0 = arith.constant 0 : i32
    %c0_i32_1 = arith.constant 0 : i32
    return %c0_i32, %c0_i32_0 : i32, i32
  }
  func.func @transform_9(%arg0: i32) -> (i32, i32, i32) {
    %c0_i32 = arith.constant 0 : i32
    %c0_i32_0 = arith.constant 0 : i32
    %c0_i32_1 = arith.constant 0 : i32
    return %arg0, %c0_i32, %c0_i32_0 : i32, i32, i32
  }
}

</mosaic_0001>

<llo_original>
// kernel: tpu_custom_call.1
$region0: #{tpu_custom_call.1}
  #allocation0 [shape = 'u32[]', space=smem, size = 0x4, offset = 0x4, fixed_abs, tag = 'smem constant byte address 0x4 - core index']
  #allocation1 [shape = 'u32[72,128]{1,0:T(1,128)}', space=vmem, size = 0x9000, scoped, tag = 'internal scratch']
  #allocation2 [shape = 'bf16[18,18,128]{2,1,0:T(8,128)(2,1)}', space=vmem, size = 0x1b000, scoped, tag = 'scratch operand']
  %s0 = inlined_call_operand.hbm [shape: bf16[2,16,16,128], index: 0, kind: input, shape index: {}]
  %s1 = inlined_call_operand.hbm [shape: bf16[128,128], index: 1, kind: input, shape index: {}]
  %s2 = inlined_call_operand.vmem [shape: f32[1,128], index: 2, kind: input, shape index: {}]
  %s3 = inlined_call_operand.hbm [shape: bf16[1152,128], index: 3, kind: input, shape index: {}]
  %s4 = inlined_call_operand.vmem [shape: f32[1,128], index: 4, kind: input, shape index: {}]
  %s5 = inlined_call_operand.hbm [shape: bf16[128,128], index: 5, kind: input, shape index: {}]
  %s6 = inlined_call_operand.vmem [shape: f32[1,128], index: 6, kind: input, shape index: {}]
  %s7 = inlined_call_operand.hbm [shape: bf16[128,128], index: 7, kind: input, shape index: {}]
  %s8 = inlined_call_operand.vmem [shape: f32[1,128], index: 8, kind: input, shape index: {}]
  %s9 = inlined_call_operand.hbm [shape: f32[2,256,128], index: 9, kind: output, shape index: {}]
  %s10 = sld [smem:[#allocation0]]
  $region89: #{tpu_custom_call.1} parent=0
    _
  %s12 = ssub.s32 1, %s10
  %s13 = scalar_select 0, %s12, %s10
  $region1: #{tpu_custom_call.1} parent=0
    #allocation3 [shape = 'u8[131072]{0}', space=vmem, size = 0x20000, scoped, tag = 'input window, operand 0']
    #allocation4 [shape = 's32[2]{0}', space=sflag, size = 0x8, scoped, tag = 'scoped memory for tpu_custom_call.1']
    #allocation5 [shape = 's32[2]{0}', space=sflag, size = 0x8, scoped, tag = 'scoped memory for tpu_custom_call.1']
    #allocation6 [shape = 'u8[32768]{0}', space=vmem, size = 0x8000, scoped, tag = 'input window, operand 1, single buffered']
    #allocation7 [shape = 's32[1]{0}', space=sflag, size = 0x4, scoped, tag = 'scoped memory for tpu_custom_call.1']
    #allocation8 [shape = 'u8[294912]{0}', space=vmem, size = 0x48000, scoped, tag = 'input window, operand 3, single buffered']
    #allocation9 [shape = 'u8[32768]{0}', space=vmem, size = 0x8000, scoped, tag = 'input window, operand 5, single buffered']
    #allocation10 [shape = 's32[1]{0}', space=sflag, size = 0x4, scoped, tag = 'scoped memory for tpu_custom_call.1']
    #allocation11 [shape = 'u8[32768]{0}', space=vmem, size = 0x8000, scoped, tag = 'input window, operand 7, single buffered']
    #allocation12 [shape = 'u8[262144]{0}', space=vmem, size = 0x40000, scoped, tag = 'output window, operand 0']
    %14 = vsyncpa [#allocation4], 0
    %s15 = scalar_lea.sflag [#allocation4], 1
    %16 = vsyncpa %s15, 0
    %17 = vsyncpa [#allocation7], 0
    %18 = vsyncpa [#allocation10], 0
    %19 = vsyncpa [#allocation5], 0
    %s20 = scalar_lea.sflag [#allocation5], 1
    %21 = vsyncpa %s20, 0
    loop: start=0, step=1, limit=4
    $region2: #{tpu_custom_call.1} parent=1 // loop_pre_header
      _
    $region3: #{tpu_custom_call.1} parent=1 // loop_header
      %s23 = sphi 0, %s27
      %p24 = scmp.ge.s32.totalorder %s23, 4
      %s33 = sphi 0, %s35
      %s36 = sphi 0, %s33
      %s37 = sphi 0, %s36
      %s53 = sphi 0, %s37
      %s57 = sphi 0, %s57
      %s59 = sphi 0, %s57
      %s60 = sphi 0, %s59
      %s74 = sphi 0, %s60
      %s78 = sphi 0, %s78
      %s80 = sphi 0, %s78
      %s81 = sphi 0, %s80
      %s95 = sphi 0, %s81
      %s99 = sphi 0, %s99
      %s101 = sphi 0, %s99
      %s102 = sphi 0, %s101
      %s116 = sphi 0, %s102
      %s120 = sphi 0, %s120
      %s122 = sphi 0, %s120
      %s123 = sphi 0, %s122
      %s137 = sphi 0, %s123
      %s141 = sphi 0, %s141
      %s143 = sphi 0, %s141
      %s144 = sphi 0, %s143
      %s158 = sphi 0, %s144
      %s162 = sphi 0, %s162
      %s164 = sphi 0, %s162
      %s165 = sphi 0, %s164
      %s179 = sphi 0, %s165
      %s183 = sphi 0, %s183
      %s185 = sphi 0, %s183
      %s186 = sphi 0, %s185
      %s200 = sphi 0, %s186
      %s204 = sphi 0, %s204
      %s206 = sphi 0, %s204
      %s207 = sphi 0, %s206
      %s221 = sphi 0, %s207
      %s227 = sphi 0, %s229
      %s230 = sphi 0, %s227
      %s231 = sphi 0, %s230
      %s247 = sphi 0, %s231
    $region4: #{tpu_custom_call.1} parent=1 // loop_header_branch
      %26 = sbr.rel (%p24) target = $region8
    $region5: #{tpu_custom_call.1} parent=1 // loop_body
      %s28 = ssub.s32 %s23, 1
      %s29 = ssub.s32 %s23, 2
      %s30 = sadd.s32 %s23, 1
      %s31 = ssub.s32 %s23, %s30
      %p32 = scmp.eq.s32.totalorder %s31, 0
      %s34 = sadd.s32 %s33, 1
      %s35 = scalar_select %p32, %s33, %s34
      %p38 = pneg %p32
      %p39 = scmp.eq.s32.totalorder %s23, 1
      %p40 = por %p38, %p39
      %p41 = scmp.ne.s32.totalorder %s33, %s36
      %p42 = scmp.eq.s32.totalorder %s23, 0
      %p43 = por %p41, %p42
      %p44 = scmp.ne.s32.totalorder %s33, %s36
      %p45 = scmp.eq.s32.totalorder %s28, 1
      %p46 = por %p44, %p45
      %p47 = scmp.ne.s32.totalorder %s36, %s37
      %p48 = scmp.eq.s32.totalorder %s28, 0
      %p49 = por %p47, %p48
      %p50 = scmp.ne.s32.totalorder %s36, %s37
      %p51 = scmp.eq.s32.totalorder %s29, 1
      %p52 = por %p50, %p51
      %p54 = scmp.ne.s32.totalorder %s37, %s53
      %p55 = scmp.eq.s32.totalorder %s29, 0
      %p56 = por %p54, %p55
      %s58 = sadd.s32 %s57, 1
      %p61 = scmp.eq.s32.totalorder %s23, 1
      %p62 = scmp.ne.s32.totalorder %s57, %s59
      %p63 = scmp.eq.s32.totalorder %s23, 0
      %p64 = por %p62, %p63
      %p65 = scmp.ne.s32.totalorder %s57, %s59
      %p66 = scmp.eq.s32.totalorder %s28, 1
      %p67 = por %p65, %p66
      %p68 = scmp.ne.s32.totalorder %s59, %s60
      %p69 = scmp.eq.s32.totalorder %s28, 0
      %p70 = por %p68, %p69
      %p71 = scmp.ne.s32.totalorder %s59, %s60
      %p72 = scmp.eq.s32.totalorder %s29, 1
      %p73 = por %p71, %p72
      %p75 = scmp.ne.s32.totalorder %s60, %s74
      %p76 = scmp.eq.s32.totalorder %s29, 0
      %p77 = por %p75, %p76
      %s79 = sadd.s32 %s78, 1
      %p82 = scmp.eq.s32.totalorder %s23, 1
      %p83 = scmp.ne.s32.totalorder %s78, %s80
      %p84 = scmp.eq.s32.totalorder %s23, 0
      %p85 = por %p83, %p84
      %p86 = scmp.ne.s32.totalorder %s78, %s80
      %p87 = scmp.eq.s32.totalorder %s28, 1
      %p88 = por %p86, %p87
      %p89 = scmp.ne.s32.totalorder %s80, %s81
      %p90 = scmp.eq.s32.totalorder %s28, 0
      %p91 = por %p89, %p90
      %p92 = scmp.ne.s32.totalorder %s80, %s81
      %p93 = scmp.eq.s32.totalorder %s29, 1
      %p94 = por %p92, %p93
      %p96 = scmp.ne.s32.totalorder %s81, %s95
      %p97 = scmp.eq.s32.totalorder %s29, 0
      %p98 = por %p96, %p97
      %s100 = sadd.s32 %s99, 1
      %p103 = scmp.eq.s32.totalorder %s23, 1
      %p104 = scmp.ne.s32.totalorder %s99, %s101
      %p105 = scmp.eq.s32.totalorder %s23, 0
      %p106 = por %p104, %p105
      %p107 = scmp.ne.s32.totalorder %s99, %s101
      %p108 = scmp.eq.s32.totalorder %s28, 1
      %p109 = por %p107, %p108
      %p110 = scmp.ne.s32.totalorder %s101, %s102
      %p111 = scmp.eq.s32.totalorder %s28, 0
      %p112 = por %p110, %p111
      %p113 = scmp.ne.s32.totalorder %s101, %s102
      %p114 = scmp.eq.s32.totalorder %s29, 1
      %p115 = por %p113, %p114
      %p117 = scmp.ne.s32.totalorder %s102, %s116
      %p118 = scmp.eq.s32.totalorder %s29, 0
      %p119 = por %p117, %p118
      %s121 = sadd.s32 %s120, 1
      %p124 = scmp.eq.s32.totalorder %s23, 1
      %p125 = scmp.ne.s32.totalorder %s120, %s122
      %p126 = scmp.eq.s32.totalorder %s23, 0
      %p127 = por %p125, %p126
      %p128 = scmp.ne.s32.totalorder %s120, %s122
      %p129 = scmp.eq.s32.totalorder %s28, 1
      %p130 = por %p128, %p129
      %p131 = scmp.ne.s32.totalorder %s122, %s123
      %p132 = scmp.eq.s32.totalorder %s28, 0
      %p133 = por %p131, %p132
      %p134 = scmp.ne.s32.totalorder %s122, %s123
      %p135 = scmp.eq.s32.totalorder %s29, 1
      %p136 = por %p134, %p135
      %p138 = scmp.ne.s32.totalorder %s123, %s137
      %p139 = scmp.eq.s32.totalorder %s29, 0
      %p140 = por %p138, %p139
      %s142 = sadd.s32 %s141, 1
      %p145 = scmp.eq.s32.totalorder %s23, 1
      %p146 = scmp.ne.s32.totalorder %s141, %s143
      %p147 = scmp.eq.s32.totalorder %s23, 0
      %p148 = por %p146, %p147
      %p149 = scmp.ne.s32.totalorder %s141, %s143
      %p150 = scmp.eq.s32.totalorder %s28, 1
      %p151 = por %p149, %p150
      %p152 = scmp.ne.s32.totalorder %s143, %s144
      %p153 = scmp.eq.s32.totalorder %s28, 0
      %p154 = por %p152, %p153
      %p155 = scmp.ne.s32.totalorder %s143, %s144
      %p156 = scmp.eq.s32.totalorder %s29, 1
      %p157 = por %p155, %p156
      %p159 = scmp.ne.s32.totalorder %s144, %s158
      %p160 = scmp.eq.s32.totalorder %s29, 0
      %p161 = por %p159, %p160
      %s163 = sadd.s32 %s162, 1
      %p166 = scmp.eq.s32.totalorder %s23, 1
      %p167 = scmp.ne.s32.totalorder %s162, %s164
      %p168 = scmp.eq.s32.totalorder %s23, 0
      %p169 = por %p167, %p168
      %p170 = scmp.ne.s32.totalorder %s162, %s164
      %p171 = scmp.eq.s32.totalorder %s28, 1
      %p172 = por %p170, %p171
      %p173 = scmp.ne.s32.totalorder %s164, %s165
      %p174 = scmp.eq.s32.totalorder %s28, 0
      %p175 = por %p173, %p174
      %p176 = scmp.ne.s32.totalorder %s164, %s165
      %p177 = scmp.eq.s32.totalorder %s29, 1
      %p178 = por %p176, %p177
      %p180 = scmp.ne.s32.totalorder %s165, %s179
      %p181 = scmp.eq.s32.totalorder %s29, 0
      %p182 = por %p180, %p181
      %s184 = sadd.s32 %s183, 1
      %p187 = scmp.eq.s32.totalorder %s23, 1
      %p188 = scmp.ne.s32.totalorder %s183, %s185
      %p189 = scmp.eq.s32.totalorder %s23, 0
      %p190 = por %p188, %p189
      %p191 = scmp.ne.s32.totalorder %s183, %s185
      %p192 = scmp.eq.s32.totalorder %s28, 1
      %p193 = por %p191, %p192
      %p194 = scmp.ne.s32.totalorder %s185, %s186
      %p195 = scmp.eq.s32.totalorder %s28, 0
      %p196 = por %p194, %p195
      %p197 = scmp.ne.s32.totalorder %s185, %s186
      %p198 = scmp.eq.s32.totalorder %s29, 1
      %p199 = por %p197, %p198
      %p201 = scmp.ne.s32.totalorder %s186, %s200
      %p202 = scmp.eq.s32.totalorder %s29, 0
      %p203 = por %p201, %p202
      %s205 = sadd.s32 %s204, 1
      %p208 = scmp.eq.s32.totalorder %s23, 1
      %p209 = scmp.ne.s32.totalorder %s204, %s206
      %p210 = scmp.eq.s32.totalorder %s23, 0
      %p211 = por %p209, %p210
      %p212 = scmp.ne.s32.totalorder %s204, %s206
      %p213 = scmp.eq.s32.totalorder %s28, 1
      %p214 = por %p212, %p213
      %p215 = scmp.ne.s32.totalorder %s206, %s207
      %p216 = scmp.eq.s32.totalorder %s28, 0
      %p217 = por %p215, %p216
      %p218 = scmp.ne.s32.totalorder %s206, %s207
      %p219 = scmp.eq.s32.totalorder %s29, 1
      %p220 = por %p218, %p219
      %p222 = scmp.ne.s32.totalorder %s207, %s221
      %p223 = scmp.eq.s32.totalorder %s29, 0
      %p224 = por %p222, %p223
      %s225 = ssub.s32 %s23, %s30
      %p226 = scmp.eq.s32.totalorder %s225, 0
      %s228 = sadd.s32 %s227, 1
      %s229 = scalar_select %p226, %s227, %s228
      %p232 = pneg %p226
      %p233 = scmp.eq.s32.totalorder %s23, 1
      %p234 = por %p232, %p233
      %p235 = scmp.ne.s32.totalorder %s227, %s230
      %p236 = scmp.eq.s32.totalorder %s23, 0
      %p237 = por %p235, %p236
      %p238 = scmp.ne.s32.totalorder %s227, %s230
      %p239 = scmp.eq.s32.totalorder %s28, 1
      %p240 = por %p238, %p239
      %p241 = scmp.ne.s32.totalorder %s230, %s231
      %p242 = scmp.eq.s32.totalorder %s28, 0
      %p243 = por %p241, %p242
      %p244 = scmp.ne.s32.totalorder %s230, %s231
      %p245 = scmp.eq.s32.totalorder %s29, 1
      %p246 = por %p244, %p245
      %p248 = scmp.ne.s32.totalorder %s231, %s247
      %p249 = scmp.eq.s32.totalorder %s29, 0
      %p250 = por %p248, %p249
      %p251 = scmp.le.s32.totalorder 1, %s23
      %p252 = scmp.lt.s32.totalorder %s23, 3
      %p253 = pnand %p251, %p252
      %p254 = pneg %p253
      // Predicated region
      $region9: #{tpu_custom_call.1} parent=5 // pred_check
        _
      $region10: #{tpu_custom_call.1} parent=5 // pred_check_branch
        %256 = sbr.rel (%p253) target = $region12
      $region11: #{tpu_custom_call.1} parent=5 // pred_region
        %s257 = ssub.s32 %s23, 1
        // Predicated region
        $region13: #{tpu_custom_call.1} parent=11 // pred_check
          %p258 = pneg %p70
        $region14: #{tpu_custom_call.1} parent=11 // pred_check_branch
          %260 = sbr.rel (%p258) target = $region16
        $region15: #{tpu_custom_call.1} parent=11 // pred_region
          %262 = vsyncadd [#allocation7], 0
          %s263 = sshll.u32 %s1, 4
          %s264 = int_to_ptr.hbm [resolvable:$true] %s263
          %s265 = sshll.u32 [#allocation6], 4
          %s266 = int_to_ptr.vmem [resolvable:$true] %s265
          %271 = dma.hbm_to_vmem [thread:$0]  %s264, 1024, %s266, [#allocation7], 64, 64, 4
        $region16: #{tpu_custom_call.1} parent=11 // pred_fallthru
          _
        // Predicated region
        $region17: #{tpu_custom_call.1} parent=11 // pred_check
          %p272 = pneg %p91
        $region18: #{tpu_custom_call.1} parent=11 // pred_check_branch
          %274 = sbr.rel (%p272) target = $region20
        $region19: #{tpu_custom_call.1} parent=11 // pred_region
          _
        $region20: #{tpu_custom_call.1} parent=11 // pred_fallthru
          _
        // Predicated region
        $region21: #{tpu_custom_call.1} parent=11 // pred_check
          %p275 = pneg %p112
        $region22: #{tpu_custom_call.1} parent=11 // pred_check_branch
          %277 = sbr.rel (%p275) target = $region24
        $region23: #{tpu_custom_call.1} parent=11 // pred_region
          %279 = vsyncadd [#allocation7], 0
          %s280 = sshll.u32 %s3, 4
          %s281 = int_to_ptr.hbm [resolvable:$true] %s280
          %s282 = sshll.u32 [#allocation8], 4
          %s283 = int_to_ptr.vmem [resolvable:$true] %s282
          %288 = dma.hbm_to_vmem [thread:$0]  %s281, 9216, %s283, [#allocation7], 64, 64, 4
        $region24: #{tpu_custom_call.1} parent=11 // pred_fallthru
          _
        // Predicated region
        $region25: #{tpu_custom_call.1} parent=11 // pred_check
          %p289 = pneg %p133
        $region26: #{tpu_custom_call.1} parent=11 // pred_check_branch
          %291 = sbr.rel (%p289) target = $region28
        $region27: #{tpu_custom_call.1} parent=11 // pred_region
          _
        $region28: #{tpu_custom_call.1} parent=11 // pred_fallthru
          _
        // Predicated region
        $region29: #{tpu_custom_call.1} parent=11 // pred_check
          %p292 = pneg %p154
        $region30: #{tpu_custom_call.1} parent=11 // pred_check_branch
          %294 = sbr.rel (%p292) target = $region32
        $region31: #{tpu_custom_call.1} parent=11 // pred_region
          %296 = vsyncadd [#allocation10], 0
          %s297 = sshll.u32 %s5, 4
          %s298 = int_to_ptr.hbm [resolvable:$true] %s297
          %s299 = sshll.u32 [#allocation9], 4
          %s300 = int_to_ptr.vmem [resolvable:$true] %s299
          %305 = dma.hbm_to_vmem [thread:$0]  %s298, 1024, %s300, [#allocation10], 64, 64, 4
        $region32: #{tpu_custom_call.1} parent=11 // pred_fallthru
          _
        // Predicated region
        $region33: #{tpu_custom_call.1} parent=11 // pred_check
          %p306 = pneg %p175
        $region34: #{tpu_custom_call.1} parent=11 // pred_check_branch
          %308 = sbr.rel (%p306) target = $region36
        $region35: #{tpu_custom_call.1} parent=11 // pred_region
          _
        $region36: #{tpu_custom_call.1} parent=11 // pred_fallthru
          _
        // Predicated region
        $region37: #{tpu_custom_call.1} parent=11 // pred_check
          %p309 = pneg %p196
        $region38: #{tpu_custom_call.1} parent=11 // pred_check_branch
          %311 = sbr.rel (%p309) target = $region40
        $region39: #{tpu_custom_call.1} parent=11 // pred_region
          %313 = vsyncadd [#allocation10], 0
          %s314 = sshll.u32 %s7, 4
          %s315 = int_to_ptr.hbm [resolvable:$true] %s314
          %s316 = sshll.u32 [#allocation11], 4
          %s317 = int_to_ptr.vmem [resolvable:$true] %s316
          %322 = dma.hbm_to_vmem [thread:$0]  %s315, 1024, %s317, [#allocation10], 64, 64, 4
        $region40: #{tpu_custom_call.1} parent=11 // pred_fallthru
          _
        // Predicated region
        $region41: #{tpu_custom_call.1} parent=11 // pred_check
          %p323 = pneg %p217
        $region42: #{tpu_custom_call.1} parent=11 // pred_check_branch
          %325 = sbr.rel (%p323) target = $region44
        $region43: #{tpu_custom_call.1} parent=11 // pred_region
          _
        $region44: #{tpu_custom_call.1} parent=11 // pred_fallthru
          _
      $region12: #{tpu_custom_call.1} parent=5 // pred_fallthru
        _
      %p326 = scmp.lt.s32.totalorder %s23, 2
      // Predicated region
      $region45: #{tpu_custom_call.1} parent=5 // pred_check
        %p327 = pneg %p326
      $region46: #{tpu_custom_call.1} parent=5 // pred_check_branch
        %329 = sbr.rel (%p327) target = $region48
      $region47: #{tpu_custom_call.1} parent=5 // pred_region
        // Predicated region
        $region49: #{tpu_custom_call.1} parent=47 // pred_check
          %p330 = pneg %p43
        $region50: #{tpu_custom_call.1} parent=47 // pred_check_branch
          %332 = sbr.rel (%p330) target = $region52
        $region51: #{tpu_custom_call.1} parent=47 // pred_region
          %s333 = sand.u32 %s33, 1
          %s334 = scalar_lea.sflag [#allocation4], %s333
          %s335 = sand.u32 %s33, 1
          %s336 = smul.addr %s335, 128
          %s337 = scalar_lea.vmem [#allocation3], %s336
          %339 = vsyncadd %s334, 0
          %s340 = smul.addr %s23, 32
          %s341 = smul.addr %s340, 4
          %s342 = scalar_lea.hbm %s0, %s341
          %s343 = sshll.u32 %s342, 4
          %s344 = int_to_ptr.hbm [resolvable:$true] %s343
          %s345 = sshll.u32 %s337, 4
          %s346 = int_to_ptr.vmem [resolvable:$true] %s345
          %351 = dma.hbm_to_vmem [thread:$0]  %s344, 2048, %s346, %s334, 64, 64, 4
        $region52: #{tpu_custom_call.1} parent=47 // pred_fallthru
          _
      $region48: #{tpu_custom_call.1} parent=5 // pred_fallthru
        _
      %p352 = scmp.le.s32.totalorder 1, %s23
      %p353 = scmp.lt.s32.totalorder %s23, 3
      %p354 = pnand %p352, %p353
      %p355 = pneg %p354
      // Predicated region
      $region53: #{tpu_custom_call.1} parent=5 // pred_check
        _
      $region54: #{tpu_custom_call.1} parent=5 // pred_check_branch
        %357 = sbr.rel (%p354) target = $region56
      $region55: #{tpu_custom_call.1} parent=5 // pred_region
        %s358 = ssub.s32 %s23, 1
        %s359 = sand.u32 %s36, 1
        %s360 = scalar_lea.sflag [#allocation4], %s359
        %s361 = sand.u32 %s36, 1
        %s362 = smul.addr %s361, 128
        %s363 = scalar_lea.vmem [#allocation3], %s362
        // Predicated region
        $region57: #{tpu_custom_call.1} parent=55 // pred_check
          %p364 = pneg %p49
        $region58: #{tpu_custom_call.1} parent=55 // pred_check_branch
          %366 = sbr.rel (%p364) target = $region60
        $region59: #{tpu_custom_call.1} parent=55 // pred_region
          %368 = dma.done %s360, 2048
        $region60: #{tpu_custom_call.1} parent=55 // pred_fallthru
          _
        // Predicated region
        $region61: #{tpu_custom_call.1} parent=55 // pred_check
          %p369 = pneg %p70
        $region62: #{tpu_custom_call.1} parent=55 // pred_check_branch
          %371 = sbr.rel (%p369) target = $region64
        $region63: #{tpu_custom_call.1} parent=55 // pred_region
          %373 = dma.done [#allocation7], 1024
        $region64: #{tpu_custom_call.1} parent=55 // pred_fallthru
          _
        // Predicated region
        $region65: #{tpu_custom_call.1} parent=55 // pred_check
          %p374 = pneg %p112
        $region66: #{tpu_custom_call.1} parent=55 // pred_check_branch
          %376 = sbr.rel (%p374) target = $region68
        $region67: #{tpu_custom_call.1} parent=55 // pred_region
          %378 = dma.done [#allocation7], 9216
        $region68: #{tpu_custom_call.1} parent=55 // pred_fallthru
          _
        // Predicated region
        $region69: #{tpu_custom_call.1} parent=55 // pred_check
          %p379 = pneg %p154
        $region70: #{tpu_custom_call.1} parent=55 // pred_check_branch
          %381 = sbr.rel (%p379) target = $region72
        $region71: #{tpu_custom_call.1} parent=55 // pred_region
          %383 = dma.done [#allocation10], 1024
        $region72: #{tpu_custom_call.1} parent=55 // pred_fallthru
          _
        // Predicated region
        $region73: #{tpu_custom_call.1} parent=55 // pred_check
          %p384 = pneg %p196
        $region74: #{tpu_custom_call.1} parent=55 // pred_check_branch
          %386 = sbr.rel (%p384) target = $region76
        $region75: #{tpu_custom_call.1} parent=55 // pred_region
          %388 = dma.done [#allocation10], 1024
        $region76: #{tpu_custom_call.1} parent=55 // pred_fallthru
          _
        %s389 = sand.u32 %s36, 1
        %s390 = scalar_lea.sflag [#allocation4], %s389
        %s391 = sand.u32 %s36, 1
        %s392 = smul.addr %s391, 128
        %s393 = scalar_lea.vmem [#allocation3], %s392
        %p394 = pneg %p49
        %p395 = pneg %p46
        %p396 = pneg %p70
        %p397 = pneg %p67
        %p398 = pneg %p91
        %p399 = pneg %p88
        %p400 = pneg %p112
        %p401 = pneg %p109
        %p402 = pneg %p133
        %p403 = pneg %p130
        %p404 = pneg %p154
        %p405 = pneg %p151
        %p406 = pneg %p175
        %p407 = pneg %p172
        %p408 = pneg %p196
        %p409 = pneg %p193
        %p410 = pneg %p217
        %p411 = pneg %p214
        %p412 = pneg %p243
        %p413 = pneg %p240
        %s414 = sand.u32 %s230, 1
        %s415 = scalar_lea.sflag [#allocation5], %s414
        %s416 = sand.u32 %s230, 1
        %s417 = smul.addr %s416, 256
        %s418 = scalar_lea.vmem [#allocation12], %s417
        %v420 = vld [vmem:[%s363] sm:$0xf]
        %v421 = vld [vmem:[%s363 + $0x4] sm:$0xf]
        %v422 = vld [vmem:[%s363 + $0x8] sm:$0xf]
        %v423 = vld [vmem:[%s363 + $0xc] sm:$0xf]
        %v424 = vld [vmem:[%s363 + $0x10] sm:$0xf]
        %v425 = vld [vmem:[%s363 + $0x14] sm:$0xf]
        %v426 = vld [vmem:[%s363 + $0x18] sm:$0xf]
        %v427 = vld [vmem:[%s363 + $0x1c] sm:$0xf]
        %v428 = vld [vmem:[%s363 + $0x20] sm:$0xf]
        %v429 = vld [vmem:[%s363 + $0x24] sm:$0xf]
        %v430 = vld [vmem:[%s363 + $0x28] sm:$0xf]
        %v431 = vld [vmem:[%s363 + $0x2c] sm:$0xf]
        %v432 = vld [vmem:[%s363 + $0x30] sm:$0xf]
        %v433 = vld [vmem:[%s363 + $0x34] sm:$0xf]
        %v434 = vld [vmem:[%s363 + $0x38] sm:$0xf]
        %v435 = vld [vmem:[%s363 + $0x3c] sm:$0xf]
        %v436 = vld [vmem:[%s363 + $0x40] sm:$0xf]
        %v437 = vld [vmem:[%s363 + $0x44] sm:$0xf]
        %v438 = vld [vmem:[%s363 + $0x48] sm:$0xf]
        %v439 = vld [vmem:[%s363 + $0x4c] sm:$0xf]
        %v440 = vld [vmem:[%s363 + $0x50] sm:$0xf]
        %v441 = vld [vmem:[%s363 + $0x54] sm:$0xf]
        %v442 = vld [vmem:[%s363 + $0x58] sm:$0xf]
        %v443 = vld [vmem:[%s363 + $0x5c] sm:$0xf]
        %v444 = vld [vmem:[%s363 + $0x60] sm:$0xf]
        %v445 = vld [vmem:[%s363 + $0x64] sm:$0xf]
        %v446 = vld [vmem:[%s363 + $0x68] sm:$0xf]
        %v447 = vld [vmem:[%s363 + $0x6c] sm:$0xf]
        %v448 = vld [vmem:[%s363 + $0x70] sm:$0xf]
        %v449 = vld [vmem:[%s363 + $0x74] sm:$0xf]
        %v450 = vld [vmem:[%s363 + $0x78] sm:$0xf]
        %v451 = vld [vmem:[%s363 + $0x7c] sm:$0xf]
        %v452 = vld [vmem:[#allocation6] sm:$0xf]
        %v453 = vld [vmem:[#allocation6 + $0x4] sm:$0xf]
        %v454 = vld [vmem:[#allocation6 + $0x8] sm:$0xf]
        %v455 = vld [vmem:[#allocation6 + $0xc] sm:$0xf]
        %v456 = vld [vmem:[#allocation6 + $0x10] sm:$0xf]
        %v457 = vld [vmem:[#allocation6 + $0x14] sm:$0xf]
        %v458 = vld [vmem:[#allocation6 + $0x18] sm:$0xf]
        %v459 = vld [vmem:[#allocation6 + $0x1c] sm:$0xf]
        %v460 = vld [vmem:[#allocation6 + $0x20] sm:$0xf]
        %v461 = vld [vmem:[#allocation6 + $0x24] sm:$0xf]
        %v462 = vld [vmem:[#allocation6 + $0x28] sm:$0xf]
        %v463 = vld [vmem:[#allocation6 + $0x2c] sm:$0xf]
        %v464 = vld [vmem:[#allocation6 + $0x30] sm:$0xf]
        %v465 = vld [vmem:[#allocation6 + $0x34] sm:$0xf]
        %v466 = vld [vmem:[#allocation6 + $0x38] sm:$0xf]
        %v467 = vld [vmem:[#allocation6 + $0x3c] sm:$0xf]
        %v468 = vld [vmem:[%s2] sm:$0x1]
        %v470 = vperm.slane %v468, 0
        %v504 = vunpack.c.l.b16 %v420
        %v505 = vunpack.c.l.b16 %v421
        %v506 = vunpack.c.l.b16 %v422
        %v507 = vunpack.c.l.b16 %v423
        %v508 = vunpack.c.l.b16 %v424
        %v509 = vunpack.c.l.b16 %v425
        %v510 = vunpack.c.l.b16 %v426
        %v511 = vunpack.c.l.b16 %v427
        %v512 = vunpack.c.l.b16 %v428
        %v513 = vunpack.c.l.b16 %v429
        %v514 = vunpack.c.l.b16 %v430
        %v515 = vunpack.c.l.b16 %v431
        %v516 = vunpack.c.l.b16 %v432
        %v517 = vunpack.c.l.b16 %v433
        %v518 = vunpack.c.l.b16 %v434
        %v519 = vunpack.c.l.b16 %v435
        %v520 = vunpack.c.l.b16 %v436
        %v521 = vunpack.c.l.b16 %v437
        %v522 = vunpack.c.l.b16 %v438
        %v523 = vunpack.c.l.b16 %v439
        %v524 = vunpack.c.l.b16 %v440
        %v525 = vunpack.c.l.b16 %v441
        %v526 = vunpack.c.l.b16 %v442
        %v527 = vunpack.c.l.b16 %v443
        %v528 = vunpack.c.l.b16 %v444
        %v529 = vunpack.c.l.b16 %v445
        %v530 = vunpack.c.l.b16 %v446
        %v531 = vunpack.c.l.b16 %v447
        %v532 = vunpack.c.l.b16 %v448
        %v533 = vunpack.c.l.b16 %v449
        %v534 = vunpack.c.l.b16 %v450
        %v535 = vunpack.c.l.b16 %v451
        %v536 = vpack.c.b16 %v505, %v504
        %v537 = vpack.c.b16 %v507, %v506
        %v538 = vpack.c.b16 %v509, %v508
        %v539 = vpack.c.b16 %v511, %v510
        %v540 = vpack.c.b16 %v513, %v512
        %v541 = vpack.c.b16 %v515, %v514
        %v542 = vpack.c.b16 %v517, %v516
        %v543 = vpack.c.b16 %v519, %v518
        %v544 = vpack.c.b16 %v521, %v520
        %v545 = vpack.c.b16 %v523, %v522
        %v546 = vpack.c.b16 %v525, %v524
        %v547 = vpack.c.b16 %v527, %v526
        %v548 = vpack.c.b16 %v529, %v528
        %v549 = vpack.c.b16 %v531, %v530
        %v550 = vpack.c.b16 %v533, %v532
        %v551 = vpack.c.b16 %v535, %v534
        %v584 = vunpack.c.l.b16 %v452
        %v585 = vunpack.c.l.b16 %v453
        %v586 = vunpack.c.l.b16 %v454
        %v587 = vunpack.c.l.b16 %v455
        %v588 = vunpack.c.l.b16 %v456
        %v589 = vunpack.c.l.b16 %v457
        %v590 = vunpack.c.l.b16 %v458
        %v591 = vunpack.c.l.b16 %v459
        %v592 = vunpack.c.l.b16 %v460
        %v593 = vunpack.c.l.b16 %v461
        %v594 = vunpack.c.l.b16 %v462
        %v595 = vunpack.c.l.b16 %v463
        %v596 = vunpack.c.l.b16 %v464
        %v597 = vunpack.c.l.b16 %v465
        %v598 = vunpack.c.l.b16 %v466
        %v599 = vunpack.c.l.b16 %v467
        %v600 = vpack.c.b16 %v585, %v584
        %v601 = vpack.c.b16 %v587, %v586
        %v602 = vpack.c.b16 %v589, %v588
        %v603 = vpack.c.b16 %v591, %v590
        %v604 = vpack.c.b16 %v593, %v592
        %v605 = vpack.c.b16 %v595, %v594
        %v606 = vpack.c.b16 %v597, %v596
        %v607 = vpack.c.b16 %v599, %v598
        %616 = vmatpush.bf16.msra.mxu0 %v607
        %617 = vmatpush.bf16.msra.mxu0 %v606
        %618 = vmatpush.bf16.msra.mxu0 %v605
        %619 = vmatpush.bf16.msra.mxu0 %v604
        %620 = vmatpush.bf16.msra.mxu0 %v603
        %621 = vmatpush.bf16.msra.mxu0 %v602
        %622 = vmatpush.bf16.msra.mxu0 %v601
        %623 = vmatpush.bf16.msra.mxu0 %v600
        %624 = vmatmul.bf16.gmra.mxu0 %v536
        %v625 = vpop.f32.mrf.mxu0
        %v626 = vadd.f32 %v470, %v625
        %v627 = vpop.f32.mrf.mxu0
        %v628 = vadd.f32 %v470, %v627
        %629 = vmatmul.bf16.gmra.mxu0 %v537
        %v630 = vpop.f32.mrf.mxu0
        %v631 = vadd.f32 %v470, %v630
        %v632 = vpop.f32.mrf.mxu0
        %v633 = vadd.f32 %v470, %v632
        %634 = vmatmul.bf16.gmra.mxu0 %v538
        %v635 = vpop.f32.mrf.mxu0
        %v636 = vadd.f32 %v470, %v635
        %v637 = vpop.f32.mrf.mxu0
        %v638 = vadd.f32 %v470, %v637
        %639 = vmatmul.bf16.gmra.mxu0 %v539
        %v640 = vpop.f32.mrf.mxu0
        %v641 = vadd.f32 %v470, %v640
        %v642 = vpop.f32.mrf.mxu0
        %v643 = vadd.f32 %v470, %v642
        %644 = vmatmul.bf16.gmra.mxu0 %v540
        %v645 = vpop.f32.mrf.mxu0
        %v646 = vadd.f32 %v470, %v645
        %v647 = vpop.f32.mrf.mxu0
        %v648 = vadd.f32 %v470, %v647
        %649 = vmatmul.bf16.gmra.mxu0 %v541
        %v650 = vpop.f32.mrf.mxu0
        %v651 = vadd.f32 %v470, %v650
        %v652 = vpop.f32.mrf.mxu0
        %v653 = vadd.f32 %v470, %v652
        %654 = vmatmul.bf16.gmra.mxu0 %v542
        %v655 = vpop.f32.mrf.mxu0
        %v656 = vadd.f32 %v470, %v655
        %v657 = vpop.f32.mrf.mxu0
        %v658 = vadd.f32 %v470, %v657
        %659 = vmatmul.bf16.gmra.mxu0 %v543
        %v660 = vpop.f32.mrf.mxu0
        %v661 = vadd.f32 %v470, %v660
        %v662 = vpop.f32.mrf.mxu0
        %v663 = vadd.f32 %v470, %v662
        %664 = vmatmul.bf16.gmra.mxu0 %v544
        %v665 = vpop.f32.mrf.mxu0
        %v666 = vadd.f32 %v470, %v665
        %v667 = vpop.f32.mrf.mxu0
        %v668 = vadd.f32 %v470, %v667
        %669 = vmatmul.bf16.gmra.mxu0 %v545
        %v670 = vpop.f32.mrf.mxu0
        %v671 = vadd.f32 %v470, %v670
        %v672 = vpop.f32.mrf.mxu0
        %v673 = vadd.f32 %v470, %v672
        %674 = vmatmul.bf16.gmra.mxu0 %v546
        %v675 = vpop.f32.mrf.mxu0
        %v676 = vadd.f32 %v470, %v675
        %v677 = vpop.f32.mrf.mxu0
        %v678 = vadd.f32 %v470, %v677
        %679 = vmatmul.bf16.gmra.mxu0 %v547
        %v680 = vpop.f32.mrf.mxu0
        %v681 = vadd.f32 %v470, %v680
        %v682 = vpop.f32.mrf.mxu0
        %v683 = vadd.f32 %v470, %v682
        %684 = vmatmul.bf16.gmra.mxu0 %v548
        %v685 = vpop.f32.mrf.mxu0
        %v686 = vadd.f32 %v470, %v685
        %v687 = vpop.f32.mrf.mxu0
        %v688 = vadd.f32 %v470, %v687
        %689 = vmatmul.bf16.gmra.mxu0 %v549
        %v690 = vpop.f32.mrf.mxu0
        %v691 = vadd.f32 %v470, %v690
        %v692 = vpop.f32.mrf.mxu0
        %v693 = vadd.f32 %v470, %v692
        %694 = vmatmul.bf16.gmra.mxu0 %v550
        %v695 = vpop.f32.mrf.mxu0
        %v696 = vadd.f32 %v470, %v695
        %v697 = vpop.f32.mrf.mxu0
        %v698 = vadd.f32 %v470, %v697
        %699 = vmatmul.bf16.gmra.mxu0 %v551
        %v700 = vpop.f32.mrf.mxu0
        %v701 = vadd.f32 %v470, %v700
        %v702 = vpop.f32.mrf.mxu0
        %v703 = vadd.f32 %v470, %v702
        %704 = vdwg.mxu0
        %v705 = vmax.f32 %v626, 0.0
        %v706 = vmax.f32 %v628, 0.0
        %v707 = vmax.f32 %v631, 0.0
        %v708 = vmax.f32 %v633, 0.0
        %v709 = vmax.f32 %v636, 0.0
        %v710 = vmax.f32 %v638, 0.0
        %v711 = vmax.f32 %v641, 0.0
        %v712 = vmax.f32 %v643, 0.0
        %v713 = vmax.f32 %v646, 0.0
        %v714 = vmax.f32 %v648, 0.0
        %v715 = vmax.f32 %v651, 0.0
        %v716 = vmax.f32 %v653, 0.0
        %v717 = vmax.f32 %v656, 0.0
        %v718 = vmax.f32 %v658, 0.0
        %v719 = vmax.f32 %v661, 0.0
        %v720 = vmax.f32 %v663, 0.0
        %v721 = vmax.f32 %v666, 0.0
        %v722 = vmax.f32 %v668, 0.0
        %v723 = vmax.f32 %v671, 0.0
        %v724 = vmax.f32 %v673, 0.0
        %v725 = vmax.f32 %v676, 0.0
        %v726 = vmax.f32 %v678, 0.0
        %v727 = vmax.f32 %v681, 0.0
        %v728 = vmax.f32 %v683, 0.0
        %v729 = vmax.f32 %v686, 0.0
        %v730 = vmax.f32 %v688, 0.0
        %v731 = vmax.f32 %v691, 0.0
        %v732 = vmax.f32 %v693, 0.0
        %v733 = vmax.f32 %v696, 0.0
        %v734 = vmax.f32 %v698, 0.0
        %v735 = vmax.f32 %v701, 0.0
        %v736 = vmax.f32 %v703, 0.0
        %v737 = vpack.c.bf16 %v705, %v705
        %v738 = vpack.c.bf16 %v706, %v706
        %v739 = vpack.c.bf16 %v707, %v707
        %v740 = vpack.c.bf16 %v708, %v708
        %v741 = vpack.c.bf16 %v709, %v709
        %v742 = vpack.c.bf16 %v710, %v710
        %v743 = vpack.c.bf16 %v711, %v711
        %v744 = vpack.c.bf16 %v712, %v712
        %v745 = vpack.c.bf16 %v713, %v713
        %v746 = vpack.c.bf16 %v714, %v714
        %v747 = vpack.c.bf16 %v715, %v715
        %v748 = vpack.c.bf16 %v716, %v716
        %v749 = vpack.c.bf16 %v717, %v717
        %v750 = vpack.c.bf16 %v718, %v718
        %v751 = vpack.c.bf16 %v719, %v719
        %v752 = vpack.c.bf16 %v720, %v720
        %v753 = vpack.c.bf16 %v721, %v721
        %v754 = vpack.c.bf16 %v722, %v722
        %v755 = vpack.c.bf16 %v723, %v723
        %v756 = vpack.c.bf16 %v724, %v724
        %v757 = vpack.c.bf16 %v725, %v725
        %v758 = vpack.c.bf16 %v726, %v726
        %v759 = vpack.c.bf16 %v727, %v727
        %v760 = vpack.c.bf16 %v728, %v728
        %v761 = vpack.c.bf16 %v729, %v729
        %v762 = vpack.c.bf16 %v730, %v730
        %v763 = vpack.c.bf16 %v731, %v731
        %v764 = vpack.c.bf16 %v732, %v732
        %v765 = vpack.c.bf16 %v733, %v733
        %v766 = vpack.c.bf16 %v734, %v734
        %v767 = vpack.c.bf16 %v735, %v735
        %v768 = vpack.c.bf16 %v736, %v736
        %769 = vst [vmem:[#allocation2] sm:$0xf] 0
        %770 = vst [vmem:[#allocation2 + $0x4] sm:$0xf] 0
        %771 = vst [vmem:[#allocation2 + $0x8] sm:$0x1] 0
        %s772 = scalar_lea.vmem [#allocation2], 204
        %773 = vst [vmem:[%s772] sm:$0xf] 0
        %774 = vst [vmem:[%s772 + $0x4] sm:$0xf] 0
        %775 = vst [vmem:[%s772 + $0x8] sm:$0x1] 0
        %vm776 = vcmask 1040384
        %vm777 = vsmask.f32 256
        %vm778 = vmand %vm776, %vm777
        %v779 = vld [vmem:[#allocation2] sm:$0x1]
        %v780 = vsel %vm778, 0, %v779
        %781 = vst [vmem:[#allocation2] sm:$0x1] %v780
        %v782 = vld [vmem:[#allocation2 + $0xc] sm:$0x1]
        %v783 = vsel %vm778, 0, %v782
        %784 = vst [vmem:[#allocation2 + $0xc] sm:$0x1] %v783
        %v785 = vld [vmem:[#allocation2 + $0x18] sm:$0x1]
        %v786 = vsel %vm778, 0, %v785
        %787 = vst [vmem:[#allocation2 + $0x18] sm:$0x1] %v786
        %v788 = vld [vmem:[#allocation2 + $0x24] sm:$0x1]
        %v789 = vsel %vm778, 0, %v788
        %790 = vst [vmem:[#allocation2 + $0x24] sm:$0x1] %v789
        %v791 = vld [vmem:[#allocation2 + $0x30] sm:$0x1]
        %v792 = vsel %vm778, 0, %v791
        %793 = vst [vmem:[#allocation2 + $0x30] sm:$0x1] %v792
        %v794 = vld [vmem:[#allocation2 + $0x3c] sm:$0x1]
        %v795 = vsel %vm778, 0, %v794
        %796 = vst [vmem:[#allocation2 + $0x3c] sm:$0x1] %v795
        %v797 = vld [vmem:[#allocation2 + $0x48] sm:$0x1]
        %v798 = vsel %vm778, 0, %v797
        %799 = vst [vmem:[#allocation2 + $0x48] sm:$0x1] %v798
        %v800 = vld [vmem:[#allocation2 + $0x54] sm:$0x1]
        %v801 = vsel %vm778, 0, %v800
        %802 = vst [vmem:[#allocation2 + $0x54] sm:$0x1] %v801
        %v803 = vld [vmem:[#allocation2 + $0x60] sm:$0x1]
        %v804 = vsel %vm778, 0, %v803
        %805 = vst [vmem:[#allocation2 + $0x60] sm:$0x1] %v804
        %v806 = vld [vmem:[#allocation2 + $0x6c] sm:$0x1]
        %v807 = vsel %vm778, 0, %v806
        %808 = vst [vmem:[#allocation2 + $0x6c] sm:$0x1] %v807
        %v809 = vld [vmem:[#allocation2 + $0x78] sm:$0x1]
        %v810 = vsel %vm778, 0, %v809
        %811 = vst [vmem:[#allocation2 + $0x78] sm:$0x1] %v810
        %v812 = vld [vmem:[#allocation2 + $0x84] sm:$0x1]
        %v813 = vsel %vm778, 0, %v812
        %814 = vst [vmem:[#allocation2 + $0x84] sm:$0x1] %v813
        %v815 = vld [vmem:[#allocation2 + $0x90] sm:$0x1]
        %v816 = vsel %vm778, 0, %v815
        %817 = vst [vmem:[#allocation2 + $0x90] sm:$0x1] %v816
        %v818 = vld [vmem:[#allocation2 + $0x9c] sm:$0x1]
        %v819 = vsel %vm778, 0, %v818
        %820 = vst [vmem:[#allocation2 + $0x9c] sm:$0x1] %v819
        %v821 = vld [vmem:[#allocation2 + $0xa8] sm:$0x1]
        %v822 = vsel %vm778, 0, %v821
        %823 = vst [vmem:[#allocation2 + $0xa8] sm:$0x1] %v822
        %v824 = vld [vmem:[#allocation2 + $0xb4] sm:$0x1]
        %v825 = vsel %vm778, 0, %v824
        %826 = vst [vmem:[#allocation2 + $0xb4] sm:$0x1] %v825
        %v827 = vld [vmem:[#allocation2 + $0xc0] sm:$0x1]
        %v828 = vsel %vm778, 0, %v827
        %829 = vst [vmem:[#allocation2 + $0xc0] sm:$0x1] %v828
        %v830 = vld [vmem:[#allocation2 + $0xcc] sm:$0x1]
        %v831 = vsel %vm778, 0, %v830
        %832 = vst [vmem:[#allocation2 + $0xcc] sm:$0x1] %v831
        %vm833 = vsmask.f32 7938
        %vm834 = vmand %vm776, %vm833
        %v835 = vld [vmem:[#allocation2 + $0x8] sm:$0x1]
        %v836 = vsel %vm834, 0, %v835
        %837 = vst [vmem:[#allocation2 + $0x8] sm:$0x1] %v836
        %v838 = vld [vmem:[#allocation2 + $0x14] sm:$0x1]
        %v839 = vsel %vm834, 0, %v838
        %840 = vst [vmem:[#allocation2 + $0x14] sm:$0x1] %v839
        %v841 = vld [vmem:[#allocation2 + $0x20] sm:$0x1]
        %v842 = vsel %vm834, 0, %v841
        %843 = vst [vmem:[#allocation2 + $0x20] sm:$0x1] %v842
        %v844 = vld [vmem:[#allocation2 + $0x2c] sm:$0x1]
        %v845 = vsel %vm834, 0, %v844
        %846 = vst [vmem:[#allocation2 + $0x2c] sm:$0x1] %v845
        %v847 = vld [vmem:[#allocation2 + $0x38] sm:$0x1]
        %v848 = vsel %vm834, 0, %v847
        %849 = vst [vmem:[#allocation2 + $0x38] sm:$0x1] %v848
        %v850 = vld [vmem:[#allocation2 + $0x44] sm:$0x1]
        %v851 = vsel %vm834, 0, %v850
        %852 = vst [vmem:[#allocation2 + $0x44] sm:$0x1] %v851
        %v853 = vld [vmem:[#allocation2 + $0x50] sm:$0x1]
        %v854 = vsel %vm834, 0, %v853
        %855 = vst [vmem:[#allocation2 + $0x50] sm:$0x1] %v854
        %v856 = vld [vmem:[#allocation2 + $0x5c] sm:$0x1]
        %v857 = vsel %vm834, 0, %v856
        %858 = vst [vmem:[#allocation2 + $0x5c] sm:$0x1] %v857
        %v859 = vld [vmem:[#allocation2 + $0x68] sm:$0x1]
        %v860 = vsel %vm834, 0, %v859
        %861 = vst [vmem:[#allocation2 + $0x68] sm:$0x1] %v860
        %v862 = vld [vmem:[#allocation2 + $0x74] sm:$0x1]
        %v863 = vsel %vm834, 0, %v862
        %864 = vst [vmem:[#allocation2 + $0x74] sm:$0x1] %v863
        %v865 = vld [vmem:[#allocation2 + $0x80] sm:$0x1]
        %v866 = vsel %vm834, 0, %v865
        %867 = vst [vmem:[#allocation2 + $0x80] sm:$0x1] %v866
        %v868 = vld [vmem:[#allocation2 + $0x8c] sm:$0x1]
        %v869 = vsel %vm834, 0, %v868
        %870 = vst [vmem:[#allocation2 + $0x8c] sm:$0x1] %v869
        %v871 = vld [vmem:[#allocation2 + $0x98] sm:$0x1]
        %v872 = vsel %vm834, 0, %v871
        %873 = vst [vmem:[#allocation2 + $0x98] sm:$0x1] %v872
        %v874 = vld [vmem:[#allocation2 + $0xa4] sm:$0x1]
        %v875 = vsel %vm834, 0, %v874
        %876 = vst [vmem:[#allocation2 + $0xa4] sm:$0x1] %v875
        %v877 = vld [vmem:[#allocation2 + $0xb0] sm:$0x1]
        %v878 = vsel %vm834, 0, %v877
        %879 = vst [vmem:[#allocation2 + $0xb0] sm:$0x1] %v878
        %v880 = vld [vmem:[#allocation2 + $0xbc] sm:$0x1]
        %v881 = vsel %vm834, 0, %v880
        %882 = vst [vmem:[#allocation2 + $0xbc] sm:$0x1] %v881
        %v883 = vld [vmem:[#allocation2 + $0xc8] sm:$0x1]
        %v884 = vsel %vm834, 0, %v883
        %885 = vst [vmem:[#allocation2 + $0xc8] sm:$0x1] %v884
        %v886 = vld [vmem:[#allocation2 + $0xd4] sm:$0x1]
        %v887 = vsel %vm834, 0, %v886
        %888 = vst [vmem:[#allocation2 + $0xd4] sm:$0x1] %v887
        %vm889 = vsmask.f32 4368
        %vm890 = vmor %vm777, %vm889
        %v892 = vshrl.u32 %v737, 16
        %v894 = vrot.slane %v892, 7
        %v895 = vshll.u32 %v737, 16
        %v897 = vor.u32 %v894, %v895
        %v898 = vrot.slane %v894, 4
        %v900 = vshrl.u32 %v738, 16
        %v902 = vrot.slane %v900, 7
        %v903 = vshll.u32 %v738, 16
        %v905 = vor.u32 %v902, %v903
        %v906 = vsel %vm890, %v898, %v905
        %v907 = vrot.slane %v902, 4
        %v909 = vshrl.u32 %v739, 16
        %v911 = vrot.slane %v909, 7
        %v912 = vshll.u32 %v739, 16
        %v914 = vor.u32 %v911, %v912
        %v915 = vrot.slane %v911, 4
        %v917 = vshrl.u32 %v740, 16
        %v919 = vrot.slane %v917, 7
        %v920 = vshll.u32 %v740, 16
        %v922 = vor.u32 %v919, %v920
        %v923 = vsel %vm890, %v915, %v922
        %v924 = vrot.slane %v919, 4
        %v926 = vshrl.u32 %v741, 16
        %v928 = vrot.slane %v926, 7
        %v929 = vshll.u32 %v741, 16
        %v931 = vor.u32 %v928, %v929
        %v932 = vrot.slane %v928, 4
        %v934 = vshrl.u32 %v742, 16
        %v936 = vrot.slane %v934, 7
        %v937 = vshll.u32 %v742, 16
        %v939 = vor.u32 %v936, %v937
        %v940 = vsel %vm890, %v932, %v939
        %v941 = vrot.slane %v936, 4
        %v943 = vshrl.u32 %v743, 16
        %v945 = vrot.slane %v943, 7
        %v946 = vshll.u32 %v743, 16
        %v948 = vor.u32 %v945, %v946
        %v949 = vrot.slane %v945, 4
        %v951 = vshrl.u32 %v744, 16
        %v953 = vrot.slane %v951, 7
        %v954 = vshll.u32 %v744, 16
        %v956 = vor.u32 %v953, %v954
        %v957 = vsel %vm890, %v949, %v956
        %v958 = vrot.slane %v953, 4
        %v960 = vshrl.u32 %v745, 16
        %v962 = vrot.slane %v960, 7
        %v963 = vshll.u32 %v745, 16
        %v965 = vor.u32 %v962, %v963
        %v966 = vrot.slane %v962, 4
        %v968 = vshrl.u32 %v746, 16
        %v970 = vrot.slane %v968, 7
        %v971 = vshll.u32 %v746, 16
        %v973 = vor.u32 %v970, %v971
        %v974 = vsel %vm890, %v966, %v973
        %v975 = vrot.slane %v970, 4
        %v977 = vshrl.u32 %v747, 16
        %v979 = vrot.slane %v977, 7
        %v980 = vshll.u32 %v747, 16
        %v982 = vor.u32 %v979, %v980
        %v983 = vrot.slane %v979, 4
        %v985 = vshrl.u32 %v748, 16
        %v987 = vrot.slane %v985, 7
        %v988 = vshll.u32 %v748, 16
        %v990 = vor.u32 %v987, %v988
        %v991 = vsel %vm890, %v983, %v990
        %v992 = vrot.slane %v987, 4
        %v994 = vshrl.u32 %v749, 16
        %v996 = vrot.slane %v994, 7
        %v997 = vshll.u32 %v749, 16
        %v999 = vor.u32 %v996, %v997
        %v1000 = vrot.slane %v996, 4
        %v1002 = vshrl.u32 %v750, 16
        %v1004 = vrot.slane %v1002, 7
        %v1005 = vshll.u32 %v750, 16
        %v1007 = vor.u32 %v1004, %v1005
        %v1008 = vsel %vm890, %v1000, %v1007
        %v1009 = vrot.slane %v1004, 4
        %v1011 = vshrl.u32 %v751, 16
        %v1013 = vrot.slane %v1011, 7
        %v1014 = vshll.u32 %v751, 16
        %v1016 = vor.u32 %v1013, %v1014
        %v1017 = vrot.slane %v1013, 4
        %v1019 = vshrl.u32 %v752, 16
        %v1021 = vrot.slane %v1019, 7
        %v1022 = vshll.u32 %v752, 16
        %v1024 = vor.u32 %v1021, %v1022
        %v1025 = vsel %vm890, %v1017, %v1024
        %v1026 = vrot.slane %v1021, 4
        %v1028 = vshrl.u32 %v753, 16
        %v1030 = vrot.slane %v1028, 7
        %v1031 = vshll.u32 %v753, 16
        %v1033 = vor.u32 %v1030, %v1031
        %v1034 = vrot.slane %v1030, 4
        %v1036 = vshrl.u32 %v754, 16
        %v1038 = vrot.slane %v1036, 7
        %v1039 = vshll.u32 %v754, 16
        %v1041 = vor.u32 %v1038, %v1039
        %v1042 = vsel %vm890, %v1034, %v1041
        %v1043 = vrot.slane %v1038, 4
        %v1045 = vshrl.u32 %v755, 16
        %v1047 = vrot.slane %v1045, 7
        %v1048 = vshll.u32 %v755, 16
        %v1050 = vor.u32 %v1047, %v1048
        %v1051 = vrot.slane %v1047, 4
        %v1053 = vshrl.u32 %v756, 16
        %v1055 = vrot.slane %v1053, 7
        %v1056 = vshll.u32 %v756, 16
        %v1058 = vor.u32 %v1055, %v1056
        %v1059 = vsel %vm890, %v1051, %v1058
        %v1060 = vrot.slane %v1055, 4
        %v1062 = vshrl.u32 %v757, 16
        %v1064 = vrot.slane %v1062, 7
        %v1065 = vshll.u32 %v757, 16
        %v1067 = vor.u32 %v1064, %v1065
        %v1068 = vrot.slane %v1064, 4
        %v1070 = vshrl.u32 %v758, 16
        %v1072 = vrot.slane %v1070, 7
        %v1073 = vshll.u32 %v758, 16
        %v1075 = vor.u32 %v1072, %v1073
        %v1076 = vsel %vm890, %v1068, %v1075
        %v1077 = vrot.slane %v1072, 4
        %v1079 = vshrl.u32 %v759, 16
        %v1081 = vrot.slane %v1079, 7
        %v1082 = vshll.u32 %v759, 16
        %v1084 = vor.u32 %v1081, %v1082
        %v1085 = vrot.slane %v1081, 4
        %v1087 = vshrl.u32 %v760, 16
        %v1089 = vrot.slane %v1087, 7
        %v1090 = vshll.u32 %v760, 16
        %v1092 = vor.u32 %v1089, %v1090
        %v1093 = vsel %vm890, %v1085, %v1092
        %v1094 = vrot.slane %v1089, 4
        %v1096 = vshrl.u32 %v761, 16
        %v1098 = vrot.slane %v1096, 7
        %v1099 = vshll.u32 %v761, 16
        %v1101 = vor.u32 %v1098, %v1099
        %v1102 = vrot.slane %v1098, 4
        %v1104 = vshrl.u32 %v762, 16
        %v1106 = vrot.slane %v1104, 7
        %v1107 = vshll.u32 %v762, 16
        %v1109 = vor.u32 %v1106, %v1107
        %v1110 = vsel %vm890, %v1102, %v1109
        %v1111 = vrot.slane %v1106, 4
        %v1113 = vshrl.u32 %v763, 16
        %v1115 = vrot.slane %v1113, 7
        %v1116 = vshll.u32 %v763, 16
        %v1118 = vor.u32 %v1115, %v1116
        %v1119 = vrot.slane %v1115, 4
        %v1121 = vshrl.u32 %v764, 16
        %v1123 = vrot.slane %v1121, 7
        %v1124 = vshll.u32 %v764, 16
        %v1126 = vor.u32 %v1123, %v1124
        %v1127 = vsel %vm890, %v1119, %v1126
        %v1128 = vrot.slane %v1123, 4
        %v1130 = vshrl.u32 %v765, 16
        %v1132 = vrot.slane %v1130, 7
        %v1133 = vshll.u32 %v765, 16
        %v1135 = vor.u32 %v1132, %v1133
        %v1136 = vrot.slane %v1132, 4
        %v1138 = vshrl.u32 %v766, 16
        %v1140 = vrot.slane %v1138, 7
        %v1141 = vshll.u32 %v766, 16
        %v1143 = vor.u32 %v1140, %v1141
        %v1144 = vsel %vm890, %v1136, %v1143
        %v1145 = vrot.slane %v1140, 4
        %v1147 = vshrl.u32 %v767, 16
        %v1149 = vrot.slane %v1147, 7
        %v1150 = vshll.u32 %v767, 16
        %v1152 = vor.u32 %v1149, %v1150
        %v1153 = vrot.slane %v1149, 4
        %v1155 = vshrl.u32 %v768, 16
        %v1157 = vrot.slane %v1155, 7
        %v1158 = vshll.u32 %v768, 16
        %v1160 = vor.u32 %v1157, %v1158
        %v1161 = vsel %vm890, %v1153, %v1160
        %v1162 = vrot.slane %v1157, 4
        %s1211 = scalar_lea.vmem [#allocation2], 12
        %vm1212 = vcmask 1043456
        %vm1213 = vmand %vm1212, %vm833
        %v1214 = vld [vmem:[%s1211] sm:$0xf]
        %v1215 = vsel %vm1213, %v897, %v1214
        %1216 = vst [vmem:[%s1211] sm:$0xf] %v1215
        %1217 = vst [vmem:[%s1211 + $0x4] sm:$0xf] %v906
        %v1218 = vld [vmem:[%s1211 + $0x8] sm:$0x1]
        %v1219 = vsel %vm778, %v907, %v1218
        %1220 = vst [vmem:[%s1211 + $0x8] sm:$0x1] %v1219
        %v1221 = vld [vmem:[%s1211 + $0xc] sm:$0xf]
        %v1222 = vsel %vm1213, %v914, %v1221
        %1223 = vst [vmem:[%s1211 + $0xc] sm:$0xf] %v1222
        %1224 = vst [vmem:[%s1211 + $0x10] sm:$0xf] %v923
        %v1225 = vld [vmem:[%s1211 + $0x14] sm:$0x1]
        %v1226 = vsel %vm778, %v924, %v1225
        %1227 = vst [vmem:[%s1211 + $0x14] sm:$0x1] %v1226
        %v1228 = vld [vmem:[%s1211 + $0x18] sm:$0xf]
        %v1229 = vsel %vm1213, %v931, %v1228
        %1230 = vst [vmem:[%s1211 + $0x18] sm:$0xf] %v1229
        %1231 = vst [vmem:[%s1211 + $0x1c] sm:$0xf] %v940
        %v1232 = vld [vmem:[%s1211 + $0x20] sm:$0x1]
        %v1233 = vsel %vm778, %v941, %v1232
        %1234 = vst [vmem:[%s1211 + $0x20] sm:$0x1] %v1233
        %v1235 = vld [vmem:[%s1211 + $0x24] sm:$0xf]
        %v1236 = vsel %vm1213, %v948, %v1235
        %1237 = vst [vmem:[%s1211 + $0x24] sm:$0xf] %v1236
        %1238 = vst [vmem:[%s1211 + $0x28] sm:$0xf] %v957
        %v1239 = vld [vmem:[%s1211 + $0x2c] sm:$0x1]
        %v1240 = vsel %vm778, %v958, %v1239
        %1241 = vst [vmem:[%s1211 + $0x2c] sm:$0x1] %v1240
        %v1242 = vld [vmem:[%s1211 + $0x30] sm:$0xf]
        %v1243 = vsel %vm1213, %v965, %v1242
        %1244 = vst [vmem:[%s1211 + $0x30] sm:$0xf] %v1243
        %1245 = vst [vmem:[%s1211 + $0x34] sm:$0xf] %v974
        %v1246 = vld [vmem:[%s1211 + $0x38] sm:$0x1]
        %v1247 = vsel %vm778, %v975, %v1246
        %1248 = vst [vmem:[%s1211 + $0x38] sm:$0x1] %v1247
        %v1249 = vld [vmem:[%s1211 + $0x3c] sm:$0xf]
        %v1250 = vsel %vm1213, %v982, %v1249
        %1251 = vst [vmem:[%s1211 + $0x3c] sm:$0xf] %v1250
        %1252 = vst [vmem:[%s1211 + $0x40] sm:$0xf] %v991
        %v1253 = vld [vmem:[%s1211 + $0x44] sm:$0x1]
        %v1254 = vsel %vm778, %v992, %v1253
        %1255 = vst [vmem:[%s1211 + $0x44] sm:$0x1] %v1254
        %v1256 = vld [vmem:[%s1211 + $0x48] sm:$0xf]
        %v1257 = vsel %vm1213, %v999, %v1256
        %1258 = vst [vmem:[%s1211 + $0x48] sm:$0xf] %v1257
        %1259 = vst [vmem:[%s1211 + $0x4c] sm:$0xf] %v1008
        %v1260 = vld [vmem:[%s1211 + $0x50] sm:$0x1]
        %v1261 = vsel %vm778, %v1009, %v1260
        %1262 = vst [vmem:[%s1211 + $0x50] sm:$0x1] %v1261
        %v1263 = vld [vmem:[%s1211 + $0x54] sm:$0xf]
        %v1264 = vsel %vm1213, %v1016, %v1263
        %1265 = vst [vmem:[%s1211 + $0x54] sm:$0xf] %v1264
        %1266 = vst [vmem:[%s1211 + $0x58] sm:$0xf] %v1025
        %v1267 = vld [vmem:[%s1211 + $0x5c] sm:$0x1]
        %v1268 = vsel %vm778, %v1026, %v1267
        %1269 = vst [vmem:[%s1211 + $0x5c] sm:$0x1] %v1268
        %v1270 = vld [vmem:[%s1211 + $0x60] sm:$0xf]
        %v1271 = vsel %vm1213, %v1033, %v1270
        %1272 = vst [vmem:[%s1211 + $0x60] sm:$0xf] %v1271
        %1273 = vst [vmem:[%s1211 + $0x64] sm:$0xf] %v1042
        %v1274 = vld [vmem:[%s1211 + $0x68] sm:$0x1]
        %v1275 = vsel %vm778, %v1043, %v1274
        %1276 = vst [vmem:[%s1211 + $0x68] sm:$0x1] %v1275
        %v1277 = vld [vmem:[%s1211 + $0x6c] sm:$0xf]
        %v1278 = vsel %vm1213, %v1050, %v1277
        %1279 = vst [vmem:[%s1211 + $0x6c] sm:$0xf] %v1278
        %1280 = vst [vmem:[%s1211 + $0x70] sm:$0xf] %v1059
        %v1281 = vld [vmem:[%s1211 + $0x74] sm:$0x1]
        %v1282 = vsel %vm778, %v1060, %v1281
        %1283 = vst [vmem:[%s1211 + $0x74] sm:$0x1] %v1282
        %v1284 = vld [vmem:[%s1211 + $0x78] sm:$0xf]
        %v1285 = vsel %vm1213, %v1067, %v1284
        %1286 = vst [vmem:[%s1211 + $0x78] sm:$0xf] %v1285
        %1287 = vst [vmem:[%s1211 + $0x7c] sm:$0xf] %v1076
        %v1288 = vld [vmem:[%s1211 + $0x80] sm:$0x1]
        %v1289 = vsel %vm778, %v1077, %v1288
        %1290 = vst [vmem:[%s1211 + $0x80] sm:$0x1] %v1289
        %v1291 = vld [vmem:[%s1211 + $0x84] sm:$0xf]
        %v1292 = vsel %vm1213, %v1084, %v1291
        %1293 = vst [vmem:[%s1211 + $0x84] sm:$0xf] %v1292
        %1294 = vst [vmem:[%s1211 + $0x88] sm:$0xf] %v1093
        %v1295 = vld [vmem:[%s1211 + $0x8c] sm:$0x1]
        %v1296 = vsel %vm778, %v1094, %v1295
        %1297 = vst [vmem:[%s1211 + $0x8c] sm:$0x1] %v1296
        %v1298 = vld [vmem:[%s1211 + $0x90] sm:$0xf]
        %v1299 = vsel %vm1213, %v1101, %v1298
        %1300 = vst [vmem:[%s1211 + $0x90] sm:$0xf] %v1299
        %1301 = vst [vmem:[%s1211 + $0x94] sm:$0xf] %v1110
        %v1302 = vld [vmem:[%s1211 + $0x98] sm:$0x1]
        %v1303 = vsel %vm778, %v1111, %v1302
        %1304 = vst [vmem:[%s1211 + $0x98] sm:$0x1] %v1303
        %v1305 = vld [vmem:[%s1211 + $0x9c] sm:$0xf]
        %v1306 = vsel %vm1213, %v1118, %v1305
        %1307 = vst [vmem:[%s1211 + $0x9c] sm:$0xf] %v1306
        %1308 = vst [vmem:[%s1211 + $0xa0] sm:$0xf] %v1127
        %v1309 = vld [vmem:[%s1211 + $0xa4] sm:$0x1]
        %v1310 = vsel %vm778, %v1128, %v1309
        %1311 = vst [vmem:[%s1211 + $0xa4] sm:$0x1] %v1310
        %v1312 = vld [vmem:[%s1211 + $0xa8] sm:$0xf]
        %v1313 = vsel %vm1213, %v1135, %v1312
        %1314 = vst [vmem:[%s1211 + $0xa8] sm:$0xf] %v1313
        %1315 = vst [vmem:[%s1211 + $0xac] sm:$0xf] %v1144
        %v1316 = vld [vmem:[%s1211 + $0xb0] sm:$0x1]
        %v1317 = vsel %vm778, %v1145, %v1316
        %1318 = vst [vmem:[%s1211 + $0xb0] sm:$0x1] %v1317
        %v1319 = vld [vmem:[%s1211 + $0xb4] sm:$0xf]
        %v1320 = vsel %vm1213, %v1152, %v1319
        %1321 = vst [vmem:[%s1211 + $0xb4] sm:$0xf] %v1320
        %1322 = vst [vmem:[%s1211 + $0xb8] sm:$0xf] %v1161
        %v1323 = vld [vmem:[%s1211 + $0xbc] sm:$0x1]
        %v1324 = vsel %vm778, %v1162, %v1323
        %1325 = vst [vmem:[%s1211 + $0xbc] sm:$0x1] %v1324
        %v1326 = vld [vmem:[#allocation2] sm:$0xf]
        %v1327 = vld [vmem:[#allocation2 + $0x4] sm:$0xf]
        %v1328 = vld [vmem:[#allocation2 + $0xc] sm:$0xf]
        %v1329 = vld [vmem:[#allocation2 + $0x10] sm:$0xf]
        %v1330 = vld [vmem:[#allocation2 + $0x18] sm:$0xf]
        %v1331 = vld [vmem:[#allocation2 + $0x1c] sm:$0xf]
        %v1332 = vld [vmem:[#allocation2 + $0x24] sm:$0xf]
        %v1333 = vld [vmem:[#allocation2 + $0x28] sm:$0xf]
        %v1334 = vld [vmem:[#allocation2 + $0x30] sm:$0xf]
        %v1335 = vld [vmem:[#allocation2 + $0x34] sm:$0xf]
        %v1336 = vld [vmem:[#allocation2 + $0x3c] sm:$0xf]
        %v1337 = vld [vmem:[#allocation2 + $0x40] sm:$0xf]
        %v1338 = vld [vmem:[#allocation2 + $0x48] sm:$0xf]
        %v1339 = vld [vmem:[#allocation2 + $0x4c] sm:$0xf]
        %v1340 = vld [vmem:[#allocation2 + $0x54] sm:$0xf]
        %v1341 = vld [vmem:[#allocation2 + $0x58] sm:$0xf]
        %v1342 = vld [vmem:[#allocation2 + $0x60] sm:$0xf]
        %v1343 = vld [vmem:[#allocation2 + $0x64] sm:$0xf]
        %v1344 = vld [vmem:[#allocation2 + $0x6c] sm:$0xf]
        %v1345 = vld [vmem:[#allocation2 + $0x70] sm:$0xf]
        %v1346 = vld [vmem:[#allocation2 + $0x78] sm:$0xf]
        %v1347 = vld [vmem:[#allocation2 + $0x7c] sm:$0xf]
        %v1348 = vld [vmem:[#allocation2 + $0x84] sm:$0xf]
        %v1349 = vld [vmem:[#allocation2 + $0x88] sm:$0xf]
        %v1350 = vld [vmem:[#allocation2 + $0x90] sm:$0xf]
        %v1351 = vld [vmem:[#allocation2 + $0x94] sm:$0xf]
        %v1352 = vld [vmem:[#allocation2 + $0x9c] sm:$0xf]
        %v1353 = vld [vmem:[#allocation2 + $0xa0] sm:$0xf]
        %v1354 = vld [vmem:[#allocation2 + $0xa8] sm:$0xf]
        %v1355 = vld [vmem:[#allocation2 + $0xac] sm:$0xf]
        %v1356 = vld [vmem:[#allocation2 + $0xb4] sm:$0xf]
        %v1357 = vld [vmem:[#allocation2 + $0xb8] sm:$0xf]
        %v1358 = vld [vmem:[#allocation2 + $0x8] sm:$0x1]
        %v1359 = vld [vmem:[#allocation2 + $0x14] sm:$0x1]
        %v1360 = vld [vmem:[#allocation2 + $0x20] sm:$0x1]
        %v1361 = vld [vmem:[#allocation2 + $0x2c] sm:$0x1]
        %v1362 = vld [vmem:[#allocation2 + $0x38] sm:$0x1]
        %v1363 = vld [vmem:[#allocation2 + $0x44] sm:$0x1]
        %v1364 = vld [vmem:[#allocation2 + $0x50] sm:$0x1]
        %v1365 = vld [vmem:[#allocation2 + $0x5c] sm:$0x1]
        %v1366 = vld [vmem:[#allocation2 + $0x68] sm:$0x1]
        %v1367 = vld [vmem:[#allocation2 + $0x74] sm:$0x1]
        %v1368 = vld [vmem:[#allocation2 + $0x80] sm:$0x1]
        %v1369 = vld [vmem:[#allocation2 + $0x8c] sm:$0x1]
        %v1370 = vld [vmem:[#allocation2 + $0x98] sm:$0x1]
        %v1371 = vld [vmem:[#allocation2 + $0xa4] sm:$0x1]
        %v1372 = vld [vmem:[#allocation2 + $0xb0] sm:$0x1]
        %v1373 = vld [vmem:[#allocation2 + $0xbc] sm:$0x1]
        %vm1374 = vsmask.f32 3328
        %vm1375 = vsmask.f32 7440
        %vm1376 = vmor %vm1374, %vm1375
        %v1378 = vshrl.u32 %v1326, 16
        %v1380 = vrot.slane %v1378, 4
        %v1381 = vshll.u32 %v1326, 16
        %v1383 = vrot.slane %v1381, 5
        %v1384 = vor.u32 %v1380, %v1383
        %v1385 = vrot.slane %v1384, 4
        %v1387 = vshll.u32 %v1327, 16
        %v1389 = vrot.slane %v1387, 5
        %v1390 = vsel %vm1376, %v1385, %v1389
        %v1391 = vshrl.u32 %v1327, 16
        %v1393 = vrot.slane %v1391, 4
        %v1394 = vor.u32 %v1393, %v1389
        %v1395 = vrot.slane %v1394, 4
        %v1397 = vshll.u32 %v1358, 16
        %v1399 = vrot.slane %v1397, 5
        %v1400 = vsel %vm1376, %v1395, %v1399
        %v1402 = vshrl.u32 %v1328, 16
        %v1404 = vrot.slane %v1402, 4
        %v1405 = vshll.u32 %v1328, 16
        %v1407 = vrot.slane %v1405, 5
        %v1408 = vor.u32 %v1404, %v1407
        %v1409 = vrot.slane %v1408, 4
        %v1411 = vshll.u32 %v1329, 16
        %v1413 = vrot.slane %v1411, 5
        %v1414 = vsel %vm1376, %v1409, %v1413
        %v1415 = vshrl.u32 %v1329, 16
        %v1417 = vrot.slane %v1415, 4
        %v1418 = vor.u32 %v1417, %v1413
        %v1419 = vrot.slane %v1418, 4
        %v1421 = vshll.u32 %v1359, 16
        %v1423 = vrot.slane %v1421, 5
        %v1424 = vsel %vm1376, %v1419, %v1423
        %v1426 = vshrl.u32 %v1330, 16
        %v1428 = vrot.slane %v1426, 4
        %v1429 = vshll.u32 %v1330, 16
        %v1431 = vrot.slane %v1429, 5
        %v1432 = vor.u32 %v1428, %v1431
        %v1433 = vrot.slane %v1432, 4
        %v1435 = vshll.u32 %v1331, 16
        %v1437 = vrot.slane %v1435, 5
        %v1438 = vsel %vm1376, %v1433, %v1437
        %v1439 = vshrl.u32 %v1331, 16
        %v1441 = vrot.slane %v1439, 4
        %v1442 = vor.u32 %v1441, %v1437
        %v1443 = vrot.slane %v1442, 4
        %v1445 = vshll.u32 %v1360, 16
        %v1447 = vrot.slane %v1445, 5
        %v1448 = vsel %vm1376, %v1443, %v1447
        %v1450 = vshrl.u32 %v1332, 16
        %v1452 = vrot.slane %v1450, 4
        %v1453 = vshll.u32 %v1332, 16
        %v1455 = vrot.slane %v1453, 5
        %v1456 = vor.u32 %v1452, %v1455
        %v1457 = vrot.slane %v1456, 4
        %v1459 = vshll.u32 %v1333, 16
        %v1461 = vrot.slane %v1459, 5
        %v1462 = vsel %vm1376, %v1457, %v1461
        %v1463 = vshrl.u32 %v1333, 16
        %v1465 = vrot.slane %v1463, 4
        %v1466 = vor.u32 %v1465, %v1461
        %v1467 = vrot.slane %v1466, 4
        %v1469 = vshll.u32 %v1361, 16
        %v1471 = vrot.slane %v1469, 5
        %v1472 = vsel %vm1376, %v1467, %v1471
        %v1474 = vshrl.u32 %v1334, 16
        %v1476 = vrot.slane %v1474, 4
        %v1477 = vshll.u32 %v1334, 16
        %v1479 = vrot.slane %v1477, 5
        %v1480 = vor.u32 %v1476, %v1479
        %v1481 = vrot.slane %v1480, 4
        %v1483 = vshll.u32 %v1335, 16
        %v1485 = vrot.slane %v1483, 5
        %v1486 = vsel %vm1376, %v1481, %v1485
        %v1487 = vshrl.u32 %v1335, 16
        %v1489 = vrot.slane %v1487, 4
        %v1490 = vor.u32 %v1489, %v1485
        %v1491 = vrot.slane %v1490, 4
        %v1493 = vshll.u32 %v1362, 16
        %v1495 = vrot.slane %v1493, 5
        %v1496 = vsel %vm1376, %v1491, %v1495
        %v1498 = vshrl.u32 %v1336, 16
        %v1500 = vrot.slane %v1498, 4
        %v1501 = vshll.u32 %v1336, 16
        %v1503 = vrot.slane %v1501, 5
        %v1504 = vor.u32 %v1500, %v1503
        %v1505 = vrot.slane %v1504, 4
        %v1507 = vshll.u32 %v1337, 16
        %v1509 = vrot.slane %v1507, 5
        %v1510 = vsel %vm1376, %v1505, %v1509
        %v1511 = vshrl.u32 %v1337, 16
        %v1513 = vrot.slane %v1511, 4
        %v1514 = vor.u32 %v1513, %v1509
        %v1515 = vrot.slane %v1514, 4
        %v1517 = vshll.u32 %v1363, 16
        %v1519 = vrot.slane %v1517, 5
        %v1520 = vsel %vm1376, %v1515, %v1519
        %v1522 = vshrl.u32 %v1338, 16
        %v1524 = vrot.slane %v1522, 4
        %v1525 = vshll.u32 %v1338, 16
        %v1527 = vrot.slane %v1525, 5
        %v1528 = vor.u32 %v1524, %v1527
        %v1529 = vrot.slane %v1528, 4
        %v1531 = vshll.u32 %v1339, 16
        %v1533 = vrot.slane %v1531, 5
        %v1534 = vsel %vm1376, %v1529, %v1533
        %v1535 = vshrl.u32 %v1339, 16
        %v1537 = vrot.slane %v1535, 4
        %v1538 = vor.u32 %v1537, %v1533
        %v1539 = vrot.slane %v1538, 4
        %v1541 = vshll.u32 %v1364, 16
        %v1543 = vrot.slane %v1541, 5
        %v1544 = vsel %vm1376, %v1539, %v1543
        %v1546 = vshrl.u32 %v1340, 16
        %v1548 = vrot.slane %v1546, 4
        %v1549 = vshll.u32 %v1340, 16
        %v1551 = vrot.slane %v1549, 5
        %v1552 = vor.u32 %v1548, %v1551
        %v1553 = vrot.slane %v1552, 4
        %v1555 = vshll.u32 %v1341, 16
        %v1557 = vrot.slane %v1555, 5
        %v1558 = vsel %vm1376, %v1553, %v1557
        %v1559 = vshrl.u32 %v1341, 16
        %v1561 = vrot.slane %v1559, 4
        %v1562 = vor.u32 %v1561, %v1557
        %v1563 = vrot.slane %v1562, 4
        %v1565 = vshll.u32 %v1365, 16
        %v1567 = vrot.slane %v1565, 5
        %v1568 = vsel %vm1376, %v1563, %v1567
        %v1570 = vshrl.u32 %v1342, 16
        %v1572 = vrot.slane %v1570, 4
        %v1573 = vshll.u32 %v1342, 16
        %v1575 = vrot.slane %v1573, 5
        %v1576 = vor.u32 %v1572, %v1575
        %v1577 = vrot.slane %v1576, 4
        %v1579 = vshll.u32 %v1343, 16
        %v1581 = vrot.slane %v1579, 5
        %v1582 = vsel %vm1376, %v1577, %v1581
        %v1583 = vshrl.u32 %v1343, 16
        %v1585 = vrot.slane %v1583, 4
        %v1586 = vor.u32 %v1585, %v1581
        %v1587 = vrot.slane %v1586, 4
        %v1589 = vshll.u32 %v1366, 16
        %v1591 = vrot.slane %v1589, 5
        %v1592 = vsel %vm1376, %v1587, %v1591
        %v1594 = vshrl.u32 %v1344, 16
        %v1596 = vrot.slane %v1594, 4
        %v1597 = vshll.u32 %v1344, 16
        %v1599 = vrot.slane %v1597, 5
        %v1600 = vor.u32 %v1596, %v1599
        %v1601 = vrot.slane %v1600, 4
        %v1603 = vshll.u32 %v1345, 16
        %v1605 = vrot.slane %v1603, 5
        %v1606 = vsel %vm1376, %v1601, %v1605
        %v1607 = vshrl.u32 %v1345, 16
        %v1609 = vrot.slane %v1607, 4
        %v1610 = vor.u32 %v1609, %v1605
        %v1611 = vrot.slane %v1610, 4
        %v1613 = vshll.u32 %v1367, 16
        %v1615 = vrot.slane %v1613, 5
        %v1616 = vsel %vm1376, %v1611, %v1615
        %v1618 = vshrl.u32 %v1346, 16
        %v1620 = vrot.slane %v1618, 4
        %v1621 = vshll.u32 %v1346, 16
        %v1623 = vrot.slane %v1621, 5
        %v1624 = vor.u32 %v1620, %v1623
        %v1625 = vrot.slane %v1624, 4
        %v1627 = vshll.u32 %v1347, 16
        %v1629 = vrot.slane %v1627, 5
        %v1630 = vsel %vm1376, %v1625, %v1629
        %v1631 = vshrl.u32 %v1347, 16
        %v1633 = vrot.slane %v1631, 4
        %v1634 = vor.u32 %v1633, %v1629
        %v1635 = vrot.slane %v1634, 4
        %v1637 = vshll.u32 %v1368, 16
        %v1639 = vrot.slane %v1637, 5
        %v1640 = vsel %vm1376, %v1635, %v1639
        %v1642 = vshrl.u32 %v1348, 16
        %v1644 = vrot.slane %v1642, 4
        %v1645 = vshll.u32 %v1348, 16
        %v1647 = vrot.slane %v1645, 5
        %v1648 = vor.u32 %v1644, %v1647
        %v1649 = vrot.slane %v1648, 4
        %v1651 = vshll.u32 %v1349, 16
        %v1653 = vrot.slane %v1651, 5
        %v1654 = vsel %vm1376, %v1649, %v1653
        %v1655 = vshrl.u32 %v1349, 16
        %v1657 = vrot.slane %v1655, 4
        %v1658 = vor.u32 %v1657, %v1653
        %v1659 = vrot.slane %v1658, 4
        %v1661 = vshll.u32 %v1369, 16
        %v1663 = vrot.slane %v1661, 5
        %v1664 = vsel %vm1376, %v1659, %v1663
        %v1666 = vshrl.u32 %v1350, 16
        %v1668 = vrot.slane %v1666, 4
        %v1669 = vshll.u32 %v1350, 16
        %v1671 = vrot.slane %v1669, 5
        %v1672 = vor.u32 %v1668, %v1671
        %v1673 = vrot.slane %v1672, 4
        %v1675 = vshll.u32 %v1351, 16
        %v1677 = vrot.slane %v1675, 5
        %v1678 = vsel %vm1376, %v1673, %v1677
        %v1679 = vshrl.u32 %v1351, 16
        %v1681 = vrot.slane %v1679, 4
        %v1682 = vor.u32 %v1681, %v1677
        %v1683 = vrot.slane %v1682, 4
        %v1685 = vshll.u32 %v1370, 16
        %v1687 = vrot.slane %v1685, 5
        %v1688 = vsel %vm1376, %v1683, %v1687
        %v1690 = vshrl.u32 %v1352, 16
        %v1692 = vrot.slane %v1690, 4
        %v1693 = vshll.u32 %v1352, 16
        %v1695 = vrot.slane %v1693, 5
        %v1696 = vor.u32 %v1692, %v1695
        %v1697 = vrot.slane %v1696, 4
        %v1699 = vshll.u32 %v1353, 16
        %v1701 = vrot.slane %v1699, 5
        %v1702 = vsel %vm1376, %v1697, %v1701
        %v1703 = vshrl.u32 %v1353, 16
        %v1705 = vrot.slane %v1703, 4
        %v1706 = vor.u32 %v1705, %v1701
        %v1707 = vrot.slane %v1706, 4
        %v1709 = vshll.u32 %v1371, 16
        %v1711 = vrot.slane %v1709, 5
        %v1712 = vsel %vm1376, %v1707, %v1711
        %v1714 = vshrl.u32 %v1354, 16
        %v1716 = vrot.slane %v1714, 4
        %v1717 = vshll.u32 %v1354, 16
        %v1719 = vrot.slane %v1717, 5
        %v1720 = vor.u32 %v1716, %v1719
        %v1721 = vrot.slane %v1720, 4
        %v1723 = vshll.u32 %v1355, 16
        %v1725 = vrot.slane %v1723, 5
        %v1726 = vsel %vm1376, %v1721, %v1725
        %v1727 = vshrl.u32 %v1355, 16
        %v1729 = vrot.slane %v1727, 4
        %v1730 = vor.u32 %v1729, %v1725
        %v1731 = vrot.slane %v1730, 4
        %v1733 = vshll.u32 %v1372, 16
        %v1735 = vrot.slane %v1733, 5
        %v1736 = vsel %vm1376, %v1731, %v1735
        %v1738 = vshrl.u32 %v1356, 16
        %v1740 = vrot.slane %v1738, 4
        %v1741 = vshll.u32 %v1356, 16
        %v1743 = vrot.slane %v1741, 5
        %v1744 = vor.u32 %v1740, %v1743
        %v1745 = vrot.slane %v1744, 4
        %v1747 = vshll.u32 %v1357, 16
        %v1749 = vrot.slane %v1747, 5
        %v1750 = vsel %vm1376, %v1745, %v1749
        %v1751 = vshrl.u32 %v1357, 16
        %v1753 = vrot.slane %v1751, 4
        %v1754 = vor.u32 %v1753, %v1749
        %v1755 = vrot.slane %v1754, 4
        %v1757 = vshll.u32 %v1373, 16
        %v1759 = vrot.slane %v1757, 5
        %v1760 = vsel %vm1376, %v1755, %v1759
        %v1761 = vld [vmem:[#allocation2] sm:$0xe]
        %v1762 = vld [vmem:[#allocation2 + $0xc] sm:$0xe]
        %v1763 = vld [vmem:[#allocation2 + $0x18] sm:$0xe]
        %v1764 = vld [vmem:[#allocation2 + $0x24] sm:$0xe]
        %v1765 = vld [vmem:[#allocation2 + $0x30] sm:$0xe]
        %v1766 = vld [vmem:[#allocation2 + $0x3c] sm:$0xe]
        %v1767 = vld [vmem:[#allocation2 + $0x48] sm:$0xe]
        %v1768 = vld [vmem:[#allocation2 + $0x54] sm:$0xe]
        %v1769 = vld [vmem:[#allocation2 + $0x60] sm:$0xe]
        %v1770 = vld [vmem:[#allocation2 + $0x6c] sm:$0xe]
        %v1771 = vld [vmem:[#allocation2 + $0x78] sm:$0xe]
        %v1772 = vld [vmem:[#allocation2 + $0x84] sm:$0xe]
        %v1773 = vld [vmem:[#allocation2 + $0x90] sm:$0xe]
        %v1774 = vld [vmem:[#allocation2 + $0x9c] sm:$0xe]
        %v1775 = vld [vmem:[#allocation2 + $0xa8] sm:$0xe]
        %v1776 = vld [vmem:[#allocation2 + $0xb4] sm:$0xe]
        %vm1825 = vcmask 1042432
        %vm1826 = vcmask 1046532
        %vm1827 = vmor %vm1825, %vm1826
        %v1828 = vrot.slane %v1761, 5
        %v1829 = vrot.slane %v1828, 4
        %v1830 = vrot.slane %v1327, 5
        %v1831 = vsel %vm1827, %v1829, %v1830
        %v1832 = vrot.slane %v1830, 4
        %v1833 = vrot.slane %v1358, 5
        %v1834 = vsel %vm1827, %v1832, %v1833
        %v1835 = vrot.slane %v1762, 5
        %v1836 = vrot.slane %v1835, 4
        %v1837 = vrot.slane %v1329, 5
        %v1838 = vsel %vm1827, %v1836, %v1837
        %v1839 = vrot.slane %v1837, 4
        %v1840 = vrot.slane %v1359, 5
        %v1841 = vsel %vm1827, %v1839, %v1840
        %v1842 = vrot.slane %v1763, 5
        %v1843 = vrot.slane %v1842, 4
        %v1844 = vrot.slane %v1331, 5
        %v1845 = vsel %vm1827, %v1843, %v1844
        %v1846 = vrot.slane %v1844, 4
        %v1847 = vrot.slane %v1360, 5
        %v1848 = vsel %vm1827, %v1846, %v1847
        %v1849 = vrot.slane %v1764, 5
        %v1850 = vrot.slane %v1849, 4
        %v1851 = vrot.slane %v1333, 5
        %v1852 = vsel %vm1827, %v1850, %v1851
        %v1853 = vrot.slane %v1851, 4
        %v1854 = vrot.slane %v1361, 5
        %v1855 = vsel %vm1827, %v1853, %v1854
        %v1856 = vrot.slane %v1765, 5
        %v1857 = vrot.slane %v1856, 4
        %v1858 = vrot.slane %v1335, 5
        %v1859 = vsel %vm1827, %v1857, %v1858
        %v1860 = vrot.slane %v1858, 4
        %v1861 = vrot.slane %v1362, 5
        %v1862 = vsel %vm1827, %v1860, %v1861
        %v1863 = vrot.slane %v1766, 5
        %v1864 = vrot.slane %v1863, 4
        %v1865 = vrot.slane %v1337, 5
        %v1866 = vsel %vm1827, %v1864, %v1865
        %v1867 = vrot.slane %v1865, 4
        %v1868 = vrot.slane %v1363, 5
        %v1869 = vsel %vm1827, %v1867, %v1868
        %v1870 = vrot.slane %v1767, 5
        %v1871 = vrot.slane %v1870, 4
        %v1872 = vrot.slane %v1339, 5
        %v1873 = vsel %vm1827, %v1871, %v1872
        %v1874 = vrot.slane %v1872, 4
        %v1875 = vrot.slane %v1364, 5
        %v1876 = vsel %vm1827, %v1874, %v1875
        %v1877 = vrot.slane %v1768, 5
        %v1878 = vrot.slane %v1877, 4
        %v1879 = vrot.slane %v1341, 5
        %v1880 = vsel %vm1827, %v1878, %v1879
        %v1881 = vrot.slane %v1879, 4
        %v1882 = vrot.slane %v1365, 5
        %v1883 = vsel %vm1827, %v1881, %v1882
        %v1884 = vrot.slane %v1769, 5
        %v1885 = vrot.slane %v1884, 4
        %v1886 = vrot.slane %v1343, 5
        %v1887 = vsel %vm1827, %v1885, %v1886
        %v1888 = vrot.slane %v1886, 4
        %v1889 = vrot.slane %v1366, 5
        %v1890 = vsel %vm1827, %v1888, %v1889
        %v1891 = vrot.slane %v1770, 5
        %v1892 = vrot.slane %v1891, 4
        %v1893 = vrot.slane %v1345, 5
        %v1894 = vsel %vm1827, %v1892, %v1893
        %v1895 = vrot.slane %v1893, 4
        %v1896 = vrot.slane %v1367, 5
        %v1897 = vsel %vm1827, %v1895, %v1896
        %v1898 = vrot.slane %v1771, 5
        %v1899 = vrot.slane %v1898, 4
        %v1900 = vrot.slane %v1347, 5
        %v1901 = vsel %vm1827, %v1899, %v1900
        %v1902 = vrot.slane %v1900, 4
        %v1903 = vrot.slane %v1368, 5
        %v1904 = vsel %vm1827, %v1902, %v1903
        %v1905 = vrot.slane %v1772, 5
        %v1906 = vrot.slane %v1905, 4
        %v1907 = vrot.slane %v1349, 5
        %v1908 = vsel %vm1827, %v1906, %v1907
        %v1909 = vrot.slane %v1907, 4
        %v1910 = vrot.slane %v1369, 5
        %v1911 = vsel %vm1827, %v1909, %v1910
        %v1912 = vrot.slane %v1773, 5
        %v1913 = vrot.slane %v1912, 4
        %v1914 = vrot.slane %v1351, 5
        %v1915 = vsel %vm1827, %v1913, %v1914
        %v1916 = vrot.slane %v1914, 4
        %v1917 = vrot.slane %v1370, 5
        %v1918 = vsel %vm1827, %v1916, %v1917
        %v1919 = vrot.slane %v1774, 5
        %v1920 = vrot.slane %v1919, 4
        %v1921 = vrot.slane %v1353, 5
        %v1922 = vsel %vm1827, %v1920, %v1921
        %v1923 = vrot.slane %v1921, 4
        %v1924 = vrot.slane %v1371, 5
        %v1925 = vsel %vm1827, %v1923, %v1924
        %v1926 = vrot.slane %v1775, 5
        %v1927 = vrot.slane %v1926, 4
        %v1928 = vrot.slane %v1355, 5
        %v1929 = vsel %vm1827, %v1927, %v1928
        %v1930 = vrot.slane %v1928, 4
        %v1931 = vrot.slane %v1372, 5
        %v1932 = vsel %vm1827, %v1930, %v1931
        %v1933 = vrot.slane %v1776, 5
        %v1934 = vrot.slane %v1933, 4
        %v1935 = vrot.slane %v1357, 5
        %v1936 = vsel %vm1827, %v1934, %v1935
        %v1937 = vrot.slane %v1935, 4
        %v1938 = vrot.slane %v1373, 5
        %v1939 = vsel %vm1827, %v1937, %v1938
        %v1940 = vld [vmem:[%s1211] sm:$0xf]
        %v1941 = vld [vmem:[%s1211 + $0x4] sm:$0xf]
        %v1942 = vld [vmem:[%s1211 + $0xc] sm:$0xf]
        %v1943 = vld [vmem:[%s1211 + $0x10] sm:$0xf]
        %v1944 = vld [vmem:[%s1211 + $0x18] sm:$0xf]
        %v1945 = vld [vmem:[%s1211 + $0x1c] sm:$0xf]
        %v1946 = vld [vmem:[%s1211 + $0x24] sm:$0xf]
        %v1947 = vld [vmem:[%s1211 + $0x28] sm:$0xf]
        %v1948 = vld [vmem:[%s1211 + $0x30] sm:$0xf]
        %v1949 = vld [vmem:[%s1211 + $0x34] sm:$0xf]
        %v1950 = vld [vmem:[%s1211 + $0x3c] sm:$0xf]
        %v1951 = vld [vmem:[%s1211 + $0x40] sm:$0xf]
        %v1952 = vld [vmem:[%s1211 + $0x48] sm:$0xf]
        %v1953 = vld [vmem:[%s1211 + $0x4c] sm:$0xf]
        %v1954 = vld [vmem:[%s1211 + $0x54] sm:$0xf]
        %v1955 = vld [vmem:[%s1211 + $0x58] sm:$0xf]
        %v1956 = vld [vmem:[%s1211 + $0x60] sm:$0xf]
        %v1957 = vld [vmem:[%s1211 + $0x64] sm:$0xf]
        %v1958 = vld [vmem:[%s1211 + $0x6c] sm:$0xf]
        %v1959 = vld [vmem:[%s1211 + $0x70] sm:$0xf]
        %v1960 = vld [vmem:[%s1211 + $0x78] sm:$0xf]
        %v1961 = vld [vmem:[%s1211 + $0x7c] sm:$0xf]
        %v1962 = vld [vmem:[%s1211 + $0x84] sm:$0xf]
        %v1963 = vld [vmem:[%s1211 + $0x88] sm:$0xf]
        %v1964 = vld [vmem:[%s1211 + $0x90] sm:$0xf]
        %v1965 = vld [vmem:[%s1211 + $0x94] sm:$0xf]
        %v1966 = vld [vmem:[%s1211 + $0x9c] sm:$0xf]
        %v1967 = vld [vmem:[%s1211 + $0xa0] sm:$0xf]
        %v1968 = vld [vmem:[%s1211 + $0xa8] sm:$0xf]
        %v1969 = vld [vmem:[%s1211 + $0xac] sm:$0xf]
        %v1970 = vld [vmem:[%s1211 + $0xb4] sm:$0xf]
        %v1971 = vld [vmem:[%s1211 + $0xb8] sm:$0xf]
        %v1972 = vld [vmem:[%s1211 + $0x8] sm:$0x1]
        %v1973 = vld [vmem:[%s1211 + $0x14] sm:$0x1]
        %v1974 = vld [vmem:[%s1211 + $0x20] sm:$0x1]
        %v1975 = vld [vmem:[%s1211 + $0x2c] sm:$0x1]
        %v1976 = vld [vmem:[%s1211 + $0x38] sm:$0x1]
        %v1977 = vld [vmem:[%s1211 + $0x44] sm:$0x1]
        %v1978 = vld [vmem:[%s1211 + $0x50] sm:$0x1]
        %v1979 = vld [vmem:[%s1211 + $0x5c] sm:$0x1]
        %v1980 = vld [vmem:[%s1211 + $0x68] sm:$0x1]
        %v1981 = vld [vmem:[%s1211 + $0x74] sm:$0x1]
        %v1982 = vld [vmem:[%s1211 + $0x80] sm:$0x1]
        %v1983 = vld [vmem:[%s1211 + $0x8c] sm:$0x1]
        %v1984 = vld [vmem:[%s1211 + $0x98] sm:$0x1]
        %v1985 = vld [vmem:[%s1211 + $0xa4] sm:$0x1]
        %v1986 = vld [vmem:[%s1211 + $0xb0] sm:$0x1]
        %v1987 = vld [vmem:[%s1211 + $0xbc] sm:$0x1]
        %v1989 = vshrl.u32 %v1940, 16
        %v1991 = vrot.slane %v1989, 4
        %v1992 = vshll.u32 %v1940, 16
        %v1994 = vrot.slane %v1992, 5
        %v1995 = vor.u32 %v1991, %v1994
        %v1996 = vrot.slane %v1995, 4
        %v1998 = vshll.u32 %v1941, 16
        %v2000 = vrot.slane %v1998, 5
        %v2001 = vsel %vm1376, %v1996, %v2000
        %v2002 = vshrl.u32 %v1941, 16
        %v2004 = vrot.slane %v2002, 4
        %v2005 = vor.u32 %v2004, %v2000
        %v2006 = vrot.slane %v2005, 4
        %v2008 = vshll.u32 %v1972, 16
        %v2010 = vrot.slane %v2008, 5
        %v2011 = vsel %vm1376, %v2006, %v2010
        %v2013 = vshrl.u32 %v1942, 16
        %v2015 = vrot.slane %v2013, 4
        %v2016 = vshll.u32 %v1942, 16
        %v2018 = vrot.slane %v2016, 5
        %v2019 = vor.u32 %v2015, %v2018
        %v2020 = vrot.slane %v2019, 4
        %v2022 = vshll.u32 %v1943, 16
        %v2024 = vrot.slane %v2022, 5
        %v2025 = vsel %vm1376, %v2020, %v2024
        %v2026 = vshrl.u32 %v1943, 16
        %v2028 = vrot.slane %v2026, 4
        %v2029 = vor.u32 %v2028, %v2024
        %v2030 = vrot.slane %v2029, 4
        %v2032 = vshll.u32 %v1973, 16
        %v2034 = vrot.slane %v2032, 5
        %v2035 = vsel %vm1376, %v2030, %v2034
        %v2037 = vshrl.u32 %v1944, 16
        %v2039 = vrot.slane %v2037, 4
        %v2040 = vshll.u32 %v1944, 16
        %v2042 = vrot.slane %v2040, 5
        %v2043 = vor.u32 %v2039, %v2042
        %v2044 = vrot.slane %v2043, 4
        %v2046 = vshll.u32 %v1945, 16
        %v2048 = vrot.slane %v2046, 5
        %v2049 = vsel %vm1376, %v2044, %v2048
        %v2050 = vshrl.u32 %v1945, 16
        %v2052 = vrot.slane %v2050, 4
        %v2053 = vor.u32 %v2052, %v2048
        %v2054 = vrot.slane %v2053, 4
        %v2056 = vshll.u32 %v1974, 16
        %v2058 = vrot.slane %v2056, 5
        %v2059 = vsel %vm1376, %v2054, %v2058
        %v2061 = vshrl.u32 %v1946, 16
        %v2063 = vrot.slane %v2061, 4
        %v2064 = vshll.u32 %v1946, 16
        %v2066 = vrot.slane %v2064, 5
        %v2067 = vor.u32 %v2063, %v2066
        %v2068 = vrot.slane %v2067, 4
        %v2070 = vshll.u32 %v1947, 16
        %v2072 = vrot.slane %v2070, 5
        %v2073 = vsel %vm1376, %v2068, %v2072
        %v2074 = vshrl.u32 %v1947, 16
        %v2076 = vrot.slane %v2074, 4
        %v2077 = vor.u32 %v2076, %v2072
        %v2078 = vrot.slane %v2077, 4
        %v2080 = vshll.u32 %v1975, 16
        %v2082 = vrot.slane %v2080, 5
        %v2083 = vsel %vm1376, %v2078, %v2082
        %v2085 = vshrl.u32 %v1948, 16
        %v2087 = vrot.slane %v2085, 4
        %v2088 = vshll.u32 %v1948, 16
        %v2090 = vrot.slane %v2088, 5
        %v2091 = vor.u32 %v2087, %v2090
        %v2092 = vrot.slane %v2091, 4
        %v2094 = vshll.u32 %v1949, 16
        %v2096 = vrot.slane %v2094, 5
        %v2097 = vsel %vm1376, %v2092, %v2096
        %v2098 = vshrl.u32 %v1949, 16
        %v2100 = vrot.slane %v2098, 4
        %v2101 = vor.u32 %v2100, %v2096
        %v2102 = vrot.slane %v2101, 4
        %v2104 = vshll.u32 %v1976, 16
        %v2106 = vrot.slane %v2104, 5
        %v2107 = vsel %vm1376, %v2102, %v2106
        %v2109 = vshrl.u32 %v1950, 16
        %v2111 = vrot.slane %v2109, 4
        %v2112 = vshll.u32 %v1950, 16
        %v2114 = vrot.slane %v2112, 5
        %v2115 = vor.u32 %v2111, %v2114
        %v2116 = vrot.slane %v2115, 4
        %v2118 = vshll.u32 %v1951, 16
        %v2120 = vrot.slane %v2118, 5
        %v2121 = vsel %vm1376, %v2116, %v2120
        %v2122 = vshrl.u32 %v1951, 16
        %v2124 = vrot.slane %v2122, 4
        %v2125 = vor.u32 %v2124, %v2120
        %v2126 = vrot.slane %v2125, 4
        %v2128 = vshll.u32 %v1977, 16
        %v2130 = vrot.slane %v2128, 5
        %v2131 = vsel %vm1376, %v2126, %v2130
        %v2133 = vshrl.u32 %v1952, 16
        %v2135 = vrot.slane %v2133, 4
        %v2136 = vshll.u32 %v1952, 16
        %v2138 = vrot.slane %v2136, 5
        %v2139 = vor.u32 %v2135, %v2138
        %v2140 = vrot.slane %v2139, 4
        %v2142 = vshll.u32 %v1953, 16
        %v2144 = vrot.slane %v2142, 5
        %v2145 = vsel %vm1376, %v2140, %v2144
        %v2146 = vshrl.u32 %v1953, 16
        %v2148 = vrot.slane %v2146, 4
        %v2149 = vor.u32 %v2148, %v2144
        %v2150 = vrot.slane %v2149, 4
        %v2152 = vshll.u32 %v1978, 16
        %v2154 = vrot.slane %v2152, 5
        %v2155 = vsel %vm1376, %v2150, %v2154
        %v2157 = vshrl.u32 %v1954, 16
        %v2159 = vrot.slane %v2157, 4
        %v2160 = vshll.u32 %v1954, 16
        %v2162 = vrot.slane %v2160, 5
        %v2163 = vor.u32 %v2159, %v2162
        %v2164 = vrot.slane %v2163, 4
        %v2166 = vshll.u32 %v1955, 16
        %v2168 = vrot.slane %v2166, 5
        %v2169 = vsel %vm1376, %v2164, %v2168
        %v2170 = vshrl.u32 %v1955, 16
        %v2172 = vrot.slane %v2170, 4
        %v2173 = vor.u32 %v2172, %v2168
        %v2174 = vrot.slane %v2173, 4
        %v2176 = vshll.u32 %v1979, 16
        %v2178 = vrot.slane %v2176, 5
        %v2179 = vsel %vm1376, %v2174, %v2178
        %v2181 = vshrl.u32 %v1956, 16
        %v2183 = vrot.slane %v2181, 4
        %v2184 = vshll.u32 %v1956, 16
        %v2186 = vrot.slane %v2184, 5
        %v2187 = vor.u32 %v2183, %v2186
        %v2188 = vrot.slane %v2187, 4
        %v2190 = vshll.u32 %v1957, 16
        %v2192 = vrot.slane %v2190, 5
        %v2193 = vsel %vm1376, %v2188, %v2192
        %v2194 = vshrl.u32 %v1957, 16
        %v2196 = vrot.slane %v2194, 4
        %v2197 = vor.u32 %v2196, %v2192
        %v2198 = vrot.slane %v2197, 4
        %v2200 = vshll.u32 %v1980, 16
        %v2202 = vrot.slane %v2200, 5
        %v2203 = vsel %vm1376, %v2198, %v2202
        %v2205 = vshrl.u32 %v1958, 16
        %v2207 = vrot.slane %v2205, 4
        %v2208 = vshll.u32 %v1958, 16
        %v2210 = vrot.slane %v2208, 5
        %v2211 = vor.u32 %v2207, %v2210
        %v2212 = vrot.slane %v2211, 4
        %v2214 = vshll.u32 %v1959, 16
        %v2216 = vrot.slane %v2214, 5
        %v2217 = vsel %vm1376, %v2212, %v2216
        %v2218 = vshrl.u32 %v1959, 16
        %v2220 = vrot.slane %v2218, 4
        %v2221 = vor.u32 %v2220, %v2216
        %v2222 = vrot.slane %v2221, 4
        %v2224 = vshll.u32 %v1981, 16
        %v2226 = vrot.slane %v2224, 5
        %v2227 = vsel %vm1376, %v2222, %v2226
        %v2229 = vshrl.u32 %v1960, 16
        %v2231 = vrot.slane %v2229, 4
        %v2232 = vshll.u32 %v1960, 16
        %v2234 = vrot.slane %v2232, 5
        %v2235 = vor.u32 %v2231, %v2234
        %v2236 = vrot.slane %v2235, 4
        %v2238 = vshll.u32 %v1961, 16
        %v2240 = vrot.slane %v2238, 5
        %v2241 = vsel %vm1376, %v2236, %v2240
        %v2242 = vshrl.u32 %v1961, 16
        %v2244 = vrot.slane %v2242, 4
        %v2245 = vor.u32 %v2244, %v2240
        %v2246 = vrot.slane %v2245, 4
        %v2248 = vshll.u32 %v1982, 16
        %v2250 = vrot.slane %v2248, 5
        %v2251 = vsel %vm1376, %v2246, %v2250
        %v2253 = vshrl.u32 %v1962, 16
        %v2255 = vrot.slane %v2253, 4
        %v2256 = vshll.u32 %v1962, 16
        %v2258 = vrot.slane %v2256, 5
        %v2259 = vor.u32 %v2255, %v2258
        %v2260 = vrot.slane %v2259, 4
        %v2262 = vshll.u32 %v1963, 16
        %v2264 = vrot.slane %v2262, 5
        %v2265 = vsel %vm1376, %v2260, %v2264
        %v2266 = vshrl.u32 %v1963, 16
        %v2268 = vrot.slane %v2266, 4
        %v2269 = vor.u32 %v2268, %v2264
        %v2270 = vrot.slane %v2269, 4
        %v2272 = vshll.u32 %v1983, 16
        %v2274 = vrot.slane %v2272, 5
        %v2275 = vsel %vm1376, %v2270, %v2274
        %v2277 = vshrl.u32 %v1964, 16
        %v2279 = vrot.slane %v2277, 4
        %v2280 = vshll.u32 %v1964, 16
        %v2282 = vrot.slane %v2280, 5
        %v2283 = vor.u32 %v2279, %v2282
        %v2284 = vrot.slane %v2283, 4
        %v2286 = vshll.u32 %v1965, 16
        %v2288 = vrot.slane %v2286, 5
        %v2289 = vsel %vm1376, %v2284, %v2288
        %v2290 = vshrl.u32 %v1965, 16
        %v2292 = vrot.slane %v2290, 4
        %v2293 = vor.u32 %v2292, %v2288
        %v2294 = vrot.slane %v2293, 4
        %v2296 = vshll.u32 %v1984, 16
        %v2298 = vrot.slane %v2296, 5
        %v2299 = vsel %vm1376, %v2294, %v2298
        %v2301 = vshrl.u32 %v1966, 16
        %v2303 = vrot.slane %v2301, 4
        %v2304 = vshll.u32 %v1966, 16
        %v2306 = vrot.slane %v2304, 5
        %v2307 = vor.u32 %v2303, %v2306
        %v2308 = vrot.slane %v2307, 4
        %v2310 = vshll.u32 %v1967, 16
        %v2312 = vrot.slane %v2310, 5
        %v2313 = vsel %vm1376, %v2308, %v2312
        %v2314 = vshrl.u32 %v1967, 16
        %v2316 = vrot.slane %v2314, 4
        %v2317 = vor.u32 %v2316, %v2312
        %v2318 = vrot.slane %v2317, 4
        %v2320 = vshll.u32 %v1985, 16
        %v2322 = vrot.slane %v2320, 5
        %v2323 = vsel %vm1376, %v2318, %v2322
        %v2325 = vshrl.u32 %v1968, 16
        %v2327 = vrot.slane %v2325, 4
        %v2328 = vshll.u32 %v1968, 16
        %v2330 = vrot.slane %v2328, 5
        %v2331 = vor.u32 %v2327, %v2330
        %v2332 = vrot.slane %v2331, 4
        %v2334 = vshll.u32 %v1969, 16
        %v2336 = vrot.slane %v2334, 5
        %v2337 = vsel %vm1376, %v2332, %v2336
        %v2338 = vshrl.u32 %v1969, 16
        %v2340 = vrot.slane %v2338, 4
        %v2341 = vor.u32 %v2340, %v2336
        %v2342 = vrot.slane %v2341, 4
        %v2344 = vshll.u32 %v1986, 16
        %v2346 = vrot.slane %v2344, 5
        %v2347 = vsel %vm1376, %v2342, %v2346
        %v2349 = vshrl.u32 %v1970, 16
        %v2351 = vrot.slane %v2349, 4
        %v2352 = vshll.u32 %v1970, 16
        %v2354 = vrot.slane %v2352, 5
        %v2355 = vor.u32 %v2351, %v2354
        %v2356 = vrot.slane %v2355, 4
        %v2358 = vshll.u32 %v1971, 16
        %v2360 = vrot.slane %v2358, 5
        %v2361 = vsel %vm1376, %v2356, %v2360
        %v2362 = vshrl.u32 %v1971, 16
        %v2364 = vrot.slane %v2362, 4
        %v2365 = vor.u32 %v2364, %v2360
        %v2366 = vrot.slane %v2365, 4
        %v2368 = vshll.u32 %v1987, 16
        %v2370 = vrot.slane %v2368, 5
        %v2371 = vsel %vm1376, %v2366, %v2370
        %v2372 = vld [vmem:[%s1211] sm:$0xe]
        %v2373 = vld [vmem:[%s1211 + $0xc] sm:$0xe]
        %v2374 = vld [vmem:[%s1211 + $0x18] sm:$0xe]
        %v2375 = vld [vmem:[%s1211 + $0x24] sm:$0xe]
        %v2376 = vld [vmem:[%s1211 + $0x30] sm:$0xe]
        %v2377 = vld [vmem:[%s1211 + $0x3c] sm:$0xe]
        %v2378 = vld [vmem:[%s1211 + $0x48] sm:$0xe]
        %v2379 = vld [vmem:[%s1211 + $0x54] sm:$0xe]
        %v2380 = vld [vmem:[%s1211 + $0x60] sm:$0xe]
        %v2381 = vld [vmem:[%s1211 + $0x6c] sm:$0xe]
        %v2382 = vld [vmem:[%s1211 + $0x78] sm:$0xe]
        %v2383 = vld [vmem:[%s1211 + $0x84] sm:$0xe]
        %v2384 = vld [vmem:[%s1211 + $0x90] sm:$0xe]
        %v2385 = vld [vmem:[%s1211 + $0x9c] sm:$0xe]
        %v2386 = vld [vmem:[%s1211 + $0xa8] sm:$0xe]
        %v2387 = vld [vmem:[%s1211 + $0xb4] sm:$0xe]
        %v2436 = vrot.slane %v2372, 5
        %v2437 = vrot.slane %v2436, 4
        %v2438 = vrot.slane %v1941, 5
        %v2439 = vsel %vm1827, %v2437, %v2438
        %v2440 = vrot.slane %v2438, 4
        %v2441 = vrot.slane %v1972, 5
        %v2442 = vsel %vm1827, %v2440, %v2441
        %v2443 = vrot.slane %v2373, 5
        %v2444 = vrot.slane %v2443, 4
        %v2445 = vrot.slane %v1943, 5
        %v2446 = vsel %vm1827, %v2444, %v2445
        %v2447 = vrot.slane %v2445, 4
        %v2448 = vrot.slane %v1973, 5
        %v2449 = vsel %vm1827, %v2447, %v2448
        %v2450 = vrot.slane %v2374, 5
        %v2451 = vrot.slane %v2450, 4
        %v2452 = vrot.slane %v1945, 5
        %v2453 = vsel %vm1827, %v2451, %v2452
        %v2454 = vrot.slane %v2452, 4
        %v2455 = vrot.slane %v1974, 5
        %v2456 = vsel %vm1827, %v2454, %v2455
        %v2457 = vrot.slane %v2375, 5
        %v2458 = vrot.slane %v2457, 4
        %v2459 = vrot.slane %v1947, 5
        %v2460 = vsel %vm1827, %v2458, %v2459
        %v2461 = vrot.slane %v2459, 4
        %v2462 = vrot.slane %v1975, 5
        %v2463 = vsel %vm1827, %v2461, %v2462
        %v2464 = vrot.slane %v2376, 5
        %v2465 = vrot.slane %v2464, 4
        %v2466 = vrot.slane %v1949, 5
        %v2467 = vsel %vm1827, %v2465, %v2466
        %v2468 = vrot.slane %v2466, 4
        %v2469 = vrot.slane %v1976, 5
        %v2470 = vsel %vm1827, %v2468, %v2469
        %v2471 = vrot.slane %v2377, 5
        %v2472 = vrot.slane %v2471, 4
        %v2473 = vrot.slane %v1951, 5
        %v2474 = vsel %vm1827, %v2472, %v2473
        %v2475 = vrot.slane %v2473, 4
        %v2476 = vrot.slane %v1977, 5
        %v2477 = vsel %vm1827, %v2475, %v2476
        %v2478 = vrot.slane %v2378, 5
        %v2479 = vrot.slane %v2478, 4
        %v2480 = vrot.slane %v1953, 5
        %v2481 = vsel %vm1827, %v2479, %v2480
        %v2482 = vrot.slane %v2480, 4
        %v2483 = vrot.slane %v1978, 5
        %v2484 = vsel %vm1827, %v2482, %v2483
        %v2485 = vrot.slane %v2379, 5
        %v2486 = vrot.slane %v2485, 4
        %v2487 = vrot.slane %v1955, 5
        %v2488 = vsel %vm1827, %v2486, %v2487
        %v2489 = vrot.slane %v2487, 4
        %v2490 = vrot.slane %v1979, 5
        %v2491 = vsel %vm1827, %v2489, %v2490
        %v2492 = vrot.slane %v2380, 5
        %v2493 = vrot.slane %v2492, 4
        %v2494 = vrot.slane %v1957, 5
        %v2495 = vsel %vm1827, %v2493, %v2494
        %v2496 = vrot.slane %v2494, 4
        %v2497 = vrot.slane %v1980, 5
        %v2498 = vsel %vm1827, %v2496, %v2497
        %v2499 = vrot.slane %v2381, 5
        %v2500 = vrot.slane %v2499, 4
        %v2501 = vrot.slane %v1959, 5
        %v2502 = vsel %vm1827, %v2500, %v2501
        %v2503 = vrot.slane %v2501, 4
        %v2504 = vrot.slane %v1981, 5
        %v2505 = vsel %vm1827, %v2503, %v2504
        %v2506 = vrot.slane %v2382, 5
        %v2507 = vrot.slane %v2506, 4
        %v2508 = vrot.slane %v1961, 5
        %v2509 = vsel %vm1827, %v2507, %v2508
        %v2510 = vrot.slane %v2508, 4
        %v2511 = vrot.slane %v1982, 5
        %v2512 = vsel %vm1827, %v2510, %v2511
        %v2513 = vrot.slane %v2383, 5
        %v2514 = vrot.slane %v2513, 4
        %v2515 = vrot.slane %v1963, 5
        %v2516 = vsel %vm1827, %v2514, %v2515
        %v2517 = vrot.slane %v2515, 4
        %v2518 = vrot.slane %v1983, 5
        %v2519 = vsel %vm1827, %v2517, %v2518
        %v2520 = vrot.slane %v2384, 5
        %v2521 = vrot.slane %v2520, 4
        %v2522 = vrot.slane %v1965, 5
        %v2523 = vsel %vm1827, %v2521, %v2522
        %v2524 = vrot.slane %v2522, 4
        %v2525 = vrot.slane %v1984, 5
        %v2526 = vsel %vm1827, %v2524, %v2525
        %v2527 = vrot.slane %v2385, 5
        %v2528 = vrot.slane %v2527, 4
        %v2529 = vrot.slane %v1967, 5
        %v2530 = vsel %vm1827, %v2528, %v2529
        %v2531 = vrot.slane %v2529, 4
        %v2532 = vrot.slane %v1985, 5
        %v2533 = vsel %vm1827, %v2531, %v2532
        %v2534 = vrot.slane %v2386, 5
        %v2535 = vrot.slane %v2534, 4
        %v2536 = vrot.slane %v1969, 5
        %v2537 = vsel %vm1827, %v2535, %v2536
        %v2538 = vrot.slane %v2536, 4
        %v2539 = vrot.slane %v1986, 5
        %v2540 = vsel %vm1827, %v2538, %v2539
        %v2541 = vrot.slane %v2387, 5
        %v2542 = vrot.slane %v2541, 4
        %v2543 = vrot.slane %v1971, 5
        %v2544 = vsel %vm1827, %v2542, %v2543
        %v2545 = vrot.slane %v2543, 4
        %v2546 = vrot.slane %v1987, 5
        %v2547 = vsel %vm1827, %v2545, %v2546
        %s2548 = scalar_lea.vmem [#allocation2], 24
        %v2549 = vld [vmem:[%s2548] sm:$0xf]
        %v2550 = vld [vmem:[%s2548 + $0x4] sm:$0xf]
        %v2551 = vld [vmem:[%s2548 + $0xc] sm:$0xf]
        %v2552 = vld [vmem:[%s2548 + $0x10] sm:$0xf]
        %v2553 = vld [vmem:[%s2548 + $0x18] sm:$0xf]
        %v2554 = vld [vmem:[%s2548 + $0x1c] sm:$0xf]
        %v2555 = vld [vmem:[%s2548 + $0x24] sm:$0xf]
        %v2556 = vld [vmem:[%s2548 + $0x28] sm:$0xf]
        %v2557 = vld [vmem:[%s2548 + $0x30] sm:$0xf]
        %v2558 = vld [vmem:[%s2548 + $0x34] sm:$0xf]
        %v2559 = vld [vmem:[%s2548 + $0x3c] sm:$0xf]
        %v2560 = vld [vmem:[%s2548 + $0x40] sm:$0xf]
        %v2561 = vld [vmem:[%s2548 + $0x48] sm:$0xf]
        %v2562 = vld [vmem:[%s2548 + $0x4c] sm:$0xf]
        %v2563 = vld [vmem:[%s2548 + $0x54] sm:$0xf]
        %v2564 = vld [vmem:[%s2548 + $0x58] sm:$0xf]
        %v2565 = vld [vmem:[%s2548 + $0x60] sm:$0xf]
        %v2566 = vld [vmem:[%s2548 + $0x64] sm:$0xf]
        %v2567 = vld [vmem:[%s2548 + $0x6c] sm:$0xf]
        %v2568 = vld [vmem:[%s2548 + $0x70] sm:$0xf]
        %v2569 = vld [vmem:[%s2548 + $0x78] sm:$0xf]
        %v2570 = vld [vmem:[%s2548 + $0x7c] sm:$0xf]
        %v2571 = vld [vmem:[%s2548 + $0x84] sm:$0xf]
        %v2572 = vld [vmem:[%s2548 + $0x88] sm:$0xf]
        %v2573 = vld [vmem:[%s2548 + $0x90] sm:$0xf]
        %v2574 = vld [vmem:[%s2548 + $0x94] sm:$0xf]
        %v2575 = vld [vmem:[%s2548 + $0x9c] sm:$0xf]
        %v2576 = vld [vmem:[%s2548 + $0xa0] sm:$0xf]
        %v2577 = vld [vmem:[%s2548 + $0xa8] sm:$0xf]
        %v2578 = vld [vmem:[%s2548 + $0xac] sm:$0xf]
        %v2579 = vld [vmem:[%s2548 + $0xb4] sm:$0xf]
        %v2580 = vld [vmem:[%s2548 + $0xb8] sm:$0xf]
        %v2581 = vld [vmem:[%s2548 + $0x8] sm:$0x1]
        %v2582 = vld [vmem:[%s2548 + $0x14] sm:$0x1]
        %v2583 = vld [vmem:[%s2548 + $0x20] sm:$0x1]
        %v2584 = vld [vmem:[%s2548 + $0x2c] sm:$0x1]
        %v2585 = vld [vmem:[%s2548 + $0x38] sm:$0x1]
        %v2586 = vld [vmem:[%s2548 + $0x44] sm:$0x1]
        %v2587 = vld [vmem:[%s2548 + $0x50] sm:$0x1]
        %v2588 = vld [vmem:[%s2548 + $0x5c] sm:$0x1]
        %v2589 = vld [vmem:[%s2548 + $0x68] sm:$0x1]
        %v2590 = vld [vmem:[%s2548 + $0x74] sm:$0x1]
        %v2591 = vld [vmem:[%s2548 + $0x80] sm:$0x1]
        %v2592 = vld [vmem:[%s2548 + $0x8c] sm:$0x1]
        %v2593 = vld [vmem:[%s2548 + $0x98] sm:$0x1]
        %v2594 = vld [vmem:[%s2548 + $0xa4] sm:$0x1]
        %v2595 = vld [vmem:[%s2548 + $0xb0] sm:$0x1]
        %v2596 = vld [vmem:[%s2548 + $0xbc] sm:$0x1]
        %v2598 = vshrl.u32 %v2549, 16
        %v2600 = vrot.slane %v2598, 4
        %v2601 = vshll.u32 %v2549, 16
        %v2603 = vrot.slane %v2601, 5
        %v2604 = vor.u32 %v2600, %v2603
        %v2605 = vrot.slane %v2604, 4
        %v2607 = vshll.u32 %v2550, 16
        %v2609 = vrot.slane %v2607, 5
        %v2610 = vsel %vm1376, %v2605, %v2609
        %v2611 = vshrl.u32 %v2550, 16
        %v2613 = vrot.slane %v2611, 4
        %v2614 = vor.u32 %v2613, %v2609
        %v2615 = vrot.slane %v2614, 4
        %v2617 = vshll.u32 %v2581, 16
        %v2619 = vrot.slane %v2617, 5
        %v2620 = vsel %vm1376, %v2615, %v2619
        %v2622 = vshrl.u32 %v2551, 16
        %v2624 = vrot.slane %v2622, 4
        %v2625 = vshll.u32 %v2551, 16
        %v2627 = vrot.slane %v2625, 5
        %v2628 = vor.u32 %v2624, %v2627
        %v2629 = vrot.slane %v2628, 4
        %v2631 = vshll.u32 %v2552, 16
        %v2633 = vrot.slane %v2631, 5
        %v2634 = vsel %vm1376, %v2629, %v2633
        %v2635 = vshrl.u32 %v2552, 16
        %v2637 = vrot.slane %v2635, 4
        %v2638 = vor.u32 %v2637, %v2633
        %v2639 = vrot.slane %v2638, 4
        %v2641 = vshll.u32 %v2582, 16
        %v2643 = vrot.slane %v2641, 5
        %v2644 = vsel %vm1376, %v2639, %v2643
        %v2646 = vshrl.u32 %v2553, 16
        %v2648 = vrot.slane %v2646, 4
        %v2649 = vshll.u32 %v2553, 16
        %v2651 = vrot.slane %v2649, 5
        %v2652 = vor.u32 %v2648, %v2651
        %v2653 = vrot.slane %v2652, 4
        %v2655 = vshll.u32 %v2554, 16
        %v2657 = vrot.slane %v2655, 5
        %v2658 = vsel %vm1376, %v2653, %v2657
        %v2659 = vshrl.u32 %v2554, 16
        %v2661 = vrot.slane %v2659, 4
        %v2662 = vor.u32 %v2661, %v2657
        %v2663 = vrot.slane %v2662, 4
        %v2665 = vshll.u32 %v2583, 16
        %v2667 = vrot.slane %v2665, 5
        %v2668 = vsel %vm1376, %v2663, %v2667
        %v2670 = vshrl.u32 %v2555, 16
        %v2672 = vrot.slane %v2670, 4
        %v2673 = vshll.u32 %v2555, 16
        %v2675 = vrot.slane %v2673, 5
        %v2676 = vor.u32 %v2672, %v2675
        %v2677 = vrot.slane %v2676, 4
        %v2679 = vshll.u32 %v2556, 16
        %v2681 = vrot.slane %v2679, 5
        %v2682 = vsel %vm1376, %v2677, %v2681
        %v2683 = vshrl.u32 %v2556, 16
        %v2685 = vrot.slane %v2683, 4
        %v2686 = vor.u32 %v2685, %v2681
        %v2687 = vrot.slane %v2686, 4
        %v2689 = vshll.u32 %v2584, 16
        %v2691 = vrot.slane %v2689, 5
        %v2692 = vsel %vm1376, %v2687, %v2691
        %v2694 = vshrl.u32 %v2557, 16
        %v2696 = vrot.slane %v2694, 4
        %v2697 = vshll.u32 %v2557, 16
        %v2699 = vrot.slane %v2697, 5
        %v2700 = vor.u32 %v2696, %v2699
        %v2701 = vrot.slane %v2700, 4
        %v2703 = vshll.u32 %v2558, 16
        %v2705 = vrot.slane %v2703, 5
        %v2706 = vsel %vm1376, %v2701, %v2705
        %v2707 = vshrl.u32 %v2558, 16
        %v2709 = vrot.slane %v2707, 4
        %v2710 = vor.u32 %v2709, %v2705
        %v2711 = vrot.slane %v2710, 4
        %v2713 = vshll.u32 %v2585, 16
        %v2715 = vrot.slane %v2713, 5
        %v2716 = vsel %vm1376, %v2711, %v2715
        %v2718 = vshrl.u32 %v2559, 16
        %v2720 = vrot.slane %v2718, 4
        %v2721 = vshll.u32 %v2559, 16
        %v2723 = vrot.slane %v2721, 5
        %v2724 = vor.u32 %v2720, %v2723
        %v2725 = vrot.slane %v2724, 4
        %v2727 = vshll.u32 %v2560, 16
        %v2729 = vrot.slane %v2727, 5
        %v2730 = vsel %vm1376, %v2725, %v2729
        %v2731 = vshrl.u32 %v2560, 16
        %v2733 = vrot.slane %v2731, 4
        %v2734 = vor.u32 %v2733, %v2729
        %v2735 = vrot.slane %v2734, 4
        %v2737 = vshll.u32 %v2586, 16
        %v2739 = vrot.slane %v2737, 5
        %v2740 = vsel %vm1376, %v2735, %v2739
        %v2742 = vshrl.u32 %v2561, 16
        %v2744 = vrot.slane %v2742, 4
        %v2745 = vshll.u32 %v2561, 16
        %v2747 = vrot.slane %v2745, 5
        %v2748 = vor.u32 %v2744, %v2747
        %v2749 = vrot.slane %v2748, 4
        %v2751 = vshll.u32 %v2562, 16
        %v2753 = vrot.slane %v2751, 5
        %v2754 = vsel %vm1376, %v2749, %v2753
        %v2755 = vshrl.u32 %v2562, 16
        %v2757 = vrot.slane %v2755, 4
        %v2758 = vor.u32 %v2757, %v2753
        %v2759 = vrot.slane %v2758, 4
        %v2761 = vshll.u32 %v2587, 16
        %v2763 = vrot.slane %v2761, 5
        %v2764 = vsel %vm1376, %v2759, %v2763
        %v2766 = vshrl.u32 %v2563, 16
        %v2768 = vrot.slane %v2766, 4
        %v2769 = vshll.u32 %v2563, 16
        %v2771 = vrot.slane %v2769, 5
        %v2772 = vor.u32 %v2768, %v2771
        %v2773 = vrot.slane %v2772, 4
        %v2775 = vshll.u32 %v2564, 16
        %v2777 = vrot.slane %v2775, 5
        %v2778 = vsel %vm1376, %v2773, %v2777
        %v2779 = vshrl.u32 %v2564, 16
        %v2781 = vrot.slane %v2779, 4
        %v2782 = vor.u32 %v2781, %v2777
        %v2783 = vrot.slane %v2782, 4
        %v2785 = vshll.u32 %v2588, 16
        %v2787 = vrot.slane %v2785, 5
        %v2788 = vsel %vm1376, %v2783, %v2787
        %v2790 = vshrl.u32 %v2565, 16
        %v2792 = vrot.slane %v2790, 4
        %v2793 = vshll.u32 %v2565, 16
        %v2795 = vrot.slane %v2793, 5
        %v2796 = vor.u32 %v2792, %v2795
        %v2797 = vrot.slane %v2796, 4
        %v2799 = vshll.u32 %v2566, 16
        %v2801 = vrot.slane %v2799, 5
        %v2802 = vsel %vm1376, %v2797, %v2801
        %v2803 = vshrl.u32 %v2566, 16
        %v2805 = vrot.slane %v2803, 4
        %v2806 = vor.u32 %v2805, %v2801
        %v2807 = vrot.slane %v2806, 4
        %v2809 = vshll.u32 %v2589, 16
        %v2811 = vrot.slane %v2809, 5
        %v2812 = vsel %vm1376, %v2807, %v2811
        %v2814 = vshrl.u32 %v2567, 16
        %v2816 = vrot.slane %v2814, 4
        %v2817 = vshll.u32 %v2567, 16
        %v2819 = vrot.slane %v2817, 5
        %v2820 = vor.u32 %v2816, %v2819
        %v2821 = vrot.slane %v2820, 4
        %v2823 = vshll.u32 %v2568, 16
        %v2825 = vrot.slane %v2823, 5
        %v2826 = vsel %vm1376, %v2821, %v2825
        %v2827 = vshrl.u32 %v2568, 16
        %v2829 = vrot.slane %v2827, 4
        %v2830 = vor.u32 %v2829, %v2825
        %v2831 = vrot.slane %v2830, 4
        %v2833 = vshll.u32 %v2590, 16
        %v2835 = vrot.slane %v2833, 5
        %v2836 = vsel %vm1376, %v2831, %v2835
        %v2838 = vshrl.u32 %v2569, 16
        %v2840 = vrot.slane %v2838, 4
        %v2841 = vshll.u32 %v2569, 16
        %v2843 = vrot.slane %v2841, 5
        %v2844 = vor.u32 %v2840, %v2843
        %v2845 = vrot.slane %v2844, 4
        %v2847 = vshll.u32 %v2570, 16
        %v2849 = vrot.slane %v2847, 5
        %v2850 = vsel %vm1376, %v2845, %v2849
        %v2851 = vshrl.u32 %v2570, 16
        %v2853 = vrot.slane %v2851, 4
        %v2854 = vor.u32 %v2853, %v2849
        %v2855 = vrot.slane %v2854, 4
        %v2857 = vshll.u32 %v2591, 16
        %v2859 = vrot.slane %v2857, 5
        %v2860 = vsel %vm1376, %v2855, %v2859
        %v2862 = vshrl.u32 %v2571, 16
        %v2864 = vrot.slane %v2862, 4
        %v2865 = vshll.u32 %v2571, 16
        %v2867 = vrot.slane %v2865, 5
        %v2868 = vor.u32 %v2864, %v2867
        %v2869 = vrot.slane %v2868, 4
        %v2871 = vshll.u32 %v2572, 16
        %v2873 = vrot.slane %v2871, 5
        %v2874 = vsel %vm1376, %v2869, %v2873
        %v2875 = vshrl.u32 %v2572, 16
        %v2877 = vrot.slane %v2875, 4
        %v2878 = vor.u32 %v2877, %v2873
        %v2879 = vrot.slane %v2878, 4
        %v2881 = vshll.u32 %v2592, 16
        %v2883 = vrot.slane %v2881, 5
        %v2884 = vsel %vm1376, %v2879, %v2883
        %v2886 = vshrl.u32 %v2573, 16
        %v2888 = vrot.slane %v2886, 4
        %v2889 = vshll.u32 %v2573, 16
        %v2891 = vrot.slane %v2889, 5
        %v2892 = vor.u32 %v2888, %v2891
        %v2893 = vrot.slane %v2892, 4
        %v2895 = vshll.u32 %v2574, 16
        %v2897 = vrot.slane %v2895, 5
        %v2898 = vsel %vm1376, %v2893, %v2897
        %v2899 = vshrl.u32 %v2574, 16
        %v2901 = vrot.slane %v2899, 4
        %v2902 = vor.u32 %v2901, %v2897
        %v2903 = vrot.slane %v2902, 4
        %v2905 = vshll.u32 %v2593, 16
        %v2907 = vrot.slane %v2905, 5
        %v2908 = vsel %vm1376, %v2903, %v2907
        %v2910 = vshrl.u32 %v2575, 16
        %v2912 = vrot.slane %v2910, 4
        %v2913 = vshll.u32 %v2575, 16
        %v2915 = vrot.slane %v2913, 5
        %v2916 = vor.u32 %v2912, %v2915
        %v2917 = vrot.slane %v2916, 4
        %v2919 = vshll.u32 %v2576, 16
        %v2921 = vrot.slane %v2919, 5
        %v2922 = vsel %vm1376, %v2917, %v2921
        %v2923 = vshrl.u32 %v2576, 16
        %v2925 = vrot.slane %v2923, 4
        %v2926 = vor.u32 %v2925, %v2921
        %v2927 = vrot.slane %v2926, 4
        %v2929 = vshll.u32 %v2594, 16
        %v2931 = vrot.slane %v2929, 5
        %v2932 = vsel %vm1376, %v2927, %v2931
        %v2934 = vshrl.u32 %v2577, 16
        %v2936 = vrot.slane %v2934, 4
        %v2937 = vshll.u32 %v2577, 16
        %v2939 = vrot.slane %v2937, 5
        %v2940 = vor.u32 %v2936, %v2939
        %v2941 = vrot.slane %v2940, 4
        %v2943 = vshll.u32 %v2578, 16
        %v2945 = vrot.slane %v2943, 5
        %v2946 = vsel %vm1376, %v2941, %v2945
        %v2947 = vshrl.u32 %v2578, 16
        %v2949 = vrot.slane %v2947, 4
        %v2950 = vor.u32 %v2949, %v2945
        %v2951 = vrot.slane %v2950, 4
        %v2953 = vshll.u32 %v2595, 16
        %v2955 = vrot.slane %v2953, 5
        %v2956 = vsel %vm1376, %v2951, %v2955
        %v2958 = vshrl.u32 %v2579, 16
        %v2960 = vrot.slane %v2958, 4
        %v2961 = vshll.u32 %v2579, 16
        %v2963 = vrot.slane %v2961, 5
        %v2964 = vor.u32 %v2960, %v2963
        %v2965 = vrot.slane %v2964, 4
        %v2967 = vshll.u32 %v2580, 16
        %v2969 = vrot.slane %v2967, 5
        %v2970 = vsel %vm1376, %v2965, %v2969
        %v2971 = vshrl.u32 %v2580, 16
        %v2973 = vrot.slane %v2971, 4
        %v2974 = vor.u32 %v2973, %v2969
        %v2975 = vrot.slane %v2974, 4
        %v2977 = vshll.u32 %v2596, 16
        %v2979 = vrot.slane %v2977, 5
        %v2980 = vsel %vm1376, %v2975, %v2979
        %v2981 = vld [vmem:[%s2548] sm:$0xe]
        %v2982 = vld [vmem:[%s2548 + $0xc] sm:$0xe]
        %v2983 = vld [vmem:[%s2548 + $0x18] sm:$0xe]
        %v2984 = vld [vmem:[%s2548 + $0x24] sm:$0xe]
        %v2985 = vld [vmem:[%s2548 + $0x30] sm:$0xe]
        %v2986 = vld [vmem:[%s2548 + $0x3c] sm:$0xe]
        %v2987 = vld [vmem:[%s2548 + $0x48] sm:$0xe]
        %v2988 = vld [vmem:[%s2548 + $0x54] sm:$0xe]
        %v2989 = vld [vmem:[%s2548 + $0x60] sm:$0xe]
        %v2990 = vld [vmem:[%s2548 + $0x6c] sm:$0xe]
        %v2991 = vld [vmem:[%s2548 + $0x78] sm:$0xe]
        %v2992 = vld [vmem:[%s2548 + $0x84] sm:$0xe]
        %v2993 = vld [vmem:[%s2548 + $0x90] sm:$0xe]
        %v2994 = vld [vmem:[%s2548 + $0x9c] sm:$0xe]
        %v2995 = vld [vmem:[%s2548 + $0xa8] sm:$0xe]
        %v2996 = vld [vmem:[%s2548 + $0xb4] sm:$0xe]
        %v3045 = vrot.slane %v2981, 5
        %v3046 = vrot.slane %v3045, 4
        %v3047 = vrot.slane %v2550, 5
        %v3048 = vsel %vm1827, %v3046, %v3047
        %v3049 = vrot.slane %v3047, 4
        %v3050 = vrot.slane %v2581, 5
        %v3051 = vsel %vm1827, %v3049, %v3050
        %v3052 = vrot.slane %v2982, 5
        %v3053 = vrot.slane %v3052, 4
        %v3054 = vrot.slane %v2552, 5
        %v3055 = vsel %vm1827, %v3053, %v3054
        %v3056 = vrot.slane %v3054, 4
        %v3057 = vrot.slane %v2582, 5
        %v3058 = vsel %vm1827, %v3056, %v3057
        %v3059 = vrot.slane %v2983, 5
        %v3060 = vrot.slane %v3059, 4
        %v3061 = vrot.slane %v2554, 5
        %v3062 = vsel %vm1827, %v3060, %v3061
        %v3063 = vrot.slane %v3061, 4
        %v3064 = vrot.slane %v2583, 5
        %v3065 = vsel %vm1827, %v3063, %v3064
        %v3066 = vrot.slane %v2984, 5
        %v3067 = vrot.slane %v3066, 4
        %v3068 = vrot.slane %v2556, 5
        %v3069 = vsel %vm1827, %v3067, %v3068
        %v3070 = vrot.slane %v3068, 4
        %v3071 = vrot.slane %v2584, 5
        %v3072 = vsel %vm1827, %v3070, %v3071
        %v3073 = vrot.slane %v2985, 5
        %v3074 = vrot.slane %v3073, 4
        %v3075 = vrot.slane %v2558, 5
        %v3076 = vsel %vm1827, %v3074, %v3075
        %v3077 = vrot.slane %v3075, 4
        %v3078 = vrot.slane %v2585, 5
        %v3079 = vsel %vm1827, %v3077, %v3078
        %v3080 = vrot.slane %v2986, 5
        %v3081 = vrot.slane %v3080, 4
        %v3082 = vrot.slane %v2560, 5
        %v3083 = vsel %vm1827, %v3081, %v3082
        %v3084 = vrot.slane %v3082, 4
        %v3085 = vrot.slane %v2586, 5
        %v3086 = vsel %vm1827, %v3084, %v3085
        %v3087 = vrot.slane %v2987, 5
        %v3088 = vrot.slane %v3087, 4
        %v3089 = vrot.slane %v2562, 5
        %v3090 = vsel %vm1827, %v3088, %v3089
        %v3091 = vrot.slane %v3089, 4
        %v3092 = vrot.slane %v2587, 5
        %v3093 = vsel %vm1827, %v3091, %v3092
        %v3094 = vrot.slane %v2988, 5
        %v3095 = vrot.slane %v3094, 4
        %v3096 = vrot.slane %v2564, 5
        %v3097 = vsel %vm1827, %v3095, %v3096
        %v3098 = vrot.slane %v3096, 4
        %v3099 = vrot.slane %v2588, 5
        %v3100 = vsel %vm1827, %v3098, %v3099
        %v3101 = vrot.slane %v2989, 5
        %v3102 = vrot.slane %v3101, 4
        %v3103 = vrot.slane %v2566, 5
        %v3104 = vsel %vm1827, %v3102, %v3103
        %v3105 = vrot.slane %v3103, 4
        %v3106 = vrot.slane %v2589, 5
        %v3107 = vsel %vm1827, %v3105, %v3106
        %v3108 = vrot.slane %v2990, 5
        %v3109 = vrot.slane %v3108, 4
        %v3110 = vrot.slane %v2568, 5
        %v3111 = vsel %vm1827, %v3109, %v3110
        %v3112 = vrot.slane %v3110, 4
        %v3113 = vrot.slane %v2590, 5
        %v3114 = vsel %vm1827, %v3112, %v3113
        %v3115 = vrot.slane %v2991, 5
        %v3116 = vrot.slane %v3115, 4
        %v3117 = vrot.slane %v2570, 5
        %v3118 = vsel %vm1827, %v3116, %v3117
        %v3119 = vrot.slane %v3117, 4
        %v3120 = vrot.slane %v2591, 5
        %v3121 = vsel %vm1827, %v3119, %v3120
        %v3122 = vrot.slane %v2992, 5
        %v3123 = vrot.slane %v3122, 4
        %v3124 = vrot.slane %v2572, 5
        %v3125 = vsel %vm1827, %v3123, %v3124
        %v3126 = vrot.slane %v3124, 4
        %v3127 = vrot.slane %v2592, 5
        %v3128 = vsel %vm1827, %v3126, %v3127
        %v3129 = vrot.slane %v2993, 5
        %v3130 = vrot.slane %v3129, 4
        %v3131 = vrot.slane %v2574, 5
        %v3132 = vsel %vm1827, %v3130, %v3131
        %v3133 = vrot.slane %v3131, 4
        %v3134 = vrot.slane %v2593, 5
        %v3135 = vsel %vm1827, %v3133, %v3134
        %v3136 = vrot.slane %v2994, 5
        %v3137 = vrot.slane %v3136, 4
        %v3138 = vrot.slane %v2576, 5
        %v3139 = vsel %vm1827, %v3137, %v3138
        %v3140 = vrot.slane %v3138, 4
        %v3141 = vrot.slane %v2594, 5
        %v3142 = vsel %vm1827, %v3140, %v3141
        %v3143 = vrot.slane %v2995, 5
        %v3144 = vrot.slane %v3143, 4
        %v3145 = vrot.slane %v2578, 5
        %v3146 = vsel %vm1827, %v3144, %v3145
        %v3147 = vrot.slane %v3145, 4
        %v3148 = vrot.slane %v2595, 5
        %v3149 = vsel %vm1827, %v3147, %v3148
        %v3150 = vrot.slane %v2996, 5
        %v3151 = vrot.slane %v3150, 4
        %v3152 = vrot.slane %v2580, 5
        %v3153 = vsel %vm1827, %v3151, %v3152
        %v3154 = vrot.slane %v3152, 4
        %v3155 = vrot.slane %v2596, 5
        %v3156 = vsel %vm1827, %v3154, %v3155
        %v3173 = vunpack.c.l.b16 %v1326
        %v3174 = vunpack.c.l.b16 %v1327
        %v3175 = vunpack.c.l.b16 %v1328
        %v3176 = vunpack.c.l.b16 %v1329
        %v3177 = vunpack.c.l.b16 %v1330
        %v3178 = vunpack.c.l.b16 %v1331
        %v3179 = vunpack.c.l.b16 %v1332
        %v3180 = vunpack.c.l.b16 %v1333
        %v3181 = vunpack.c.l.b16 %v1334
        %v3182 = vunpack.c.l.b16 %v1335
        %v3183 = vunpack.c.l.b16 %v1336
        %v3184 = vunpack.c.l.b16 %v1337
        %v3185 = vunpack.c.l.b16 %v1338
        %v3186 = vunpack.c.l.b16 %v1339
        %v3187 = vunpack.c.l.b16 %v1340
        %v3188 = vunpack.c.l.b16 %v1341
        %v3189 = vunpack.c.l.b16 %v1342
        %v3190 = vunpack.c.l.b16 %v1343
        %v3191 = vunpack.c.l.b16 %v1344
        %v3192 = vunpack.c.l.b16 %v1345
        %v3193 = vunpack.c.l.b16 %v1346
        %v3194 = vunpack.c.l.b16 %v1347
        %v3195 = vunpack.c.l.b16 %v1348
        %v3196 = vunpack.c.l.b16 %v1349
        %v3197 = vunpack.c.l.b16 %v1350
        %v3198 = vunpack.c.l.b16 %v1351
        %v3199 = vunpack.c.l.b16 %v1352
        %v3200 = vunpack.c.l.b16 %v1353
        %v3201 = vunpack.c.l.b16 %v1354
        %v3202 = vunpack.c.l.b16 %v1355
        %v3203 = vunpack.c.l.b16 %v1356
        %v3204 = vunpack.c.l.b16 %v1357
        %v3205 = vpack.c.b16 %v3174, %v3173
        %v3206 = vpack.c.b16 %v3176, %v3175
        %v3207 = vpack.c.b16 %v3178, %v3177
        %v3208 = vpack.c.b16 %v3180, %v3179
        %v3209 = vpack.c.b16 %v3182, %v3181
        %v3210 = vpack.c.b16 %v3184, %v3183
        %v3211 = vpack.c.b16 %v3186, %v3185
        %v3212 = vpack.c.b16 %v3188, %v3187
        %v3213 = vpack.c.b16 %v3190, %v3189
        %v3214 = vpack.c.b16 %v3192, %v3191
        %v3215 = vpack.c.b16 %v3194, %v3193
        %v3216 = vpack.c.b16 %v3196, %v3195
        %v3217 = vpack.c.b16 %v3198, %v3197
        %v3218 = vpack.c.b16 %v3200, %v3199
        %v3219 = vpack.c.b16 %v3202, %v3201
        %v3220 = vpack.c.b16 %v3204, %v3203
        %v3237 = vunpack.c.l.b16 %v1390
        %v3238 = vunpack.c.l.b16 %v1400
        %v3239 = vunpack.c.l.b16 %v1414
        %v3240 = vunpack.c.l.b16 %v1424
        %v3241 = vunpack.c.l.b16 %v1438
        %v3242 = vunpack.c.l.b16 %v1448
        %v3243 = vunpack.c.l.b16 %v1462
        %v3244 = vunpack.c.l.b16 %v1472
        %v3245 = vunpack.c.l.b16 %v1486
        %v3246 = vunpack.c.l.b16 %v1496
        %v3247 = vunpack.c.l.b16 %v1510
        %v3248 = vunpack.c.l.b16 %v1520
        %v3249 = vunpack.c.l.b16 %v1534
        %v3250 = vunpack.c.l.b16 %v1544
        %v3251 = vunpack.c.l.b16 %v1558
        %v3252 = vunpack.c.l.b16 %v1568
        %v3253 = vunpack.c.l.b16 %v1582
        %v3254 = vunpack.c.l.b16 %v1592
        %v3255 = vunpack.c.l.b16 %v1606
        %v3256 = vunpack.c.l.b16 %v1616
        %v3257 = vunpack.c.l.b16 %v1630
        %v3258 = vunpack.c.l.b16 %v1640
        %v3259 = vunpack.c.l.b16 %v1654
        %v3260 = vunpack.c.l.b16 %v1664
        %v3261 = vunpack.c.l.b16 %v1678
        %v3262 = vunpack.c.l.b16 %v1688
        %v3263 = vunpack.c.l.b16 %v1702
        %v3264 = vunpack.c.l.b16 %v1712
        %v3265 = vunpack.c.l.b16 %v1726
        %v3266 = vunpack.c.l.b16 %v1736
        %v3267 = vunpack.c.l.b16 %v1750
        %v3268 = vunpack.c.l.b16 %v1760
        %v3269 = vpack.c.b16 %v3238, %v3237
        %v3270 = vpack.c.b16 %v3240, %v3239
        %v3271 = vpack.c.b16 %v3242, %v3241
        %v3272 = vpack.c.b16 %v3244, %v3243
        %v3273 = vpack.c.b16 %v3246, %v3245
        %v3274 = vpack.c.b16 %v3248, %v3247
        %v3275 = vpack.c.b16 %v3250, %v3249
        %v3276 = vpack.c.b16 %v3252, %v3251
        %v3277 = vpack.c.b16 %v3254, %v3253
        %v3278 = vpack.c.b16 %v3256, %v3255
        %v3279 = vpack.c.b16 %v3258, %v3257
        %v3280 = vpack.c.b16 %v3260, %v3259
        %v3281 = vpack.c.b16 %v3262, %v3261
        %v3282 = vpack.c.b16 %v3264, %v3263
        %v3283 = vpack.c.b16 %v3266, %v3265
        %v3284 = vpack.c.b16 %v3268, %v3267
        %v3301 = vunpack.c.l.b16 %v1831
        %v3302 = vunpack.c.l.b16 %v1834
        %v3303 = vunpack.c.l.b16 %v1838
        %v3304 = vunpack.c.l.b16 %v1841
        %v3305 = vunpack.c.l.b16 %v1845
        %v3306 = vunpack.c.l.b16 %v1848
        %v3307 = vunpack.c.l.b16 %v1852
        %v3308 = vunpack.c.l.b16 %v1855
        %v3309 = vunpack.c.l.b16 %v1859
        %v3310 = vunpack.c.l.b16 %v1862
        %v3311 = vunpack.c.l.b16 %v1866
        %v3312 = vunpack.c.l.b16 %v1869
        %v3313 = vunpack.c.l.b16 %v1873
        %v3314 = vunpack.c.l.b16 %v1876
        %v3315 = vunpack.c.l.b16 %v1880
        %v3316 = vunpack.c.l.b16 %v1883
        %v3317 = vunpack.c.l.b16 %v1887
        %v3318 = vunpack.c.l.b16 %v1890
        %v3319 = vunpack.c.l.b16 %v1894
        %v3320 = vunpack.c.l.b16 %v1897
        %v3321 = vunpack.c.l.b16 %v1901
        %v3322 = vunpack.c.l.b16 %v1904
        %v3323 = vunpack.c.l.b16 %v1908
        %v3324 = vunpack.c.l.b16 %v1911
        %v3325 = vunpack.c.l.b16 %v1915
        %v3326 = vunpack.c.l.b16 %v1918
        %v3327 = vunpack.c.l.b16 %v1922
        %v3328 = vunpack.c.l.b16 %v1925
        %v3329 = vunpack.c.l.b16 %v1929
        %v3330 = vunpack.c.l.b16 %v1932
        %v3331 = vunpack.c.l.b16 %v1936
        %v3332 = vunpack.c.l.b16 %v1939
        %v3333 = vpack.c.b16 %v3302, %v3301
        %v3334 = vpack.c.b16 %v3304, %v3303
        %v3335 = vpack.c.b16 %v3306, %v3305
        %v3336 = vpack.c.b16 %v3308, %v3307
        %v3337 = vpack.c.b16 %v3310, %v3309
        %v3338 = vpack.c.b16 %v3312, %v3311
        %v3339 = vpack.c.b16 %v3314, %v3313
        %v3340 = vpack.c.b16 %v3316, %v3315
        %v3341 = vpack.c.b16 %v3318, %v3317
        %v3342 = vpack.c.b16 %v3320, %v3319
        %v3343 = vpack.c.b16 %v3322, %v3321
        %v3344 = vpack.c.b16 %v3324, %v3323
        %v3345 = vpack.c.b16 %v3326, %v3325
        %v3346 = vpack.c.b16 %v3328, %v3327
        %v3347 = vpack.c.b16 %v3330, %v3329
        %v3348 = vpack.c.b16 %v3332, %v3331
        %v3381 = vunpack.c.l.b16 %v1940
        %v3382 = vunpack.c.l.b16 %v1941
        %v3383 = vunpack.c.l.b16 %v1942
        %v3384 = vunpack.c.l.b16 %v1943
        %v3385 = vunpack.c.l.b16 %v1944
        %v3386 = vunpack.c.l.b16 %v1945
        %v3387 = vunpack.c.l.b16 %v1946
        %v3388 = vunpack.c.l.b16 %v1947
        %v3389 = vunpack.c.l.b16 %v1948
        %v3390 = vunpack.c.l.b16 %v1949
        %v3391 = vunpack.c.l.b16 %v1950
        %v3392 = vunpack.c.l.b16 %v1951
        %v3393 = vunpack.c.l.b16 %v1952
        %v3394 = vunpack.c.l.b16 %v1953
        %v3395 = vunpack.c.l.b16 %v1954
        %v3396 = vunpack.c.l.b16 %v1955
        %v3397 = vunpack.c.l.b16 %v1956
        %v3398 = vunpack.c.l.b16 %v1957
        %v3399 = vunpack.c.l.b16 %v1958
        %v3400 = vunpack.c.l.b16 %v1959
        %v3401 = vunpack.c.l.b16 %v1960
        %v3402 = vunpack.c.l.b16 %v1961
        %v3403 = vunpack.c.l.b16 %v1962
        %v3404 = vunpack.c.l.b16 %v1963
        %v3405 = vunpack.c.l.b16 %v1964
        %v3406 = vunpack.c.l.b16 %v1965
        %v3407 = vunpack.c.l.b16 %v1966
        %v3408 = vunpack.c.l.b16 %v1967
        %v3409 = vunpack.c.l.b16 %v1968
        %v3410 = vunpack.c.l.b16 %v1969
        %v3411 = vunpack.c.l.b16 %v1970
        %v3412 = vunpack.c.l.b16 %v1971
        %v3413 = vpack.c.b16 %v3382, %v3381
        %v3414 = vpack.c.b16 %v3384, %v3383
        %v3415 = vpack.c.b16 %v3386, %v3385
        %v3416 = vpack.c.b16 %v3388, %v3387
        %v3417 = vpack.c.b16 %v3390, %v3389
        %v3418 = vpack.c.b16 %v3392, %v3391
        %v3419 = vpack.c.b16 %v3394, %v3393
        %v3420 = vpack.c.b16 %v3396, %v3395
        %v3421 = vpack.c.b16 %v3398, %v3397
        %v3422 = vpack.c.b16 %v3400, %v3399
        %v3423 = vpack.c.b16 %v3402, %v3401
        %v3424 = vpack.c.b16 %v3404, %v3403
        %v3425 = vpack.c.b16 %v3406, %v3405
        %v3426 = vpack.c.b16 %v3408, %v3407
        %v3427 = vpack.c.b16 %v3410, %v3409
        %v3428 = vpack.c.b16 %v3412, %v3411
        %v3445 = vunpack.c.l.b16 %v2001
        %v3446 = vunpack.c.l.b16 %v2011
        %v3447 = vunpack.c.l.b16 %v2025
        %v3448 = vunpack.c.l.b16 %v2035
        %v3449 = vunpack.c.l.b16 %v2049
        %v3450 = vunpack.c.l.b16 %v2059
        %v3451 = vunpack.c.l.b16 %v2073
        %v3452 = vunpack.c.l.b16 %v2083
        %v3453 = vunpack.c.l.b16 %v2097
        %v3454 = vunpack.c.l.b16 %v2107
        %v3455 = vunpack.c.l.b16 %v2121
        %v3456 = vunpack.c.l.b16 %v2131
        %v3457 = vunpack.c.l.b16 %v2145
        %v3458 = vunpack.c.l.b16 %v2155
        %v3459 = vunpack.c.l.b16 %v2169
        %v3460 = vunpack.c.l.b16 %v2179
        %v3461 = vunpack.c.l.b16 %v2193
        %v3462 = vunpack.c.l.b16 %v2203
        %v3463 = vunpack.c.l.b16 %v2217
        %v3464 = vunpack.c.l.b16 %v2227
        %v3465 = vunpack.c.l.b16 %v2241
        %v3466 = vunpack.c.l.b16 %v2251
        %v3467 = vunpack.c.l.b16 %v2265
        %v3468 = vunpack.c.l.b16 %v2275
        %v3469 = vunpack.c.l.b16 %v2289
        %v3470 = vunpack.c.l.b16 %v2299
        %v3471 = vunpack.c.l.b16 %v2313
        %v3472 = vunpack.c.l.b16 %v2323
        %v3473 = vunpack.c.l.b16 %v2337
        %v3474 = vunpack.c.l.b16 %v2347
        %v3475 = vunpack.c.l.b16 %v2361
        %v3476 = vunpack.c.l.b16 %v2371
        %v3477 = vpack.c.b16 %v3446, %v3445
        %v3478 = vpack.c.b16 %v3448, %v3447
        %v3479 = vpack.c.b16 %v3450, %v3449
        %v3480 = vpack.c.b16 %v3452, %v3451
        %v3481 = vpack.c.b16 %v3454, %v3453
        %v3482 = vpack.c.b16 %v3456, %v3455
        %v3483 = vpack.c.b16 %v3458, %v3457
        %v3484 = vpack.c.b16 %v3460, %v3459
        %v3485 = vpack.c.b16 %v3462, %v3461
        %v3486 = vpack.c.b16 %v3464, %v3463
        %v3487 = vpack.c.b16 %v3466, %v3465
        %v3488 = vpack.c.b16 %v3468, %v3467
        %v3489 = vpack.c.b16 %v3470, %v3469
        %v3490 = vpack.c.b16 %v3472, %v3471
        %v3491 = vpack.c.b16 %v3474, %v3473
        %v3492 = vpack.c.b16 %v3476, %v3475
        %v3509 = vunpack.c.l.b16 %v2439
        %v3510 = vunpack.c.l.b16 %v2442
        %v3511 = vunpack.c.l.b16 %v2446
        %v3512 = vunpack.c.l.b16 %v2449
        %v3513 = vunpack.c.l.b16 %v2453
        %v3514 = vunpack.c.l.b16 %v2456
        %v3515 = vunpack.c.l.b16 %v2460
        %v3516 = vunpack.c.l.b16 %v2463
        %v3517 = vunpack.c.l.b16 %v2467
        %v3518 = vunpack.c.l.b16 %v2470
        %v3519 = vunpack.c.l.b16 %v2474
        %v3520 = vunpack.c.l.b16 %v2477
        %v3521 = vunpack.c.l.b16 %v2481
        %v3522 = vunpack.c.l.b16 %v2484
        %v3523 = vunpack.c.l.b16 %v2488
        %v3524 = vunpack.c.l.b16 %v2491
        %v3525 = vunpack.c.l.b16 %v2495
        %v3526 = vunpack.c.l.b16 %v2498
        %v3527 = vunpack.c.l.b16 %v2502
        %v3528 = vunpack.c.l.b16 %v2505
        %v3529 = vunpack.c.l.b16 %v2509
        %v3530 = vunpack.c.l.b16 %v2512
        %v3531 = vunpack.c.l.b16 %v2516
        %v3532 = vunpack.c.l.b16 %v2519
        %v3533 = vunpack.c.l.b16 %v2523
        %v3534 = vunpack.c.l.b16 %v2526
        %v3535 = vunpack.c.l.b16 %v2530
        %v3536 = vunpack.c.l.b16 %v2533
        %v3537 = vunpack.c.l.b16 %v2537
        %v3538 = vunpack.c.l.b16 %v2540
        %v3539 = vunpack.c.l.b16 %v2544
        %v3540 = vunpack.c.l.b16 %v2547
        %v3541 = vpack.c.b16 %v3510, %v3509
        %v3542 = vpack.c.b16 %v3512, %v3511
        %v3543 = vpack.c.b16 %v3514, %v3513
        %v3544 = vpack.c.b16 %v3516, %v3515
        %v3545 = vpack.c.b16 %v3518, %v3517
        %v3546 = vpack.c.b16 %v3520, %v3519
        %v3547 = vpack.c.b16 %v3522, %v3521
        %v3548 = vpack.c.b16 %v3524, %v3523
        %v3549 = vpack.c.b16 %v3526, %v3525
        %v3550 = vpack.c.b16 %v3528, %v3527
        %v3551 = vpack.c.b16 %v3530, %v3529
        %v3552 = vpack.c.b16 %v3532, %v3531
        %v3553 = vpack.c.b16 %v3534, %v3533
        %v3554 = vpack.c.b16 %v3536, %v3535
        %v3555 = vpack.c.b16 %v3538, %v3537
        %v3556 = vpack.c.b16 %v3540, %v3539
        %v3589 = vunpack.c.l.b16 %v2549
        %v3590 = vunpack.c.l.b16 %v2550
        %v3591 = vunpack.c.l.b16 %v2551
        %v3592 = vunpack.c.l.b16 %v2552
        %v3593 = vunpack.c.l.b16 %v2553
        %v3594 = vunpack.c.l.b16 %v2554
        %v3595 = vunpack.c.l.b16 %v2555
        %v3596 = vunpack.c.l.b16 %v2556
        %v3597 = vunpack.c.l.b16 %v2557
        %v3598 = vunpack.c.l.b16 %v2558
        %v3599 = vunpack.c.l.b16 %v2559
        %v3600 = vunpack.c.l.b16 %v2560
        %v3601 = vunpack.c.l.b16 %v2561
        %v3602 = vunpack.c.l.b16 %v2562
        %v3603 = vunpack.c.l.b16 %v2563
        %v3604 = vunpack.c.l.b16 %v2564
        %v3605 = vunpack.c.l.b16 %v2565
        %v3606 = vunpack.c.l.b16 %v2566
        %v3607 = vunpack.c.l.b16 %v2567
        %v3608 = vunpack.c.l.b16 %v2568
        %v3609 = vunpack.c.l.b16 %v2569
        %v3610 = vunpack.c.l.b16 %v2570
        %v3611 = vunpack.c.l.b16 %v2571
        %v3612 = vunpack.c.l.b16 %v2572
        %v3613 = vunpack.c.l.b16 %v2573
        %v3614 = vunpack.c.l.b16 %v2574
        %v3615 = vunpack.c.l.b16 %v2575
        %v3616 = vunpack.c.l.b16 %v2576
        %v3617 = vunpack.c.l.b16 %v2577
        %v3618 = vunpack.c.l.b16 %v2578
        %v3619 = vunpack.c.l.b16 %v2579
        %v3620 = vunpack.c.l.b16 %v2580
        %v3621 = vpack.c.b16 %v3590, %v3589
        %v3622 = vpack.c.b16 %v3592, %v3591
        %v3623 = vpack.c.b16 %v3594, %v3593
        %v3624 = vpack.c.b16 %v3596, %v3595
        %v3625 = vpack.c.b16 %v3598, %v3597
        %v3626 = vpack.c.b16 %v3600, %v3599
        %v3627 = vpack.c.b16 %v3602, %v3601
        %v3628 = vpack.c.b16 %v3604, %v3603
        %v3629 = vpack.c.b16 %v3606, %v3605
        %v3630 = vpack.c.b16 %v3608, %v3607
        %v3631 = vpack.c.b16 %v3610, %v3609
        %v3632 = vpack.c.b16 %v3612, %v3611
        %v3633 = vpack.c.b16 %v3614, %v3613
        %v3634 = vpack.c.b16 %v3616, %v3615
        %v3635 = vpack.c.b16 %v3618, %v3617
        %v3636 = vpack.c.b16 %v3620, %v3619
        %v3653 = vunpack.c.l.b16 %v2610
        %v3654 = vunpack.c.l.b16 %v2620
        %v3655 = vunpack.c.l.b16 %v2634
        %v3656 = vunpack.c.l.b16 %v2644
        %v3657 = vunpack.c.l.b16 %v2658
        %v3658 = vunpack.c.l.b16 %v2668
        %v3659 = vunpack.c.l.b16 %v2682
        %v3660 = vunpack.c.l.b16 %v2692
        %v3661 = vunpack.c.l.b16 %v2706
        %v3662 = vunpack.c.l.b16 %v2716
        %v3663 = vunpack.c.l.b16 %v2730
        %v3664 = vunpack.c.l.b16 %v2740
        %v3665 = vunpack.c.l.b16 %v2754
        %v3666 = vunpack.c.l.b16 %v2764
        %v3667 = vunpack.c.l.b16 %v2778
        %v3668 = vunpack.c.l.b16 %v2788
        %v3669 = vunpack.c.l.b16 %v2802
        %v3670 = vunpack.c.l.b16 %v2812
        %v3671 = vunpack.c.l.b16 %v2826
        %v3672 = vunpack.c.l.b16 %v2836
        %v3673 = vunpack.c.l.b16 %v2850
        %v3674 = vunpack.c.l.b16 %v2860
        %v3675 = vunpack.c.l.b16 %v2874
        %v3676 = vunpack.c.l.b16 %v2884
        %v3677 = vunpack.c.l.b16 %v2898
        %v3678 = vunpack.c.l.b16 %v2908
        %v3679 = vunpack.c.l.b16 %v2922
        %v3680 = vunpack.c.l.b16 %v2932
        %v3681 = vunpack.c.l.b16 %v2946
        %v3682 = vunpack.c.l.b16 %v2956
        %v3683 = vunpack.c.l.b16 %v2970
        %v3684 = vunpack.c.l.b16 %v2980
        %v3685 = vpack.c.b16 %v3654, %v3653
        %v3686 = vpack.c.b16 %v3656, %v3655
        %v3687 = vpack.c.b16 %v3658, %v3657
        %v3688 = vpack.c.b16 %v3660, %v3659
        %v3689 = vpack.c.b16 %v3662, %v3661
        %v3690 = vpack.c.b16 %v3664, %v3663
        %v3691 = vpack.c.b16 %v3666, %v3665
        %v3692 = vpack.c.b16 %v3668, %v3667
        %v3693 = vpack.c.b16 %v3670, %v3669
        %v3694 = vpack.c.b16 %v3672, %v3671
        %v3695 = vpack.c.b16 %v3674, %v3673
        %v3696 = vpack.c.b16 %v3676, %v3675
        %v3697 = vpack.c.b16 %v3678, %v3677
        %v3698 = vpack.c.b16 %v3680, %v3679
        %v3699 = vpack.c.b16 %v3682, %v3681
        %v3700 = vpack.c.b16 %v3684, %v3683
        %v3717 = vunpack.c.l.b16 %v3048
        %v3718 = vunpack.c.l.b16 %v3051
        %v3719 = vunpack.c.l.b16 %v3055
        %v3720 = vunpack.c.l.b16 %v3058
        %v3721 = vunpack.c.l.b16 %v3062
        %v3722 = vunpack.c.l.b16 %v3065
        %v3723 = vunpack.c.l.b16 %v3069
        %v3724 = vunpack.c.l.b16 %v3072
        %v3725 = vunpack.c.l.b16 %v3076
        %v3726 = vunpack.c.l.b16 %v3079
        %v3727 = vunpack.c.l.b16 %v3083
        %v3728 = vunpack.c.l.b16 %v3086
        %v3729 = vunpack.c.l.b16 %v3090
        %v3730 = vunpack.c.l.b16 %v3093
        %v3731 = vunpack.c.l.b16 %v3097
        %v3732 = vunpack.c.l.b16 %v3100
        %v3733 = vunpack.c.l.b16 %v3104
        %v3734 = vunpack.c.l.b16 %v3107
        %v3735 = vunpack.c.l.b16 %v3111
        %v3736 = vunpack.c.l.b16 %v3114
        %v3737 = vunpack.c.l.b16 %v3118
        %v3738 = vunpack.c.l.b16 %v3121
        %v3739 = vunpack.c.l.b16 %v3125
        %v3740 = vunpack.c.l.b16 %v3128
        %v3741 = vunpack.c.l.b16 %v3132
        %v3742 = vunpack.c.l.b16 %v3135
        %v3743 = vunpack.c.l.b16 %v3139
        %v3744 = vunpack.c.l.b16 %v3142
        %v3745 = vunpack.c.l.b16 %v3146
        %v3746 = vunpack.c.l.b16 %v3149
        %v3747 = vunpack.c.l.b16 %v3153
        %v3748 = vunpack.c.l.b16 %v3156
        %v3749 = vpack.c.b16 %v3718, %v3717
        %v3750 = vpack.c.b16 %v3720, %v3719
        %v3751 = vpack.c.b16 %v3722, %v3721
        %v3752 = vpack.c.b16 %v3724, %v3723
        %v3753 = vpack.c.b16 %v3726, %v3725
        %v3754 = vpack.c.b16 %v3728, %v3727
        %v3755 = vpack.c.b16 %v3730, %v3729
        %v3756 = vpack.c.b16 %v3732, %v3731
        %v3757 = vpack.c.b16 %v3734, %v3733
        %v3758 = vpack.c.b16 %v3736, %v3735
        %v3759 = vpack.c.b16 %v3738, %v3737
        %v3760 = vpack.c.b16 %v3740, %v3739
        %v3761 = vpack.c.b16 %v3742, %v3741
        %v3762 = vpack.c.b16 %v3744, %v3743
        %v3763 = vpack.c.b16 %v3746, %v3745
        %v3764 = vpack.c.b16 %v3748, %v3747
        %v3781 = vld [vmem:[#allocation8] sm:$0xf]
        %v3782 = vld [vmem:[#allocation8 + $0x4] sm:$0xf]
        %v3783 = vld [vmem:[#allocation8 + $0x8] sm:$0xf]
        %v3784 = vld [vmem:[#allocation8 + $0xc] sm:$0xf]
        %v3785 = vld [vmem:[#allocation8 + $0x10] sm:$0xf]
        %v3786 = vld [vmem:[#allocation8 + $0x14] sm:$0xf]
        %v3787 = vld [vmem:[#allocation8 + $0x18] sm:$0xf]
        %v3788 = vld [vmem:[#allocation8 + $0x1c] sm:$0xf]
        %v3789 = vld [vmem:[#allocation8 + $0x20] sm:$0xf]
        %v3790 = vld [vmem:[#allocation8 + $0x24] sm:$0xf]
        %v3791 = vld [vmem:[#allocation8 + $0x28] sm:$0xf]
        %v3792 = vld [vmem:[#allocation8 + $0x2c] sm:$0xf]
        %v3793 = vld [vmem:[#allocation8 + $0x30] sm:$0xf]
        %v3794 = vld [vmem:[#allocation8 + $0x34] sm:$0xf]
        %v3795 = vld [vmem:[#allocation8 + $0x38] sm:$0xf]
        %v3796 = vld [vmem:[#allocation8 + $0x3c] sm:$0xf]
        %v3797 = vld [vmem:[#allocation8 + $0x40] sm:$0xf]
        %v3798 = vld [vmem:[#allocation8 + $0x44] sm:$0xf]
        %v3799 = vld [vmem:[#allocation8 + $0x48] sm:$0xf]
        %v3800 = vld [vmem:[#allocation8 + $0x4c] sm:$0xf]
        %v3801 = vld [vmem:[#allocation8 + $0x50] sm:$0xf]
        %v3802 = vld [vmem:[#allocation8 + $0x54] sm:$0xf]
        %v3803 = vld [vmem:[#allocation8 + $0x58] sm:$0xf]
        %v3804 = vld [vmem:[#allocation8 + $0x5c] sm:$0xf]
        %v3805 = vld [vmem:[#allocation8 + $0x60] sm:$0xf]
        %v3806 = vld [vmem:[#allocation8 + $0x64] sm:$0xf]
        %v3807 = vld [vmem:[#allocation8 + $0x68] sm:$0xf]
        %v3808 = vld [vmem:[#allocation8 + $0x6c] sm:$0xf]
        %v3809 = vld [vmem:[#allocation8 + $0x70] sm:$0xf]
        %v3810 = vld [vmem:[#allocation8 + $0x74] sm:$0xf]
        %v3811 = vld [vmem:[#allocation8 + $0x78] sm:$0xf]
        %v3812 = vld [vmem:[#allocation8 + $0x7c] sm:$0xf]
        %v3813 = vld [vmem:[#allocation8 + $0x80] sm:$0xf]
        %v3814 = vld [vmem:[#allocation8 + $0x84] sm:$0xf]
        %v3815 = vld [vmem:[#allocation8 + $0x88] sm:$0xf]
        %v3816 = vld [vmem:[#allocation8 + $0x8c] sm:$0xf]
        %v3817 = vld [vmem:[#allocation8 + $0x90] sm:$0xf]
        %v3818 = vld [vmem:[#allocation8 + $0x94] sm:$0xf]
        %v3819 = vld [vmem:[#allocation8 + $0x98] sm:$0xf]
        %v3820 = vld [vmem:[#allocation8 + $0x9c] sm:$0xf]
        %v3821 = vld [vmem:[#allocation8 + $0xa0] sm:$0xf]
        %v3822 = vld [vmem:[#allocation8 + $0xa4] sm:$0xf]
        %v3823 = vld [vmem:[#allocation8 + $0xa8] sm:$0xf]
        %v3824 = vld [vmem:[#allocation8 + $0xac] sm:$0xf]
        %v3825 = vld [vmem:[#allocation8 + $0xb0] sm:$0xf]
        %v3826 = vld [vmem:[#allocation8 + $0xb4] sm:$0xf]
        %v3827 = vld [vmem:[#allocation8 + $0xb8] sm:$0xf]
        %v3828 = vld [vmem:[#allocation8 + $0xbc] sm:$0xf]
        %v3829 = vld [vmem:[#allocation8 + $0xc0] sm:$0xf]
        %v3830 = vld [vmem:[#allocation8 + $0xc4] sm:$0xf]
        %v3831 = vld [vmem:[#allocation8 + $0xc8] sm:$0xf]
        %v3832 = vld [vmem:[#allocation8 + $0xcc] sm:$0xf]
        %v3833 = vld [vmem:[#allocation8 + $0xd0] sm:$0xf]
        %v3834 = vld [vmem:[#allocation8 + $0xd4] sm:$0xf]
        %v3835 = vld [vmem:[#allocation8 + $0xd8] sm:$0xf]
        %v3836 = vld [vmem:[#allocation8 + $0xdc] sm:$0xf]
        %v3837 = vld [vmem:[#allocation8 + $0xe0] sm:$0xf]
        %v3838 = vld [vmem:[#allocation8 + $0xe4] sm:$0xf]
        %v3839 = vld [vmem:[#allocation8 + $0xe8] sm:$0xf]
        %v3840 = vld [vmem:[#allocation8 + $0xec] sm:$0xf]
        %v3841 = vld [vmem:[#allocation8 + $0xf0] sm:$0xf]
        %v3842 = vld [vmem:[#allocation8 + $0xf4] sm:$0xf]
        %v3843 = vld [vmem:[#allocation8 + $0xf8] sm:$0xf]
        %v3844 = vld [vmem:[#allocation8 + $0xfc] sm:$0xf]
        %v3845 = vld [vmem:[#allocation8 + $0x100] sm:$0xf]
        %v3846 = vld [vmem:[#allocation8 + $0x104] sm:$0xf]
        %v3847 = vld [vmem:[#allocation8 + $0x108] sm:$0xf]
        %v3848 = vld [vmem:[#allocation8 + $0x10c] sm:$0xf]
        %v3849 = vld [vmem:[#allocation8 + $0x110] sm:$0xf]
        %v3850 = vld [vmem:[#allocation8 + $0x114] sm:$0xf]
        %v3851 = vld [vmem:[#allocation8 + $0x118] sm:$0xf]
        %v3852 = vld [vmem:[#allocation8 + $0x11c] sm:$0xf]
        %v3853 = vld [vmem:[#allocation8 + $0x120] sm:$0xf]
        %v3854 = vld [vmem:[#allocation8 + $0x124] sm:$0xf]
        %v3855 = vld [vmem:[#allocation8 + $0x128] sm:$0xf]
        %v3856 = vld [vmem:[#allocation8 + $0x12c] sm:$0xf]
        %v3857 = vld [vmem:[#allocation8 + $0x130] sm:$0xf]
        %v3858 = vld [vmem:[#allocation8 + $0x134] sm:$0xf]
        %v3859 = vld [vmem:[#allocation8 + $0x138] sm:$0xf]
        %v3860 = vld [vmem:[#allocation8 + $0x13c] sm:$0xf]
        %v3861 = vld [vmem:[#allocation8 + $0x140] sm:$0xf]
        %v3862 = vld [vmem:[#allocation8 + $0x144] sm:$0xf]
        %v3863 = vld [vmem:[#allocation8 + $0x148] sm:$0xf]
        %v3864 = vld [vmem:[#allocation8 + $0x14c] sm:$0xf]
        %v3865 = vld [vmem:[#allocation8 + $0x150] sm:$0xf]
        %v3866 = vld [vmem:[#allocation8 + $0x154] sm:$0xf]
        %v3867 = vld [vmem:[#allocation8 + $0x158] sm:$0xf]
        %v3868 = vld [vmem:[#allocation8 + $0x15c] sm:$0xf]
        %v3869 = vld [vmem:[#allocation8 + $0x160] sm:$0xf]
        %v3870 = vld [vmem:[#allocation8 + $0x164] sm:$0xf]
        %v3871 = vld [vmem:[#allocation8 + $0x168] sm:$0xf]
        %v3872 = vld [vmem:[#allocation8 + $0x16c] sm:$0xf]
        %v3873 = vld [vmem:[#allocation8 + $0x170] sm:$0xf]
        %v3874 = vld [vmem:[#allocation8 + $0x174] sm:$0xf]
        %v3875 = vld [vmem:[#allocation8 + $0x178] sm:$0xf]
        %v3876 = vld [vmem:[#allocation8 + $0x17c] sm:$0xf]
        %v3877 = vld [vmem:[#allocation8 + $0x180] sm:$0xf]
        %v3878 = vld [vmem:[#allocation8 + $0x184] sm:$0xf]
        %v3879 = vld [vmem:[#allocation8 + $0x188] sm:$0xf]
        %v3880 = vld [vmem:[#allocation8 + $0x18c] sm:$0xf]
        %v3881 = vld [vmem:[#allocation8 + $0x190] sm:$0xf]
        %v3882 = vld [vmem:[#allocation8 + $0x194] sm:$0xf]
        %v3883 = vld [vmem:[#allocation8 + $0x198] sm:$0xf]
        %v3884 = vld [vmem:[#allocation8 + $0x19c] sm:$0xf]
        %v3885 = vld [vmem:[#allocation8 + $0x1a0] sm:$0xf]
        %v3886 = vld [vmem:[#allocation8 + $0x1a4] sm:$0xf]
        %v3887 = vld [vmem:[#allocation8 + $0x1a8] sm:$0xf]
        %v3888 = vld [vmem:[#allocation8 + $0x1ac] sm:$0xf]
        %v3889 = vld [vmem:[#allocation8 + $0x1b0] sm:$0xf]
        %v3890 = vld [vmem:[#allocation8 + $0x1b4] sm:$0xf]
        %v3891 = vld [vmem:[#allocation8 + $0x1b8] sm:$0xf]
        %v3892 = vld [vmem:[#allocation8 + $0x1bc] sm:$0xf]
        %v3893 = vld [vmem:[#allocation8 + $0x1c0] sm:$0xf]
        %v3894 = vld [vmem:[#allocation8 + $0x1c4] sm:$0xf]
        %v3895 = vld [vmem:[#allocation8 + $0x1c8] sm:$0xf]
        %v3896 = vld [vmem:[#allocation8 + $0x1cc] sm:$0xf]
        %v3897 = vld [vmem:[#allocation8 + $0x1d0] sm:$0xf]
        %v3898 = vld [vmem:[#allocation8 + $0x1d4] sm:$0xf]
        %v3899 = vld [vmem:[#allocation8 + $0x1d8] sm:$0xf]
        %v3900 = vld [vmem:[#allocation8 + $0x1dc] sm:$0xf]
        %v3901 = vld [vmem:[#allocation8 + $0x1e0] sm:$0xf]
        %v3902 = vld [vmem:[#allocation8 + $0x1e4] sm:$0xf]
        %v3903 = vld [vmem:[#allocation8 + $0x1e8] sm:$0xf]
        %v3904 = vld [vmem:[#allocation8 + $0x1ec] sm:$0xf]
        %v3905 = vld [vmem:[#allocation8 + $0x1f0] sm:$0xf]
        %v3906 = vld [vmem:[#allocation8 + $0x1f4] sm:$0xf]
        %v3907 = vld [vmem:[#allocation8 + $0x1f8] sm:$0xf]
        %v3908 = vld [vmem:[#allocation8 + $0x1fc] sm:$0xf]
        %v3909 = vld [vmem:[#allocation8 + $0x200] sm:$0xf]
        %v3910 = vld [vmem:[#allocation8 + $0x204] sm:$0xf]
        %v3911 = vld [vmem:[#allocation8 + $0x208] sm:$0xf]
        %v3912 = vld [vmem:[#allocation8 + $0x20c] sm:$0xf]
        %v3913 = vld [vmem:[#allocation8 + $0x210] sm:$0xf]
        %v3914 = vld [vmem:[#allocation8 + $0x214] sm:$0xf]
        %v3915 = vld [vmem:[#allocation8 + $0x218] sm:$0xf]
        %v3916 = vld [vmem:[#allocation8 + $0x21c] sm:$0xf]
        %v3917 = vld [vmem:[#allocation8 + $0x220] sm:$0xf]
        %v3918 = vld [vmem:[#allocation8 + $0x224] sm:$0xf]
        %v3919 = vld [vmem:[#allocation8 + $0x228] sm:$0xf]
        %v3920 = vld [vmem:[#allocation8 + $0x22c] sm:$0xf]
        %v3921 = vld [vmem:[#allocation8 + $0x230] sm:$0xf]
        %v3922 = vld [vmem:[#allocation8 + $0x234] sm:$0xf]
        %v3923 = vld [vmem:[#allocation8 + $0x238] sm:$0xf]
        %v3924 = vld [vmem:[#allocation8 + $0x23c] sm:$0xf]
        %v3925 = vld [vmem:[%s4] sm:$0x1]
        %v3927 = vperm.slane %v3925, 0
        %v4073 = vunpack.c.l.b16 %v3781
        %v4074 = vunpack.c.l.b16 %v3782
        %v4075 = vunpack.c.l.b16 %v3783
        %v4076 = vunpack.c.l.b16 %v3784
        %v4077 = vunpack.c.l.b16 %v3785
        %v4078 = vunpack.c.l.b16 %v3786
        %v4079 = vunpack.c.l.b16 %v3787
        %v4080 = vunpack.c.l.b16 %v3788
        %v4081 = vunpack.c.l.b16 %v3789
        %v4082 = vunpack.c.l.b16 %v3790
        %v4083 = vunpack.c.l.b16 %v3791
        %v4084 = vunpack.c.l.b16 %v3792
        %v4085 = vunpack.c.l.b16 %v3793
        %v4086 = vunpack.c.l.b16 %v3794
        %v4087 = vunpack.c.l.b16 %v3795
        %v4088 = vunpack.c.l.b16 %v3796
        %v4089 = vunpack.c.l.b16 %v3797
        %v4090 = vunpack.c.l.b16 %v3798
        %v4091 = vunpack.c.l.b16 %v3799
        %v4092 = vunpack.c.l.b16 %v3800
        %v4093 = vunpack.c.l.b16 %v3801
        %v4094 = vunpack.c.l.b16 %v3802
        %v4095 = vunpack.c.l.b16 %v3803
        %v4096 = vunpack.c.l.b16 %v3804
        %v4097 = vunpack.c.l.b16 %v3805
        %v4098 = vunpack.c.l.b16 %v3806
        %v4099 = vunpack.c.l.b16 %v3807
        %v4100 = vunpack.c.l.b16 %v3808
        %v4101 = vunpack.c.l.b16 %v3809
        %v4102 = vunpack.c.l.b16 %v3810
        %v4103 = vunpack.c.l.b16 %v3811
        %v4104 = vunpack.c.l.b16 %v3812
        %v4105 = vunpack.c.l.b16 %v3813
        %v4106 = vunpack.c.l.b16 %v3814
        %v4107 = vunpack.c.l.b16 %v3815
        %v4108 = vunpack.c.l.b16 %v3816
        %v4109 = vunpack.c.l.b16 %v3817
        %v4110 = vunpack.c.l.b16 %v3818
        %v4111 = vunpack.c.l.b16 %v3819
        %v4112 = vunpack.c.l.b16 %v3820
        %v4113 = vunpack.c.l.b16 %v3821
        %v4114 = vunpack.c.l.b16 %v3822
        %v4115 = vunpack.c.l.b16 %v3823
        %v4116 = vunpack.c.l.b16 %v3824
        %v4117 = vunpack.c.l.b16 %v3825
        %v4118 = vunpack.c.l.b16 %v3826
        %v4119 = vunpack.c.l.b16 %v3827
        %v4120 = vunpack.c.l.b16 %v3828
        %v4121 = vunpack.c.l.b16 %v3829
        %v4122 = vunpack.c.l.b16 %v3830
        %v4123 = vunpack.c.l.b16 %v3831
        %v4124 = vunpack.c.l.b16 %v3832
        %v4125 = vunpack.c.l.b16 %v3833
        %v4126 = vunpack.c.l.b16 %v3834
        %v4127 = vunpack.c.l.b16 %v3835
        %v4128 = vunpack.c.l.b16 %v3836
        %v4129 = vunpack.c.l.b16 %v3837
        %v4130 = vunpack.c.l.b16 %v3838
        %v4131 = vunpack.c.l.b16 %v3839
        %v4132 = vunpack.c.l.b16 %v3840
        %v4133 = vunpack.c.l.b16 %v3841
        %v4134 = vunpack.c.l.b16 %v3842
        %v4135 = vunpack.c.l.b16 %v3843
        %v4136 = vunpack.c.l.b16 %v3844
        %v4137 = vunpack.c.l.b16 %v3845
        %v4138 = vunpack.c.l.b16 %v3846
        %v4139 = vunpack.c.l.b16 %v3847
        %v4140 = vunpack.c.l.b16 %v3848
        %v4141 = vunpack.c.l.b16 %v3849
        %v4142 = vunpack.c.l.b16 %v3850
        %v4143 = vunpack.c.l.b16 %v3851
        %v4144 = vunpack.c.l.b16 %v3852
        %v4145 = vunpack.c.l.b16 %v3853
        %v4146 = vunpack.c.l.b16 %v3854
        %v4147 = vunpack.c.l.b16 %v3855
        %v4148 = vunpack.c.l.b16 %v3856
        %v4149 = vunpack.c.l.b16 %v3857
        %v4150 = vunpack.c.l.b16 %v3858
        %v4151 = vunpack.c.l.b16 %v3859
        %v4152 = vunpack.c.l.b16 %v3860
        %v4153 = vunpack.c.l.b16 %v3861
        %v4154 = vunpack.c.l.b16 %v3862
        %v4155 = vunpack.c.l.b16 %v3863
        %v4156 = vunpack.c.l.b16 %v3864
        %v4157 = vunpack.c.l.b16 %v3865
        %v4158 = vunpack.c.l.b16 %v3866
        %v4159 = vunpack.c.l.b16 %v3867
        %v4160 = vunpack.c.l.b16 %v3868
        %v4161 = vunpack.c.l.b16 %v3869
        %v4162 = vunpack.c.l.b16 %v3870
        %v4163 = vunpack.c.l.b16 %v3871
        %v4164 = vunpack.c.l.b16 %v3872
        %v4165 = vunpack.c.l.b16 %v3873
        %v4166 = vunpack.c.l.b16 %v3874
        %v4167 = vunpack.c.l.b16 %v3875
        %v4168 = vunpack.c.l.b16 %v3876
        %v4169 = vunpack.c.l.b16 %v3877
        %v4170 = vunpack.c.l.b16 %v3878
        %v4171 = vunpack.c.l.b16 %v3879
        %v4172 = vunpack.c.l.b16 %v3880
        %v4173 = vunpack.c.l.b16 %v3881
        %v4174 = vunpack.c.l.b16 %v3882
        %v4175 = vunpack.c.l.b16 %v3883
        %v4176 = vunpack.c.l.b16 %v3884
        %v4177 = vunpack.c.l.b16 %v3885
        %v4178 = vunpack.c.l.b16 %v3886
        %v4179 = vunpack.c.l.b16 %v3887
        %v4180 = vunpack.c.l.b16 %v3888
        %v4181 = vunpack.c.l.b16 %v3889
        %v4182 = vunpack.c.l.b16 %v3890
        %v4183 = vunpack.c.l.b16 %v3891
        %v4184 = vunpack.c.l.b16 %v3892
        %v4185 = vunpack.c.l.b16 %v3893
        %v4186 = vunpack.c.l.b16 %v3894
        %v4187 = vunpack.c.l.b16 %v3895
        %v4188 = vunpack.c.l.b16 %v3896
        %v4189 = vunpack.c.l.b16 %v3897
        %v4190 = vunpack.c.l.b16 %v3898
        %v4191 = vunpack.c.l.b16 %v3899
        %v4192 = vunpack.c.l.b16 %v3900
        %v4193 = vunpack.c.l.b16 %v3901
        %v4194 = vunpack.c.l.b16 %v3902
        %v4195 = vunpack.c.l.b16 %v3903
        %v4196 = vunpack.c.l.b16 %v3904
        %v4197 = vunpack.c.l.b16 %v3905
        %v4198 = vunpack.c.l.b16 %v3906
        %v4199 = vunpack.c.l.b16 %v3907
        %v4200 = vunpack.c.l.b16 %v3908
        %v4201 = vunpack.c.l.b16 %v3909
        %v4202 = vunpack.c.l.b16 %v3910
        %v4203 = vunpack.c.l.b16 %v3911
        %v4204 = vunpack.c.l.b16 %v3912
        %v4205 = vunpack.c.l.b16 %v3913
        %v4206 = vunpack.c.l.b16 %v3914
        %v4207 = vunpack.c.l.b16 %v3915
        %v4208 = vunpack.c.l.b16 %v3916
        %v4209 = vunpack.c.l.b16 %v3917
        %v4210 = vunpack.c.l.b16 %v3918
        %v4211 = vunpack.c.l.b16 %v3919
        %v4212 = vunpack.c.l.b16 %v3920
        %v4213 = vunpack.c.l.b16 %v3921
        %v4214 = vunpack.c.l.b16 %v3922
        %v4215 = vunpack.c.l.b16 %v3923
        %v4216 = vunpack.c.l.b16 %v3924
        %v4217 = vpack.c.b16 %v4074, %v4073
        %v4218 = vpack.c.b16 %v4076, %v4075
        %v4219 = vpack.c.b16 %v4078, %v4077
        %v4220 = vpack.c.b16 %v4080, %v4079
        %v4221 = vpack.c.b16 %v4082, %v4081
        %v4222 = vpack.c.b16 %v4084, %v4083
        %v4223 = vpack.c.b16 %v4086, %v4085
        %v4224 = vpack.c.b16 %v4088, %v4087
        %v4225 = vpack.c.b16 %v4090, %v4089
        %v4226 = vpack.c.b16 %v4092, %v4091
        %v4227 = vpack.c.b16 %v4094, %v4093
        %v4228 = vpack.c.b16 %v4096, %v4095
        %v4229 = vpack.c.b16 %v4098, %v4097
        %v4230 = vpack.c.b16 %v4100, %v4099
        %v4231 = vpack.c.b16 %v4102, %v4101
        %v4232 = vpack.c.b16 %v4104, %v4103
        %v4233 = vpack.c.b16 %v4106, %v4105
        %v4234 = vpack.c.b16 %v4108, %v4107
        %v4235 = vpack.c.b16 %v4110, %v4109
        %v4236 = vpack.c.b16 %v4112, %v4111
        %v4237 = vpack.c.b16 %v4114, %v4113
        %v4238 = vpack.c.b16 %v4116, %v4115
        %v4239 = vpack.c.b16 %v4118, %v4117
        %v4240 = vpack.c.b16 %v4120, %v4119
        %v4241 = vpack.c.b16 %v4122, %v4121
        %v4242 = vpack.c.b16 %v4124, %v4123
        %v4243 = vpack.c.b16 %v4126, %v4125
        %v4244 = vpack.c.b16 %v4128, %v4127
        %v4245 = vpack.c.b16 %v4130, %v4129
        %v4246 = vpack.c.b16 %v4132, %v4131
        %v4247 = vpack.c.b16 %v4134, %v4133
        %v4248 = vpack.c.b16 %v4136, %v4135
        %v4249 = vpack.c.b16 %v4138, %v4137
        %v4250 = vpack.c.b16 %v4140, %v4139
        %v4251 = vpack.c.b16 %v4142, %v4141
        %v4252 = vpack.c.b16 %v4144, %v4143
        %v4253 = vpack.c.b16 %v4146, %v4145
        %v4254 = vpack.c.b16 %v4148, %v4147
        %v4255 = vpack.c.b16 %v4150, %v4149
        %v4256 = vpack.c.b16 %v4152, %v4151
        %v4257 = vpack.c.b16 %v4154, %v4153
        %v4258 = vpack.c.b16 %v4156, %v4155
        %v4259 = vpack.c.b16 %v4158, %v4157
        %v4260 = vpack.c.b16 %v4160, %v4159
        %v4261 = vpack.c.b16 %v4162, %v4161
        %v4262 = vpack.c.b16 %v4164, %v4163
        %v4263 = vpack.c.b16 %v4166, %v4165
        %v4264 = vpack.c.b16 %v4168, %v4167
        %v4265 = vpack.c.b16 %v4170, %v4169
        %v4266 = vpack.c.b16 %v4172, %v4171
        %v4267 = vpack.c.b16 %v4174, %v4173
        %v4268 = vpack.c.b16 %v4176, %v4175
        %v4269 = vpack.c.b16 %v4178, %v4177
        %v4270 = vpack.c.b16 %v4180, %v4179
        %v4271 = vpack.c.b16 %v4182, %v4181
        %v4272 = vpack.c.b16 %v4184, %v4183
        %v4273 = vpack.c.b16 %v4186, %v4185
        %v4274 = vpack.c.b16 %v4188, %v4187
        %v4275 = vpack.c.b16 %v4190, %v4189
        %v4276 = vpack.c.b16 %v4192, %v4191
        %v4277 = vpack.c.b16 %v4194, %v4193
        %v4278 = vpack.c.b16 %v4196, %v4195
        %v4279 = vpack.c.b16 %v4198, %v4197
        %v4280 = vpack.c.b16 %v4200, %v4199
        %v4281 = vpack.c.b16 %v4202, %v4201
        %v4282 = vpack.c.b16 %v4204, %v4203
        %v4283 = vpack.c.b16 %v4206, %v4205
        %v4284 = vpack.c.b16 %v4208, %v4207
        %v4285 = vpack.c.b16 %v4210, %v4209
        %v4286 = vpack.c.b16 %v4212, %v4211
        %v4287 = vpack.c.b16 %v4214, %v4213
        %v4288 = vpack.c.b16 %v4216, %v4215
        %4361 = vmatpush.bf16.msra.mxu0 %v4224
        %4362 = vmatpush.bf16.msra.mxu0 %v4223
        %4363 = vmatpush.bf16.msra.mxu0 %v4222
        %4364 = vmatpush.bf16.msra.mxu0 %v4221
        %4365 = vmatpush.bf16.msra.mxu0 %v4220
        %4366 = vmatpush.bf16.msra.mxu0 %v4219
        %4367 = vmatpush.bf16.msra.mxu0 %v4218
        %4368 = vmatpush.bf16.msra.mxu0 %v4217
        %4369 = vmatmul.bf16.gmra.mxu0 %v3205
        %v4370 = vpop.f32.mrf.mxu0
        %v4371 = vadd.f32 %v3927, %v4370
        %v4372 = vpop.f32.mrf.mxu0
        %v4373 = vadd.f32 %v3927, %v4372
        %4374 = vmatmul.bf16.gmra.mxu0 %v3206
        %v4375 = vpop.f32.mrf.mxu0
        %v4376 = vadd.f32 %v3927, %v4375
        %v4377 = vpop.f32.mrf.mxu0
        %v4378 = vadd.f32 %v3927, %v4377
        %4379 = vmatmul.bf16.gmra.mxu0 %v3207
        %v4380 = vpop.f32.mrf.mxu0
        %v4381 = vadd.f32 %v3927, %v4380
        %v4382 = vpop.f32.mrf.mxu0
        %v4383 = vadd.f32 %v3927, %v4382
        %4384 = vmatmul.bf16.gmra.mxu0 %v3208
        %v4385 = vpop.f32.mrf.mxu0
        %v4386 = vadd.f32 %v3927, %v4385
        %v4387 = vpop.f32.mrf.mxu0
        %v4388 = vadd.f32 %v3927, %v4387
        %4389 = vmatmul.bf16.gmra.mxu0 %v3209
        %v4390 = vpop.f32.mrf.mxu0
        %v4391 = vadd.f32 %v3927, %v4390
        %v4392 = vpop.f32.mrf.mxu0
        %v4393 = vadd.f32 %v3927, %v4392
        %4394 = vmatmul.bf16.gmra.mxu0 %v3210
        %v4395 = vpop.f32.mrf.mxu0
        %v4396 = vadd.f32 %v3927, %v4395
        %v4397 = vpop.f32.mrf.mxu0
        %v4398 = vadd.f32 %v3927, %v4397
        %4399 = vmatmul.bf16.gmra.mxu0 %v3211
        %v4400 = vpop.f32.mrf.mxu0
        %v4401 = vadd.f32 %v3927, %v4400
        %v4402 = vpop.f32.mrf.mxu0
        %v4403 = vadd.f32 %v3927, %v4402
        %4404 = vmatmul.bf16.gmra.mxu0 %v3212
        %v4405 = vpop.f32.mrf.mxu0
        %v4406 = vadd.f32 %v3927, %v4405
        %v4407 = vpop.f32.mrf.mxu0
        %v4408 = vadd.f32 %v3927, %v4407
        %4409 = vmatmul.bf16.gmra.mxu0 %v3213
        %v4410 = vpop.f32.mrf.mxu0
        %v4411 = vadd.f32 %v3927, %v4410
        %v4412 = vpop.f32.mrf.mxu0
        %v4413 = vadd.f32 %v3927, %v4412
        %4414 = vmatmul.bf16.gmra.mxu0 %v3214
        %v4415 = vpop.f32.mrf.mxu0
        %v4416 = vadd.f32 %v3927, %v4415
        %v4417 = vpop.f32.mrf.mxu0
        %v4418 = vadd.f32 %v3927, %v4417
        %4419 = vmatmul.bf16.gmra.mxu0 %v3215
        %v4420 = vpop.f32.mrf.mxu0
        %v4421 = vadd.f32 %v3927, %v4420
        %v4422 = vpop.f32.mrf.mxu0
        %v4423 = vadd.f32 %v3927, %v4422
        %4424 = vmatmul.bf16.gmra.mxu0 %v3216
        %v4425 = vpop.f32.mrf.mxu0
        %v4426 = vadd.f32 %v3927, %v4425
        %v4427 = vpop.f32.mrf.mxu0
        %v4428 = vadd.f32 %v3927, %v4427
        %4429 = vmatmul.bf16.gmra.mxu0 %v3217
        %v4430 = vpop.f32.mrf.mxu0
        %v4431 = vadd.f32 %v3927, %v4430
        %v4432 = vpop.f32.mrf.mxu0
        %v4433 = vadd.f32 %v3927, %v4432
        %4434 = vmatmul.bf16.gmra.mxu0 %v3218
        %v4435 = vpop.f32.mrf.mxu0
        %v4436 = vadd.f32 %v3927, %v4435
        %v4437 = vpop.f32.mrf.mxu0
        %v4438 = vadd.f32 %v3927, %v4437
        %4439 = vmatmul.bf16.gmra.mxu0 %v3219
        %v4440 = vpop.f32.mrf.mxu0
        %v4441 = vadd.f32 %v3927, %v4440
        %v4442 = vpop.f32.mrf.mxu0
        %v4443 = vadd.f32 %v3927, %v4442
        %4444 = vmatmul.bf16.gmra.mxu0 %v3220
        %v4445 = vpop.f32.mrf.mxu0
        %v4446 = vadd.f32 %v3927, %v4445
        %v4447 = vpop.f32.mrf.mxu0
        %v4448 = vadd.f32 %v3927, %v4447
        %4449 = vdwg.mxu0
        %4450 = vmatpush.bf16.msra.mxu0 %v4232
        %4451 = vmatpush.bf16.msra.mxu0 %v4231
        %4452 = vmatpush.bf16.msra.mxu0 %v4230
        %4453 = vmatpush.bf16.msra.mxu0 %v4229
        %4454 = vmatpush.bf16.msra.mxu0 %v4228
        %4455 = vmatpush.bf16.msra.mxu0 %v4227
        %4456 = vmatpush.bf16.msra.mxu0 %v4226
        %4457 = vmatpush.bf16.msra.mxu0 %v4225
        %4458 = vmatmul.bf16.gmra.mxu0 %v3269
        %v4459 = vpop.f32.mrf.mxu0
        %v4460 = vadd.f32 %v4371, %v4459
        %v4461 = vpop.f32.mrf.mxu0
        %v4462 = vadd.f32 %v4373, %v4461
        %4463 = vmatmul.bf16.gmra.mxu0 %v3270
        %v4464 = vpop.f32.mrf.mxu0
        %v4465 = vadd.f32 %v4376, %v4464
        %v4466 = vpop.f32.mrf.mxu0
        %v4467 = vadd.f32 %v4378, %v4466
        %4468 = vmatmul.bf16.gmra.mxu0 %v3271
        %v4469 = vpop.f32.mrf.mxu0
        %v4470 = vadd.f32 %v4381, %v4469
        %v4471 = vpop.f32.mrf.mxu0
        %v4472 = vadd.f32 %v4383, %v4471
        %4473 = vmatmul.bf16.gmra.mxu0 %v3272
        %v4474 = vpop.f32.mrf.mxu0
        %v4475 = vadd.f32 %v4386, %v4474
        %v4476 = vpop.f32.mrf.mxu0
        %v4477 = vadd.f32 %v4388, %v4476
        %4478 = vmatmul.bf16.gmra.mxu0 %v3273
        %v4479 = vpop.f32.mrf.mxu0
        %v4480 = vadd.f32 %v4391, %v4479
        %v4481 = vpop.f32.mrf.mxu0
        %v4482 = vadd.f32 %v4393, %v4481
        %4483 = vmatmul.bf16.gmra.mxu0 %v3274
        %v4484 = vpop.f32.mrf.mxu0
        %v4485 = vadd.f32 %v4396, %v4484
        %v4486 = vpop.f32.mrf.mxu0
        %v4487 = vadd.f32 %v4398, %v4486
        %4488 = vmatmul.bf16.gmra.mxu0 %v3275
        %v4489 = vpop.f32.mrf.mxu0
        %v4490 = vadd.f32 %v4401, %v4489
        %v4491 = vpop.f32.mrf.mxu0
        %v4492 = vadd.f32 %v4403, %v4491
        %4493 = vmatmul.bf16.gmra.mxu0 %v3276
        %v4494 = vpop.f32.mrf.mxu0
        %v4495 = vadd.f32 %v4406, %v4494
        %v4496 = vpop.f32.mrf.mxu0
        %v4497 = vadd.f32 %v4408, %v4496
        %4498 = vmatmul.bf16.gmra.mxu0 %v3277
        %v4499 = vpop.f32.mrf.mxu0
        %v4500 = vadd.f32 %v4411, %v4499
        %v4501 = vpop.f32.mrf.mxu0
        %v4502 = vadd.f32 %v4413, %v4501
        %4503 = vmatmul.bf16.gmra.mxu0 %v3278
        %v4504 = vpop.f32.mrf.mxu0
        %v4505 = vadd.f32 %v4416, %v4504
        %v4506 = vpop.f32.mrf.mxu0
        %v4507 = vadd.f32 %v4418, %v4506
        %4508 = vmatmul.bf16.gmra.mxu0 %v3279
        %v4509 = vpop.f32.mrf.mxu0
        %v4510 = vadd.f32 %v4421, %v4509
        %v4511 = vpop.f32.mrf.mxu0
        %v4512 = vadd.f32 %v4423, %v4511
        %4513 = vmatmul.bf16.gmra.mxu0 %v3280
        %v4514 = vpop.f32.mrf.mxu0
        %v4515 = vadd.f32 %v4426, %v4514
        %v4516 = vpop.f32.mrf.mxu0
        %v4517 = vadd.f32 %v4428, %v4516
        %4518 = vmatmul.bf16.gmra.mxu0 %v3281
        %v4519 = vpop.f32.mrf.mxu0
        %v4520 = vadd.f32 %v4431, %v4519
        %v4521 = vpop.f32.mrf.mxu0
        %v4522 = vadd.f32 %v4433, %v4521
        %4523 = vmatmul.bf16.gmra.mxu0 %v3282
        %v4524 = vpop.f32.mrf.mxu0
        %v4525 = vadd.f32 %v4436, %v4524
        %v4526 = vpop.f32.mrf.mxu0
        %v4527 = vadd.f32 %v4438, %v4526
        %4528 = vmatmul.bf16.gmra.mxu0 %v3283
        %v4529 = vpop.f32.mrf.mxu0
        %v4530 = vadd.f32 %v4441, %v4529
        %v4531 = vpop.f32.mrf.mxu0
        %v4532 = vadd.f32 %v4443, %v4531
        %4533 = vmatmul.bf16.gmra.mxu0 %v3284
        %v4534 = vpop.f32.mrf.mxu0
        %v4535 = vadd.f32 %v4446, %v4534
        %v4536 = vpop.f32.mrf.mxu0
        %v4537 = vadd.f32 %v4448, %v4536
        %4538 = vdwg.mxu0
        %4539 = vmatpush.bf16.msra.mxu0 %v4240
        %4540 = vmatpush.bf16.msra.mxu0 %v4239
        %4541 = vmatpush.bf16.msra.mxu0 %v4238
        %4542 = vmatpush.bf16.msra.mxu0 %v4237
        %4543 = vmatpush.bf16.msra.mxu0 %v4236
        %4544 = vmatpush.bf16.msra.mxu0 %v4235
        %4545 = vmatpush.bf16.msra.mxu0 %v4234
        %4546 = vmatpush.bf16.msra.mxu0 %v4233
        %4547 = vmatmul.bf16.gmra.mxu0 %v3333
        %v4548 = vpop.f32.mrf.mxu0
        %v4549 = vadd.f32 %v4460, %v4548
        %v4550 = vpop.f32.mrf.mxu0
        %v4551 = vadd.f32 %v4462, %v4550
        %4552 = vmatmul.bf16.gmra.mxu0 %v3334
        %v4553 = vpop.f32.mrf.mxu0
        %v4554 = vadd.f32 %v4465, %v4553
        %v4555 = vpop.f32.mrf.mxu0
        %v4556 = vadd.f32 %v4467, %v4555
        %4557 = vmatmul.bf16.gmra.mxu0 %v3335
        %v4558 = vpop.f32.mrf.mxu0
        %v4559 = vadd.f32 %v4470, %v4558
        %v4560 = vpop.f32.mrf.mxu0
        %v4561 = vadd.f32 %v4472, %v4560
        %4562 = vmatmul.bf16.gmra.mxu0 %v3336
        %v4563 = vpop.f32.mrf.mxu0
        %v4564 = vadd.f32 %v4475, %v4563
        %v4565 = vpop.f32.mrf.mxu0
        %v4566 = vadd.f32 %v4477, %v4565
        %4567 = vmatmul.bf16.gmra.mxu0 %v3337
        %v4568 = vpop.f32.mrf.mxu0
        %v4569 = vadd.f32 %v4480, %v4568
        %v4570 = vpop.f32.mrf.mxu0
        %v4571 = vadd.f32 %v4482, %v4570
        %4572 = vmatmul.bf16.gmra.mxu0 %v3338
        %v4573 = vpop.f32.mrf.mxu0
        %v4574 = vadd.f32 %v4485, %v4573
        %v4575 = vpop.f32.mrf.mxu0
        %v4576 = vadd.f32 %v4487, %v4575
        %4577 = vmatmul.bf16.gmra.mxu0 %v3339
        %v4578 = vpop.f32.mrf.mxu0
        %v4579 = vadd.f32 %v4490, %v4578
        %v4580 = vpop.f32.mrf.mxu0
        %v4581 = vadd.f32 %v4492, %v4580
        %4582 = vmatmul.bf16.gmra.mxu0 %v3340
        %v4583 = vpop.f32.mrf.mxu0
        %v4584 = vadd.f32 %v4495, %v4583
        %v4585 = vpop.f32.mrf.mxu0
        %v4586 = vadd.f32 %v4497, %v4585
        %4587 = vmatmul.bf16.gmra.mxu0 %v3341
        %v4588 = vpop.f32.mrf.mxu0
        %v4589 = vadd.f32 %v4500, %v4588
        %v4590 = vpop.f32.mrf.mxu0
        %v4591 = vadd.f32 %v4502, %v4590
        %4592 = vmatmul.bf16.gmra.mxu0 %v3342
        %v4593 = vpop.f32.mrf.mxu0
        %v4594 = vadd.f32 %v4505, %v4593
        %v4595 = vpop.f32.mrf.mxu0
        %v4596 = vadd.f32 %v4507, %v4595
        %4597 = vmatmul.bf16.gmra.mxu0 %v3343
        %v4598 = vpop.f32.mrf.mxu0
        %v4599 = vadd.f32 %v4510, %v4598
        %v4600 = vpop.f32.mrf.mxu0
        %v4601 = vadd.f32 %v4512, %v4600
        %4602 = vmatmul.bf16.gmra.mxu0 %v3344
        %v4603 = vpop.f32.mrf.mxu0
        %v4604 = vadd.f32 %v4515, %v4603
        %v4605 = vpop.f32.mrf.mxu0
        %v4606 = vadd.f32 %v4517, %v4605
        %4607 = vmatmul.bf16.gmra.mxu0 %v3345
        %v4608 = vpop.f32.mrf.mxu0
        %v4609 = vadd.f32 %v4520, %v4608
        %v4610 = vpop.f32.mrf.mxu0
        %v4611 = vadd.f32 %v4522, %v4610
        %4612 = vmatmul.bf16.gmra.mxu0 %v3346
        %v4613 = vpop.f32.mrf.mxu0
        %v4614 = vadd.f32 %v4525, %v4613
        %v4615 = vpop.f32.mrf.mxu0
        %v4616 = vadd.f32 %v4527, %v4615
        %4617 = vmatmul.bf16.gmra.mxu0 %v3347
        %v4618 = vpop.f32.mrf.mxu0
        %v4619 = vadd.f32 %v4530, %v4618
        %v4620 = vpop.f32.mrf.mxu0
        %v4621 = vadd.f32 %v4532, %v4620
        %4622 = vmatmul.bf16.gmra.mxu0 %v3348
        %v4623 = vpop.f32.mrf.mxu0
        %v4624 = vadd.f32 %v4535, %v4623
        %v4625 = vpop.f32.mrf.mxu0
        %v4626 = vadd.f32 %v4537, %v4625
        %4627 = vdwg.mxu0
        %4628 = vmatpush.bf16.msra.mxu0 %v4248
        %4629 = vmatpush.bf16.msra.mxu0 %v4247
        %4630 = vmatpush.bf16.msra.mxu0 %v4246
        %4631 = vmatpush.bf16.msra.mxu0 %v4245
        %4632 = vmatpush.bf16.msra.mxu0 %v4244
        %4633 = vmatpush.bf16.msra.mxu0 %v4243
        %4634 = vmatpush.bf16.msra.mxu0 %v4242
        %4635 = vmatpush.bf16.msra.mxu0 %v4241
        %4636 = vmatmul.bf16.gmra.mxu0 %v3413
        %v4637 = vpop.f32.mrf.mxu0
        %v4638 = vadd.f32 %v4549, %v4637
        %v4639 = vpop.f32.mrf.mxu0
        %v4640 = vadd.f32 %v4551, %v4639
        %4641 = vmatmul.bf16.gmra.mxu0 %v3414
        %v4642 = vpop.f32.mrf.mxu0
        %v4643 = vadd.f32 %v4554, %v4642
        %v4644 = vpop.f32.mrf.mxu0
        %v4645 = vadd.f32 %v4556, %v4644
        %4646 = vmatmul.bf16.gmra.mxu0 %v3415
        %v4647 = vpop.f32.mrf.mxu0
        %v4648 = vadd.f32 %v4559, %v4647
        %v4649 = vpop.f32.mrf.mxu0
        %v4650 = vadd.f32 %v4561, %v4649
        %4651 = vmatmul.bf16.gmra.mxu0 %v3416
        %v4652 = vpop.f32.mrf.mxu0
        %v4653 = vadd.f32 %v4564, %v4652
        %v4654 = vpop.f32.mrf.mxu0
        %v4655 = vadd.f32 %v4566, %v4654
        %4656 = vmatmul.bf16.gmra.mxu0 %v3417
        %v4657 = vpop.f32.mrf.mxu0
        %v4658 = vadd.f32 %v4569, %v4657
        %v4659 = vpop.f32.mrf.mxu0
        %v4660 = vadd.f32 %v4571, %v4659
        %4661 = vmatmul.bf16.gmra.mxu0 %v3418
        %v4662 = vpop.f32.mrf.mxu0
        %v4663 = vadd.f32 %v4574, %v4662
        %v4664 = vpop.f32.mrf.mxu0
        %v4665 = vadd.f32 %v4576, %v4664
        %4666 = vmatmul.bf16.gmra.mxu0 %v3419
        %v4667 = vpop.f32.mrf.mxu0
        %v4668 = vadd.f32 %v4579, %v4667
        %v4669 = vpop.f32.mrf.mxu0
        %v4670 = vadd.f32 %v4581, %v4669
        %4671 = vmatmul.bf16.gmra.mxu0 %v3420
        %v4672 = vpop.f32.mrf.mxu0
        %v4673 = vadd.f32 %v4584, %v4672
        %v4674 = vpop.f32.mrf.mxu0
        %v4675 = vadd.f32 %v4586, %v4674
        %4676 = vmatmul.bf16.gmra.mxu0 %v3421
        %v4677 = vpop.f32.mrf.mxu0
        %v4678 = vadd.f32 %v4589, %v4677
        %v4679 = vpop.f32.mrf.mxu0
        %v4680 = vadd.f32 %v4591, %v4679
        %4681 = vmatmul.bf16.gmra.mxu0 %v3422
        %v4682 = vpop.f32.mrf.mxu0
        %v4683 = vadd.f32 %v4594, %v4682
        %v4684 = vpop.f32.mrf.mxu0
        %v4685 = vadd.f32 %v4596, %v4684
        %4686 = vmatmul.bf16.gmra.mxu0 %v3423
        %v4687 = vpop.f32.mrf.mxu0
        %v4688 = vadd.f32 %v4599, %v4687
        %v4689 = vpop.f32.mrf.mxu0
        %v4690 = vadd.f32 %v4601, %v4689
        %4691 = vmatmul.bf16.gmra.mxu0 %v3424
        %v4692 = vpop.f32.mrf.mxu0
        %v4693 = vadd.f32 %v4604, %v4692
        %v4694 = vpop.f32.mrf.mxu0
        %v4695 = vadd.f32 %v4606, %v4694
        %4696 = vmatmul.bf16.gmra.mxu0 %v3425
        %v4697 = vpop.f32.mrf.mxu0
        %v4698 = vadd.f32 %v4609, %v4697
        %v4699 = vpop.f32.mrf.mxu0
        %v4700 = vadd.f32 %v4611, %v4699
        %4701 = vmatmul.bf16.gmra.mxu0 %v3426
        %v4702 = vpop.f32.mrf.mxu0
        %v4703 = vadd.f32 %v4614, %v4702
        %v4704 = vpop.f32.mrf.mxu0
        %v4705 = vadd.f32 %v4616, %v4704
        %4706 = vmatmul.bf16.gmra.mxu0 %v3427
        %v4707 = vpop.f32.mrf.mxu0
        %v4708 = vadd.f32 %v4619, %v4707
        %v4709 = vpop.f32.mrf.mxu0
        %v4710 = vadd.f32 %v4621, %v4709
        %4711 = vmatmul.bf16.gmra.mxu0 %v3428
        %v4712 = vpop.f32.mrf.mxu0
        %v4713 = vadd.f32 %v4624, %v4712
        %v4714 = vpop.f32.mrf.mxu0
        %v4715 = vadd.f32 %v4626, %v4714
        %4716 = vdwg.mxu0
        %4717 = vmatpush.bf16.msra.mxu0 %v4256
        %4718 = vmatpush.bf16.msra.mxu0 %v4255
        %4719 = vmatpush.bf16.msra.mxu0 %v4254
        %4720 = vmatpush.bf16.msra.mxu0 %v4253
        %4721 = vmatpush.bf16.msra.mxu0 %v4252
        %4722 = vmatpush.bf16.msra.mxu0 %v4251
        %4723 = vmatpush.bf16.msra.mxu0 %v4250
        %4724 = vmatpush.bf16.msra.mxu0 %v4249
        %4725 = vmatmul.bf16.gmra.mxu0 %v3477
        %v4726 = vpop.f32.mrf.mxu0
        %v4727 = vadd.f32 %v4638, %v4726
        %v4728 = vpop.f32.mrf.mxu0
        %v4729 = vadd.f32 %v4640, %v4728
        %4730 = vmatmul.bf16.gmra.mxu0 %v3478
        %v4731 = vpop.f32.mrf.mxu0
        %v4732 = vadd.f32 %v4643, %v4731
        %v4733 = vpop.f32.mrf.mxu0
        %v4734 = vadd.f32 %v4645, %v4733
        %4735 = vmatmul.bf16.gmra.mxu0 %v3479
        %v4736 = vpop.f32.mrf.mxu0
        %v4737 = vadd.f32 %v4648, %v4736
        %v4738 = vpop.f32.mrf.mxu0
        %v4739 = vadd.f32 %v4650, %v4738
        %4740 = vmatmul.bf16.gmra.mxu0 %v3480
        %v4741 = vpop.f32.mrf.mxu0
        %v4742 = vadd.f32 %v4653, %v4741
        %v4743 = vpop.f32.mrf.mxu0
        %v4744 = vadd.f32 %v4655, %v4743
        %4745 = vmatmul.bf16.gmra.mxu0 %v3481
        %v4746 = vpop.f32.mrf.mxu0
        %v4747 = vadd.f32 %v4658, %v4746
        %v4748 = vpop.f32.mrf.mxu0
        %v4749 = vadd.f32 %v4660, %v4748
        %4750 = vmatmul.bf16.gmra.mxu0 %v3482
        %v4751 = vpop.f32.mrf.mxu0
        %v4752 = vadd.f32 %v4663, %v4751
        %v4753 = vpop.f32.mrf.mxu0
        %v4754 = vadd.f32 %v4665, %v4753
        %4755 = vmatmul.bf16.gmra.mxu0 %v3483
        %v4756 = vpop.f32.mrf.mxu0
        %v4757 = vadd.f32 %v4668, %v4756
        %v4758 = vpop.f32.mrf.mxu0
        %v4759 = vadd.f32 %v4670, %v4758
        %4760 = vmatmul.bf16.gmra.mxu0 %v3484
        %v4761 = vpop.f32.mrf.mxu0
        %v4762 = vadd.f32 %v4673, %v4761
        %v4763 = vpop.f32.mrf.mxu0
        %v4764 = vadd.f32 %v4675, %v4763
        %4765 = vmatmul.bf16.gmra.mxu0 %v3485
        %v4766 = vpop.f32.mrf.mxu0
        %v4767 = vadd.f32 %v4678, %v4766
        %v4768 = vpop.f32.mrf.mxu0
        %v4769 = vadd.f32 %v4680, %v4768
        %4770 = vmatmul.bf16.gmra.mxu0 %v3486
        %v4771 = vpop.f32.mrf.mxu0
        %v4772 = vadd.f32 %v4683, %v4771
        %v4773 = vpop.f32.mrf.mxu0
        %v4774 = vadd.f32 %v4685, %v4773
        %4775 = vmatmul.bf16.gmra.mxu0 %v3487
        %v4776 = vpop.f32.mrf.mxu0
        %v4777 = vadd.f32 %v4688, %v4776
        %v4778 = vpop.f32.mrf.mxu0
        %v4779 = vadd.f32 %v4690, %v4778
        %4780 = vmatmul.bf16.gmra.mxu0 %v3488
        %v4781 = vpop.f32.mrf.mxu0
        %v4782 = vadd.f32 %v4693, %v4781
        %v4783 = vpop.f32.mrf.mxu0
        %v4784 = vadd.f32 %v4695, %v4783
        %4785 = vmatmul.bf16.gmra.mxu0 %v3489
        %v4786 = vpop.f32.mrf.mxu0
        %v4787 = vadd.f32 %v4698, %v4786
        %v4788 = vpop.f32.mrf.mxu0
        %v4789 = vadd.f32 %v4700, %v4788
        %4790 = vmatmul.bf16.gmra.mxu0 %v3490
        %v4791 = vpop.f32.mrf.mxu0
        %v4792 = vadd.f32 %v4703, %v4791
        %v4793 = vpop.f32.mrf.mxu0
        %v4794 = vadd.f32 %v4705, %v4793
        %4795 = vmatmul.bf16.gmra.mxu0 %v3491
        %v4796 = vpop.f32.mrf.mxu0
        %v4797 = vadd.f32 %v4708, %v4796
        %v4798 = vpop.f32.mrf.mxu0
        %v4799 = vadd.f32 %v4710, %v4798
        %4800 = vmatmul.bf16.gmra.mxu0 %v3492
        %v4801 = vpop.f32.mrf.mxu0
        %v4802 = vadd.f32 %v4713, %v4801
        %v4803 = vpop.f32.mrf.mxu0
        %v4804 = vadd.f32 %v4715, %v4803
        %4805 = vdwg.mxu0
        %4806 = vmatpush.bf16.msra.mxu0 %v4264
        %4807 = vmatpush.bf16.msra.mxu0 %v4263
        %4808 = vmatpush.bf16.msra.mxu0 %v4262
        %4809 = vmatpush.bf16.msra.mxu0 %v4261
        %4810 = vmatpush.bf16.msra.mxu0 %v4260
        %4811 = vmatpush.bf16.msra.mxu0 %v4259
        %4812 = vmatpush.bf16.msra.mxu0 %v4258
        %4813 = vmatpush.bf16.msra.mxu0 %v4257
        %4814 = vmatmul.bf16.gmra.mxu0 %v3541
        %v4815 = vpop.f32.mrf.mxu0
        %v4816 = vadd.f32 %v4727, %v4815
        %v4817 = vpop.f32.mrf.mxu0
        %v4818 = vadd.f32 %v4729, %v4817
        %4819 = vmatmul.bf16.gmra.mxu0 %v3542
        %v4820 = vpop.f32.mrf.mxu0
        %v4821 = vadd.f32 %v4732, %v4820
        %v4822 = vpop.f32.mrf.mxu0
        %v4823 = vadd.f32 %v4734, %v4822
        %4824 = vmatmul.bf16.gmra.mxu0 %v3543
        %v4825 = vpop.f32.mrf.mxu0
        %v4826 = vadd.f32 %v4737, %v4825
        %v4827 = vpop.f32.mrf.mxu0
        %v4828 = vadd.f32 %v4739, %v4827
        %4829 = vmatmul.bf16.gmra.mxu0 %v3544
        %v4830 = vpop.f32.mrf.mxu0
        %v4831 = vadd.f32 %v4742, %v4830
        %v4832 = vpop.f32.mrf.mxu0
        %v4833 = vadd.f32 %v4744, %v4832
        %4834 = vmatmul.bf16.gmra.mxu0 %v3545
        %v4835 = vpop.f32.mrf.mxu0
        %v4836 = vadd.f32 %v4747, %v4835
        %v4837 = vpop.f32.mrf.mxu0
        %v4838 = vadd.f32 %v4749, %v4837
        %4839 = vmatmul.bf16.gmra.mxu0 %v3546
        %v4840 = vpop.f32.mrf.mxu0
        %v4841 = vadd.f32 %v4752, %v4840
        %v4842 = vpop.f32.mrf.mxu0
        %v4843 = vadd.f32 %v4754, %v4842
        %4844 = vmatmul.bf16.gmra.mxu0 %v3547
        %v4845 = vpop.f32.mrf.mxu0
        %v4846 = vadd.f32 %v4757, %v4845
        %v4847 = vpop.f32.mrf.mxu0
        %v4848 = vadd.f32 %v4759, %v4847
        %4849 = vmatmul.bf16.gmra.mxu0 %v3548
        %v4850 = vpop.f32.mrf.mxu0
        %v4851 = vadd.f32 %v4762, %v4850
        %v4852 = vpop.f32.mrf.mxu0
        %v4853 = vadd.f32 %v4764, %v4852
        %4854 = vmatmul.bf16.gmra.mxu0 %v3549
        %v4855 = vpop.f32.mrf.mxu0
        %v4856 = vadd.f32 %v4767, %v4855
        %v4857 = vpop.f32.mrf.mxu0
        %v4858 = vadd.f32 %v4769, %v4857
        %4859 = vmatmul.bf16.gmra.mxu0 %v3550
        %v4860 = vpop.f32.mrf.mxu0
        %v4861 = vadd.f32 %v4772, %v4860
        %v4862 = vpop.f32.mrf.mxu0
        %v4863 = vadd.f32 %v4774, %v4862
        %4864 = vmatmul.bf16.gmra.mxu0 %v3551
        %v4865 = vpop.f32.mrf.mxu0
        %v4866 = vadd.f32 %v4777, %v4865
        %v4867 = vpop.f32.mrf.mxu0
        %v4868 = vadd.f32 %v4779, %v4867
        %4869 = vmatmul.bf16.gmra.mxu0 %v3552
        %v4870 = vpop.f32.mrf.mxu0
        %v4871 = vadd.f32 %v4782, %v4870
        %v4872 = vpop.f32.mrf.mxu0
        %v4873 = vadd.f32 %v4784, %v4872
        %4874 = vmatmul.bf16.gmra.mxu0 %v3553
        %v4875 = vpop.f32.mrf.mxu0
        %v4876 = vadd.f32 %v4787, %v4875
        %v4877 = vpop.f32.mrf.mxu0
        %v4878 = vadd.f32 %v4789, %v4877
        %4879 = vmatmul.bf16.gmra.mxu0 %v3554
        %v4880 = vpop.f32.mrf.mxu0
        %v4881 = vadd.f32 %v4792, %v4880
        %v4882 = vpop.f32.mrf.mxu0
        %v4883 = vadd.f32 %v4794, %v4882
        %4884 = vmatmul.bf16.gmra.mxu0 %v3555
        %v4885 = vpop.f32.mrf.mxu0
        %v4886 = vadd.f32 %v4797, %v4885
        %v4887 = vpop.f32.mrf.mxu0
        %v4888 = vadd.f32 %v4799, %v4887
        %4889 = vmatmul.bf16.gmra.mxu0 %v3556
        %v4890 = vpop.f32.mrf.mxu0
        %v4891 = vadd.f32 %v4802, %v4890
        %v4892 = vpop.f32.mrf.mxu0
        %v4893 = vadd.f32 %v4804, %v4892
        %4894 = vdwg.mxu0
        %4895 = vmatpush.bf16.msra.mxu0 %v4272
        %4896 = vmatpush.bf16.msra.mxu0 %v4271
        %4897 = vmatpush.bf16.msra.mxu0 %v4270
        %4898 = vmatpush.bf16.msra.mxu0 %v4269
        %4899 = vmatpush.bf16.msra.mxu0 %v4268
        %4900 = vmatpush.bf16.msra.mxu0 %v4267
        %4901 = vmatpush.bf16.msra.mxu0 %v4266
        %4902 = vmatpush.bf16.msra.mxu0 %v4265
        %4903 = vmatmul.bf16.gmra.mxu0 %v3621
        %v4904 = vpop.f32.mrf.mxu0
        %v4905 = vadd.f32 %v4816, %v4904
        %v4906 = vpop.f32.mrf.mxu0
        %v4907 = vadd.f32 %v4818, %v4906
        %4908 = vmatmul.bf16.gmra.mxu0 %v3622
        %v4909 = vpop.f32.mrf.mxu0
        %v4910 = vadd.f32 %v4821, %v4909
        %v4911 = vpop.f32.mrf.mxu0
        %v4912 = vadd.f32 %v4823, %v4911
        %4913 = vmatmul.bf16.gmra.mxu0 %v3623
        %v4914 = vpop.f32.mrf.mxu0
        %v4915 = vadd.f32 %v4826, %v4914
        %v4916 = vpop.f32.mrf.mxu0
        %v4917 = vadd.f32 %v4828, %v4916
        %4918 = vmatmul.bf16.gmra.mxu0 %v3624
        %v4919 = vpop.f32.mrf.mxu0
        %v4920 = vadd.f32 %v4831, %v4919
        %v4921 = vpop.f32.mrf.mxu0
        %v4922 = vadd.f32 %v4833, %v4921
        %4923 = vmatmul.bf16.gmra.mxu0 %v3625
        %v4924 = vpop.f32.mrf.mxu0
        %v4925 = vadd.f32 %v4836, %v4924
        %v4926 = vpop.f32.mrf.mxu0
        %v4927 = vadd.f32 %v4838, %v4926
        %4928 = vmatmul.bf16.gmra.mxu0 %v3626
        %v4929 = vpop.f32.mrf.mxu0
        %v4930 = vadd.f32 %v4841, %v4929
        %v4931 = vpop.f32.mrf.mxu0
        %v4932 = vadd.f32 %v4843, %v4931
        %4933 = vmatmul.bf16.gmra.mxu0 %v3627
        %v4934 = vpop.f32.mrf.mxu0
        %v4935 = vadd.f32 %v4846, %v4934
        %v4936 = vpop.f32.mrf.mxu0
        %v4937 = vadd.f32 %v4848, %v4936
        %4938 = vmatmul.bf16.gmra.mxu0 %v3628
        %v4939 = vpop.f32.mrf.mxu0
        %v4940 = vadd.f32 %v4851, %v4939
        %v4941 = vpop.f32.mrf.mxu0
        %v4942 = vadd.f32 %v4853, %v4941
        %4943 = vmatmul.bf16.gmra.mxu0 %v3629
        %v4944 = vpop.f32.mrf.mxu0
        %v4945 = vadd.f32 %v4856, %v4944
        %v4946 = vpop.f32.mrf.mxu0
        %v4947 = vadd.f32 %v4858, %v4946
        %4948 = vmatmul.bf16.gmra.mxu0 %v3630
        %v4949 = vpop.f32.mrf.mxu0
        %v4950 = vadd.f32 %v4861, %v4949
        %v4951 = vpop.f32.mrf.mxu0
        %v4952 = vadd.f32 %v4863, %v4951
        %4953 = vmatmul.bf16.gmra.mxu0 %v3631
        %v4954 = vpop.f32.mrf.mxu0
        %v4955 = vadd.f32 %v4866, %v4954
        %v4956 = vpop.f32.mrf.mxu0
        %v4957 = vadd.f32 %v4868, %v4956
        %4958 = vmatmul.bf16.gmra.mxu0 %v3632
        %v4959 = vpop.f32.mrf.mxu0
        %v4960 = vadd.f32 %v4871, %v4959
        %v4961 = vpop.f32.mrf.mxu0
        %v4962 = vadd.f32 %v4873, %v4961
        %4963 = vmatmul.bf16.gmra.mxu0 %v3633
        %v4964 = vpop.f32.mrf.mxu0
        %v4965 = vadd.f32 %v4876, %v4964
        %v4966 = vpop.f32.mrf.mxu0
        %v4967 = vadd.f32 %v4878, %v4966
        %4968 = vmatmul.bf16.gmra.mxu0 %v3634
        %v4969 = vpop.f32.mrf.mxu0
        %v4970 = vadd.f32 %v4881, %v4969
        %v4971 = vpop.f32.mrf.mxu0
        %v4972 = vadd.f32 %v4883, %v4971
        %4973 = vmatmul.bf16.gmra.mxu0 %v3635
        %v4974 = vpop.f32.mrf.mxu0
        %v4975 = vadd.f32 %v4886, %v4974
        %v4976 = vpop.f32.mrf.mxu0
        %v4977 = vadd.f32 %v4888, %v4976
        %4978 = vmatmul.bf16.gmra.mxu0 %v3636
        %v4979 = vpop.f32.mrf.mxu0
        %v4980 = vadd.f32 %v4891, %v4979
        %v4981 = vpop.f32.mrf.mxu0
        %v4982 = vadd.f32 %v4893, %v4981
        %4983 = vdwg.mxu0
        %4984 = vmatpush.bf16.msra.mxu0 %v4280
        %4985 = vmatpush.bf16.msra.mxu0 %v4279
        %4986 = vmatpush.bf16.msra.mxu0 %v4278
        %4987 = vmatpush.bf16.msra.mxu0 %v4277
        %4988 = vmatpush.bf16.msra.mxu0 %v4276
        %4989 = vmatpush.bf16.msra.mxu0 %v4275
        %4990 = vmatpush.bf16.msra.mxu0 %v4274
        %4991 = vmatpush.bf16.msra.mxu0 %v4273
        %4992 = vmatmul.bf16.gmra.mxu0 %v3685
        %v4993 = vpop.f32.mrf.mxu0
        %v4994 = vadd.f32 %v4905, %v4993
        %v4995 = vpop.f32.mrf.mxu0
        %v4996 = vadd.f32 %v4907, %v4995
        %4997 = vmatmul.bf16.gmra.mxu0 %v3686
        %v4998 = vpop.f32.mrf.mxu0
        %v4999 = vadd.f32 %v4910, %v4998
        %v5000 = vpop.f32.mrf.mxu0
        %v5001 = vadd.f32 %v4912, %v5000
        %5002 = vmatmul.bf16.gmra.mxu0 %v3687
        %v5003 = vpop.f32.mrf.mxu0
        %v5004 = vadd.f32 %v4915, %v5003
        %v5005 = vpop.f32.mrf.mxu0
        %v5006 = vadd.f32 %v4917, %v5005
        %5007 = vmatmul.bf16.gmra.mxu0 %v3688
        %v5008 = vpop.f32.mrf.mxu0
        %v5009 = vadd.f32 %v4920, %v5008
        %v5010 = vpop.f32.mrf.mxu0
        %v5011 = vadd.f32 %v4922, %v5010
        %5012 = vmatmul.bf16.gmra.mxu0 %v3689
        %v5013 = vpop.f32.mrf.mxu0
        %v5014 = vadd.f32 %v4925, %v5013
        %v5015 = vpop.f32.mrf.mxu0
        %v5016 = vadd.f32 %v4927, %v5015
        %5017 = vmatmul.bf16.gmra.mxu0 %v3690
        %v5018 = vpop.f32.mrf.mxu0
        %v5019 = vadd.f32 %v4930, %v5018
        %v5020 = vpop.f32.mrf.mxu0
        %v5021 = vadd.f32 %v4932, %v5020
        %5022 = vmatmul.bf16.gmra.mxu0 %v3691
        %v5023 = vpop.f32.mrf.mxu0
        %v5024 = vadd.f32 %v4935, %v5023
        %v5025 = vpop.f32.mrf.mxu0
        %v5026 = vadd.f32 %v4937, %v5025
        %5027 = vmatmul.bf16.gmra.mxu0 %v3692
        %v5028 = vpop.f32.mrf.mxu0
        %v5029 = vadd.f32 %v4940, %v5028
        %v5030 = vpop.f32.mrf.mxu0
        %v5031 = vadd.f32 %v4942, %v5030
        %5032 = vmatmul.bf16.gmra.mxu0 %v3693
        %v5033 = vpop.f32.mrf.mxu0
        %v5034 = vadd.f32 %v4945, %v5033
        %v5035 = vpop.f32.mrf.mxu0
        %v5036 = vadd.f32 %v4947, %v5035
        %5037 = vmatmul.bf16.gmra.mxu0 %v3694
        %v5038 = vpop.f32.mrf.mxu0
        %v5039 = vadd.f32 %v4950, %v5038
        %v5040 = vpop.f32.mrf.mxu0
        %v5041 = vadd.f32 %v4952, %v5040
        %5042 = vmatmul.bf16.gmra.mxu0 %v3695
        %v5043 = vpop.f32.mrf.mxu0
        %v5044 = vadd.f32 %v4955, %v5043
        %v5045 = vpop.f32.mrf.mxu0
        %v5046 = vadd.f32 %v4957, %v5045
        %5047 = vmatmul.bf16.gmra.mxu0 %v3696
        %v5048 = vpop.f32.mrf.mxu0
        %v5049 = vadd.f32 %v4960, %v5048
        %v5050 = vpop.f32.mrf.mxu0
        %v5051 = vadd.f32 %v4962, %v5050
        %5052 = vmatmul.bf16.gmra.mxu0 %v3697
        %v5053 = vpop.f32.mrf.mxu0
        %v5054 = vadd.f32 %v4965, %v5053
        %v5055 = vpop.f32.mrf.mxu0
        %v5056 = vadd.f32 %v4967, %v5055
        %5057 = vmatmul.bf16.gmra.mxu0 %v3698
        %v5058 = vpop.f32.mrf.mxu0
        %v5059 = vadd.f32 %v4970, %v5058
        %v5060 = vpop.f32.mrf.mxu0
        %v5061 = vadd.f32 %v4972, %v5060
        %5062 = vmatmul.bf16.gmra.mxu0 %v3699
        %v5063 = vpop.f32.mrf.mxu0
        %v5064 = vadd.f32 %v4975, %v5063
        %v5065 = vpop.f32.mrf.mxu0
        %v5066 = vadd.f32 %v4977, %v5065
        %5067 = vmatmul.bf16.gmra.mxu0 %v3700
        %v5068 = vpop.f32.mrf.mxu0
        %v5069 = vadd.f32 %v4980, %v5068
        %v5070 = vpop.f32.mrf.mxu0
        %v5071 = vadd.f32 %v4982, %v5070
        %5072 = vdwg.mxu0
        %5073 = vmatpush.bf16.msra.mxu0 %v4288
        %5074 = vmatpush.bf16.msra.mxu0 %v4287
        %5075 = vmatpush.bf16.msra.mxu0 %v4286
        %5076 = vmatpush.bf16.msra.mxu0 %v4285
        %5077 = vmatpush.bf16.msra.mxu0 %v4284
        %5078 = vmatpush.bf16.msra.mxu0 %v4283
        %5079 = vmatpush.bf16.msra.mxu0 %v4282
        %5080 = vmatpush.bf16.msra.mxu0 %v4281
        %5081 = vmatmul.bf16.gmra.mxu0 %v3749
        %v5082 = vpop.f32.mrf.mxu0
        %v5083 = vadd.f32 %v4994, %v5082
        %v5084 = vpop.f32.mrf.mxu0
        %v5085 = vadd.f32 %v4996, %v5084
        %5086 = vmatmul.bf16.gmra.mxu0 %v3750
        %v5087 = vpop.f32.mrf.mxu0
        %v5088 = vadd.f32 %v4999, %v5087
        %v5089 = vpop.f32.mrf.mxu0
        %v5090 = vadd.f32 %v5001, %v5089
        %5091 = vmatmul.bf16.gmra.mxu0 %v3751
        %v5092 = vpop.f32.mrf.mxu0
        %v5093 = vadd.f32 %v5004, %v5092
        %v5094 = vpop.f32.mrf.mxu0
        %v5095 = vadd.f32 %v5006, %v5094
        %5096 = vmatmul.bf16.gmra.mxu0 %v3752
        %v5097 = vpop.f32.mrf.mxu0
        %v5098 = vadd.f32 %v5009, %v5097
        %v5099 = vpop.f32.mrf.mxu0
        %v5100 = vadd.f32 %v5011, %v5099
        %5101 = vmatmul.bf16.gmra.mxu0 %v3753
        %v5102 = vpop.f32.mrf.mxu0
        %v5103 = vadd.f32 %v5014, %v5102
        %v5104 = vpop.f32.mrf.mxu0
        %v5105 = vadd.f32 %v5016, %v5104
        %5106 = vmatmul.bf16.gmra.mxu0 %v3754
        %v5107 = vpop.f32.mrf.mxu0
        %v5108 = vadd.f32 %v5019, %v5107
        %v5109 = vpop.f32.mrf.mxu0
        %v5110 = vadd.f32 %v5021, %v5109
        %5111 = vmatmul.bf16.gmra.mxu0 %v3755
        %v5112 = vpop.f32.mrf.mxu0
        %v5113 = vadd.f32 %v5024, %v5112
        %v5114 = vpop.f32.mrf.mxu0
        %v5115 = vadd.f32 %v5026, %v5114
        %5116 = vmatmul.bf16.gmra.mxu0 %v3756
        %v5117 = vpop.f32.mrf.mxu0
        %v5118 = vadd.f32 %v5029, %v5117
        %v5119 = vpop.f32.mrf.mxu0
        %v5120 = vadd.f32 %v5031, %v5119
        %5121 = vmatmul.bf16.gmra.mxu0 %v3757
        %v5122 = vpop.f32.mrf.mxu0
        %v5123 = vadd.f32 %v5034, %v5122
        %v5124 = vpop.f32.mrf.mxu0
        %v5125 = vadd.f32 %v5036, %v5124
        %5126 = vmatmul.bf16.gmra.mxu0 %v3758
        %v5127 = vpop.f32.mrf.mxu0
        %v5128 = vadd.f32 %v5039, %v5127
        %v5129 = vpop.f32.mrf.mxu0
        %v5130 = vadd.f32 %v5041, %v5129
        %5131 = vmatmul.bf16.gmra.mxu0 %v3759
        %v5132 = vpop.f32.mrf.mxu0
        %v5133 = vadd.f32 %v5044, %v5132
        %v5134 = vpop.f32.mrf.mxu0
        %v5135 = vadd.f32 %v5046, %v5134
        %5136 = vmatmul.bf16.gmra.mxu0 %v3760
        %v5137 = vpop.f32.mrf.mxu0
        %v5138 = vadd.f32 %v5049, %v5137
        %v5139 = vpop.f32.mrf.mxu0
        %v5140 = vadd.f32 %v5051, %v5139
        %5141 = vmatmul.bf16.gmra.mxu0 %v3761
        %v5142 = vpop.f32.mrf.mxu0
        %v5143 = vadd.f32 %v5054, %v5142
        %v5144 = vpop.f32.mrf.mxu0
        %v5145 = vadd.f32 %v5056, %v5144
        %5146 = vmatmul.bf16.gmra.mxu0 %v3762
        %v5147 = vpop.f32.mrf.mxu0
        %v5148 = vadd.f32 %v5059, %v5147
        %v5149 = vpop.f32.mrf.mxu0
        %v5150 = vadd.f32 %v5061, %v5149
        %5151 = vmatmul.bf16.gmra.mxu0 %v3763
        %v5152 = vpop.f32.mrf.mxu0
        %v5153 = vadd.f32 %v5064, %v5152
        %v5154 = vpop.f32.mrf.mxu0
        %v5155 = vadd.f32 %v5066, %v5154
        %5156 = vmatmul.bf16.gmra.mxu0 %v3764
        %v5157 = vpop.f32.mrf.mxu0
        %v5158 = vadd.f32 %v5069, %v5157
        %v5159 = vpop.f32.mrf.mxu0
        %v5160 = vadd.f32 %v5071, %v5159
        %5161 = vdwg.mxu0
        %v5162 = vmax.f32 %v5083, 0.0
        %v5163 = vmax.f32 %v5085, 0.0
        %v5164 = vmax.f32 %v5088, 0.0
        %v5165 = vmax.f32 %v5090, 0.0
        %v5166 = vmax.f32 %v5093, 0.0
        %v5167 = vmax.f32 %v5095, 0.0
        %v5168 = vmax.f32 %v5098, 0.0
        %v5169 = vmax.f32 %v5100, 0.0
        %v5170 = vmax.f32 %v5103, 0.0
        %v5171 = vmax.f32 %v5105, 0.0
        %v5172 = vmax.f32 %v5108, 0.0
        %v5173 = vmax.f32 %v5110, 0.0
        %v5174 = vmax.f32 %v5113, 0.0
        %v5175 = vmax.f32 %v5115, 0.0
        %v5176 = vmax.f32 %v5118, 0.0
        %v5177 = vmax.f32 %v5120, 0.0
        %v5178 = vmax.f32 %v5123, 0.0
        %v5179 = vmax.f32 %v5125, 0.0
        %v5180 = vmax.f32 %v5128, 0.0
        %v5181 = vmax.f32 %v5130, 0.0
        %v5182 = vmax.f32 %v5133, 0.0
        %v5183 = vmax.f32 %v5135, 0.0
        %v5184 = vmax.f32 %v5138, 0.0
        %v5185 = vmax.f32 %v5140, 0.0
        %v5186 = vmax.f32 %v5143, 0.0
        %v5187 = vmax.f32 %v5145, 0.0
        %v5188 = vmax.f32 %v5148, 0.0
        %v5189 = vmax.f32 %v5150, 0.0
        %v5190 = vmax.f32 %v5153, 0.0
        %v5191 = vmax.f32 %v5155, 0.0
        %v5192 = vmax.f32 %v5158, 0.0
        %v5193 = vmax.f32 %v5160, 0.0
        %v5194 = vpack.c.bf16 %v5163, %v5162
        %v5195 = vpack.c.bf16 %v5165, %v5164
        %v5196 = vpack.c.bf16 %v5167, %v5166
        %v5197 = vpack.c.bf16 %v5169, %v5168
        %v5198 = vpack.c.bf16 %v5171, %v5170
        %v5199 = vpack.c.bf16 %v5173, %v5172
        %v5200 = vpack.c.bf16 %v5175, %v5174
        %v5201 = vpack.c.bf16 %v5177, %v5176
        %v5202 = vpack.c.bf16 %v5179, %v5178
        %v5203 = vpack.c.bf16 %v5181, %v5180
        %v5204 = vpack.c.bf16 %v5183, %v5182
        %v5205 = vpack.c.bf16 %v5185, %v5184
        %v5206 = vpack.c.bf16 %v5187, %v5186
        %v5207 = vpack.c.bf16 %v5189, %v5188
        %v5208 = vpack.c.bf16 %v5191, %v5190
        %v5209 = vpack.c.bf16 %v5193, %v5192
        %v5210 = vld [vmem:[#allocation9] sm:$0xf]
        %v5211 = vld [vmem:[#allocation9 + $0x4] sm:$0xf]
        %v5212 = vld [vmem:[#allocation9 + $0x8] sm:$0xf]
        %v5213 = vld [vmem:[#allocation9 + $0xc] sm:$0xf]
        %v5214 = vld [vmem:[#allocation9 + $0x10] sm:$0xf]
        %v5215 = vld [vmem:[#allocation9 + $0x14] sm:$0xf]
        %v5216 = vld [vmem:[#allocation9 + $0x18] sm:$0xf]
        %v5217 = vld [vmem:[#allocation9 + $0x1c] sm:$0xf]
        %v5218 = vld [vmem:[#allocation9 + $0x20] sm:$0xf]
        %v5219 = vld [vmem:[#allocation9 + $0x24] sm:$0xf]
        %v5220 = vld [vmem:[#allocation9 + $0x28] sm:$0xf]
        %v5221 = vld [vmem:[#allocation9 + $0x2c] sm:$0xf]
        %v5222 = vld [vmem:[#allocation9 + $0x30] sm:$0xf]
        %v5223 = vld [vmem:[#allocation9 + $0x34] sm:$0xf]
        %v5224 = vld [vmem:[#allocation9 + $0x38] sm:$0xf]
        %v5225 = vld [vmem:[#allocation9 + $0x3c] sm:$0xf]
        %v5226 = vld [vmem:[%s6] sm:$0x1]
        %v5228 = vperm.slane %v5226, 0
        %v5246 = vunpack.c.l.b16 %v5210
        %v5247 = vunpack.c.l.b16 %v5211
        %v5248 = vunpack.c.l.b16 %v5212
        %v5249 = vunpack.c.l.b16 %v5213
        %v5250 = vunpack.c.l.b16 %v5214
        %v5251 = vunpack.c.l.b16 %v5215
        %v5252 = vunpack.c.l.b16 %v5216
        %v5253 = vunpack.c.l.b16 %v5217
        %v5254 = vunpack.c.l.b16 %v5218
        %v5255 = vunpack.c.l.b16 %v5219
        %v5256 = vunpack.c.l.b16 %v5220
        %v5257 = vunpack.c.l.b16 %v5221
        %v5258 = vunpack.c.l.b16 %v5222
        %v5259 = vunpack.c.l.b16 %v5223
        %v5260 = vunpack.c.l.b16 %v5224
        %v5261 = vunpack.c.l.b16 %v5225
        %v5262 = vpack.c.b16 %v5247, %v5246
        %v5263 = vpack.c.b16 %v5249, %v5248
        %v5264 = vpack.c.b16 %v5251, %v5250
        %v5265 = vpack.c.b16 %v5253, %v5252
        %v5266 = vpack.c.b16 %v5255, %v5254
        %v5267 = vpack.c.b16 %v5257, %v5256
        %v5268 = vpack.c.b16 %v5259, %v5258
        %v5269 = vpack.c.b16 %v5261, %v5260
        %5278 = vmatpush.bf16.msra.mxu0 %v5269
        %5279 = vmatpush.bf16.msra.mxu0 %v5268
        %5280 = vmatpush.bf16.msra.mxu0 %v5267
        %5281 = vmatpush.bf16.msra.mxu0 %v5266
        %5282 = vmatpush.bf16.msra.mxu0 %v5265
        %5283 = vmatpush.bf16.msra.mxu0 %v5264
        %5284 = vmatpush.bf16.msra.mxu0 %v5263
        %5285 = vmatpush.bf16.msra.mxu0 %v5262
        %5286 = vmatmul.bf16.gmra.mxu0 %v5194
        %v5287 = vpop.f32.mrf.mxu0
        %v5288 = vadd.f32 %v5228, %v5287
        %v5289 = vpop.f32.mrf.mxu0
        %v5290 = vadd.f32 %v5228, %v5289
        %5291 = vmatmul.bf16.gmra.mxu0 %v5195
        %v5292 = vpop.f32.mrf.mxu0
        %v5293 = vadd.f32 %v5228, %v5292
        %v5294 = vpop.f32.mrf.mxu0
        %v5295 = vadd.f32 %v5228, %v5294
        %5296 = vmatmul.bf16.gmra.mxu0 %v5196
        %v5297 = vpop.f32.mrf.mxu0
        %v5298 = vadd.f32 %v5228, %v5297
        %v5299 = vpop.f32.mrf.mxu0
        %v5300 = vadd.f32 %v5228, %v5299
        %5301 = vmatmul.bf16.gmra.mxu0 %v5197
        %v5302 = vpop.f32.mrf.mxu0
        %v5303 = vadd.f32 %v5228, %v5302
        %v5304 = vpop.f32.mrf.mxu0
        %v5305 = vadd.f32 %v5228, %v5304
        %5306 = vmatmul.bf16.gmra.mxu0 %v5198
        %v5307 = vpop.f32.mrf.mxu0
        %v5308 = vadd.f32 %v5228, %v5307
        %v5309 = vpop.f32.mrf.mxu0
        %v5310 = vadd.f32 %v5228, %v5309
        %5311 = vmatmul.bf16.gmra.mxu0 %v5199
        %v5312 = vpop.f32.mrf.mxu0
        %v5313 = vadd.f32 %v5228, %v5312
        %v5314 = vpop.f32.mrf.mxu0
        %v5315 = vadd.f32 %v5228, %v5314
        %5316 = vmatmul.bf16.gmra.mxu0 %v5200
        %v5317 = vpop.f32.mrf.mxu0
        %v5318 = vadd.f32 %v5228, %v5317
        %v5319 = vpop.f32.mrf.mxu0
        %v5320 = vadd.f32 %v5228, %v5319
        %5321 = vmatmul.bf16.gmra.mxu0 %v5201
        %v5322 = vpop.f32.mrf.mxu0
        %v5323 = vadd.f32 %v5228, %v5322
        %v5324 = vpop.f32.mrf.mxu0
        %v5325 = vadd.f32 %v5228, %v5324
        %5326 = vmatmul.bf16.gmra.mxu0 %v5202
        %v5327 = vpop.f32.mrf.mxu0
        %v5328 = vadd.f32 %v5228, %v5327
        %v5329 = vpop.f32.mrf.mxu0
        %v5330 = vadd.f32 %v5228, %v5329
        %5331 = vmatmul.bf16.gmra.mxu0 %v5203
        %v5332 = vpop.f32.mrf.mxu0
        %v5333 = vadd.f32 %v5228, %v5332
        %v5334 = vpop.f32.mrf.mxu0
        %v5335 = vadd.f32 %v5228, %v5334
        %5336 = vmatmul.bf16.gmra.mxu0 %v5204
        %v5337 = vpop.f32.mrf.mxu0
        %v5338 = vadd.f32 %v5228, %v5337
        %v5339 = vpop.f32.mrf.mxu0
        %v5340 = vadd.f32 %v5228, %v5339
        %5341 = vmatmul.bf16.gmra.mxu0 %v5205
        %v5342 = vpop.f32.mrf.mxu0
        %v5343 = vadd.f32 %v5228, %v5342
        %v5344 = vpop.f32.mrf.mxu0
        %v5345 = vadd.f32 %v5228, %v5344
        %5346 = vmatmul.bf16.gmra.mxu0 %v5206
        %v5347 = vpop.f32.mrf.mxu0
        %v5348 = vadd.f32 %v5228, %v5347
        %v5349 = vpop.f32.mrf.mxu0
        %v5350 = vadd.f32 %v5228, %v5349
        %5351 = vmatmul.bf16.gmra.mxu0 %v5207
        %v5352 = vpop.f32.mrf.mxu0
        %v5353 = vadd.f32 %v5228, %v5352
        %v5354 = vpop.f32.mrf.mxu0
        %v5355 = vadd.f32 %v5228, %v5354
        %5356 = vmatmul.bf16.gmra.mxu0 %v5208
        %v5357 = vpop.f32.mrf.mxu0
        %v5358 = vadd.f32 %v5228, %v5357
        %v5359 = vpop.f32.mrf.mxu0
        %v5360 = vadd.f32 %v5228, %v5359
        %5361 = vmatmul.bf16.gmra.mxu0 %v5209
        %v5362 = vpop.f32.mrf.mxu0
        %v5363 = vadd.f32 %v5228, %v5362
        %v5364 = vpop.f32.mrf.mxu0
        %v5365 = vadd.f32 %v5228, %v5364
        %5366 = vdwg.mxu0
        %v5367 = vld [vmem:[#allocation11] sm:$0xf]
        %v5368 = vld [vmem:[#allocation11 + $0x4] sm:$0xf]
        %v5369 = vld [vmem:[#allocation11 + $0x8] sm:$0xf]
        %v5370 = vld [vmem:[#allocation11 + $0xc] sm:$0xf]
        %v5371 = vld [vmem:[#allocation11 + $0x10] sm:$0xf]
        %v5372 = vld [vmem:[#allocation11 + $0x14] sm:$0xf]
        %v5373 = vld [vmem:[#allocation11 + $0x18] sm:$0xf]
        %v5374 = vld [vmem:[#allocation11 + $0x1c] sm:$0xf]
        %v5375 = vld [vmem:[#allocation11 + $0x20] sm:$0xf]
        %v5376 = vld [vmem:[#allocation11 + $0x24] sm:$0xf]
        %v5377 = vld [vmem:[#allocation11 + $0x28] sm:$0xf]
        %v5378 = vld [vmem:[#allocation11 + $0x2c] sm:$0xf]
        %v5379 = vld [vmem:[#allocation11 + $0x30] sm:$0xf]
        %v5380 = vld [vmem:[#allocation11 + $0x34] sm:$0xf]
        %v5381 = vld [vmem:[#allocation11 + $0x38] sm:$0xf]
        %v5382 = vld [vmem:[#allocation11 + $0x3c] sm:$0xf]
        %v5383 = vld [vmem:[%s8] sm:$0x1]
        %v5385 = vperm.slane %v5383, 0
        %v5403 = vunpack.c.l.b16 %v5367
        %v5404 = vunpack.c.l.b16 %v5368
        %v5405 = vunpack.c.l.b16 %v5369
        %v5406 = vunpack.c.l.b16 %v5370
        %v5407 = vunpack.c.l.b16 %v5371
        %v5408 = vunpack.c.l.b16 %v5372
        %v5409 = vunpack.c.l.b16 %v5373
        %v5410 = vunpack.c.l.b16 %v5374
        %v5411 = vunpack.c.l.b16 %v5375
        %v5412 = vunpack.c.l.b16 %v5376
        %v5413 = vunpack.c.l.b16 %v5377
        %v5414 = vunpack.c.l.b16 %v5378
        %v5415 = vunpack.c.l.b16 %v5379
        %v5416 = vunpack.c.l.b16 %v5380
        %v5417 = vunpack.c.l.b16 %v5381
        %v5418 = vunpack.c.l.b16 %v5382
        %v5419 = vpack.c.b16 %v5404, %v5403
        %v5420 = vpack.c.b16 %v5406, %v5405
        %v5421 = vpack.c.b16 %v5408, %v5407
        %v5422 = vpack.c.b16 %v5410, %v5409
        %v5423 = vpack.c.b16 %v5412, %v5411
        %v5424 = vpack.c.b16 %v5414, %v5413
        %v5425 = vpack.c.b16 %v5416, %v5415
        %v5426 = vpack.c.b16 %v5418, %v5417
        %5435 = vmatpush.bf16.msra.mxu0 %v5426
        %5436 = vmatpush.bf16.msra.mxu0 %v5425
        %5437 = vmatpush.bf16.msra.mxu0 %v5424
        %5438 = vmatpush.bf16.msra.mxu0 %v5423
        %5439 = vmatpush.bf16.msra.mxu0 %v5422
        %5440 = vmatpush.bf16.msra.mxu0 %v5421
        %5441 = vmatpush.bf16.msra.mxu0 %v5420
        %5442 = vmatpush.bf16.msra.mxu0 %v5419
        %5443 = vmatmul.bf16.gmra.mxu0 %v536
        %v5444 = vpop.f32.mrf.mxu0
        %v5445 = vadd.f32 %v5385, %v5444
        %v5446 = vpop.f32.mrf.mxu0
        %v5447 = vadd.f32 %v5385, %v5446
        %5448 = vmatmul.bf16.gmra.mxu0 %v537
        %v5449 = vpop.f32.mrf.mxu0
        %v5450 = vadd.f32 %v5385, %v5449
        %v5451 = vpop.f32.mrf.mxu0
        %v5452 = vadd.f32 %v5385, %v5451
        %5453 = vmatmul.bf16.gmra.mxu0 %v538
        %v5454 = vpop.f32.mrf.mxu0
        %v5455 = vadd.f32 %v5385, %v5454
        %v5456 = vpop.f32.mrf.mxu0
        %v5457 = vadd.f32 %v5385, %v5456
        %5458 = vmatmul.bf16.gmra.mxu0 %v539
        %v5459 = vpop.f32.mrf.mxu0
        %v5460 = vadd.f32 %v5385, %v5459
        %v5461 = vpop.f32.mrf.mxu0
        %v5462 = vadd.f32 %v5385, %v5461
        %5463 = vmatmul.bf16.gmra.mxu0 %v540
        %v5464 = vpop.f32.mrf.mxu0
        %v5465 = vadd.f32 %v5385, %v5464
        %v5466 = vpop.f32.mrf.mxu0
        %v5467 = vadd.f32 %v5385, %v5466
        %5468 = vmatmul.bf16.gmra.mxu0 %v541
        %v5469 = vpop.f32.mrf.mxu0
        %v5470 = vadd.f32 %v5385, %v5469
        %v5471 = vpop.f32.mrf.mxu0
        %v5472 = vadd.f32 %v5385, %v5471
        %5473 = vmatmul.bf16.gmra.mxu0 %v542
        %v5474 = vpop.f32.mrf.mxu0
        %v5475 = vadd.f32 %v5385, %v5474
        %v5476 = vpop.f32.mrf.mxu0
        %v5477 = vadd.f32 %v5385, %v5476
        %5478 = vmatmul.bf16.gmra.mxu0 %v543
        %v5479 = vpop.f32.mrf.mxu0
        %v5480 = vadd.f32 %v5385, %v5479
        %v5481 = vpop.f32.mrf.mxu0
        %v5482 = vadd.f32 %v5385, %v5481
        %5483 = vmatmul.bf16.gmra.mxu0 %v544
        %v5484 = vpop.f32.mrf.mxu0
        %v5485 = vadd.f32 %v5385, %v5484
        %v5486 = vpop.f32.mrf.mxu0
        %v5487 = vadd.f32 %v5385, %v5486
        %5488 = vmatmul.bf16.gmra.mxu0 %v545
        %v5489 = vpop.f32.mrf.mxu0
        %v5490 = vadd.f32 %v5385, %v5489
        %v5491 = vpop.f32.mrf.mxu0
        %v5492 = vadd.f32 %v5385, %v5491
        %5493 = vmatmul.bf16.gmra.mxu0 %v546
        %v5494 = vpop.f32.mrf.mxu0
        %v5495 = vadd.f32 %v5385, %v5494
        %v5496 = vpop.f32.mrf.mxu0
        %v5497 = vadd.f32 %v5385, %v5496
        %5498 = vmatmul.bf16.gmra.mxu0 %v547
        %v5499 = vpop.f32.mrf.mxu0
        %v5500 = vadd.f32 %v5385, %v5499
        %v5501 = vpop.f32.mrf.mxu0
        %v5502 = vadd.f32 %v5385, %v5501
        %5503 = vmatmul.bf16.gmra.mxu0 %v548
        %v5504 = vpop.f32.mrf.mxu0
        %v5505 = vadd.f32 %v5385, %v5504
        %v5506 = vpop.f32.mrf.mxu0
        %v5507 = vadd.f32 %v5385, %v5506
        %5508 = vmatmul.bf16.gmra.mxu0 %v549
        %v5509 = vpop.f32.mrf.mxu0
        %v5510 = vadd.f32 %v5385, %v5509
        %v5511 = vpop.f32.mrf.mxu0
        %v5512 = vadd.f32 %v5385, %v5511
        %5513 = vmatmul.bf16.gmra.mxu0 %v550
        %v5514 = vpop.f32.mrf.mxu0
        %v5515 = vadd.f32 %v5385, %v5514
        %v5516 = vpop.f32.mrf.mxu0
        %v5517 = vadd.f32 %v5385, %v5516
        %5518 = vmatmul.bf16.gmra.mxu0 %v551
        %v5519 = vpop.f32.mrf.mxu0
        %v5520 = vadd.f32 %v5385, %v5519
        %v5521 = vpop.f32.mrf.mxu0
        %v5522 = vadd.f32 %v5385, %v5521
        %5523 = vdwg.mxu0
        %v5524 = vadd.f32 %v5288, %v5445
        %v5525 = vadd.f32 %v5290, %v5447
        %v5526 = vadd.f32 %v5293, %v5450
        %v5527 = vadd.f32 %v5295, %v5452
        %v5528 = vadd.f32 %v5298, %v5455
        %v5529 = vadd.f32 %v5300, %v5457
        %v5530 = vadd.f32 %v5303, %v5460
        %v5531 = vadd.f32 %v5305, %v5462
        %v5532 = vadd.f32 %v5308, %v5465
        %v5533 = vadd.f32 %v5310, %v5467
        %v5534 = vadd.f32 %v5313, %v5470
        %v5535 = vadd.f32 %v5315, %v5472
        %v5536 = vadd.f32 %v5318, %v5475
        %v5537 = vadd.f32 %v5320, %v5477
        %v5538 = vadd.f32 %v5323, %v5480
        %v5539 = vadd.f32 %v5325, %v5482
        %v5540 = vadd.f32 %v5328, %v5485
        %v5541 = vadd.f32 %v5330, %v5487
        %v5542 = vadd.f32 %v5333, %v5490
        %v5543 = vadd.f32 %v5335, %v5492
        %v5544 = vadd.f32 %v5338, %v5495
        %v5545 = vadd.f32 %v5340, %v5497
        %v5546 = vadd.f32 %v5343, %v5500
        %v5547 = vadd.f32 %v5345, %v5502
        %v5548 = vadd.f32 %v5348, %v5505
        %v5549 = vadd.f32 %v5350, %v5507
        %v5550 = vadd.f32 %v5353, %v5510
        %v5551 = vadd.f32 %v5355, %v5512
        %v5552 = vadd.f32 %v5358, %v5515
        %v5553 = vadd.f32 %v5360, %v5517
        %v5554 = vadd.f32 %v5363, %v5520
        %v5555 = vadd.f32 %v5365, %v5522
        %v5556 = vmax.f32 %v5524, 0.0
        %v5557 = vmax.f32 %v5525, 0.0
        %v5558 = vmax.f32 %v5526, 0.0
        %v5559 = vmax.f32 %v5527, 0.0
        %v5560 = vmax.f32 %v5528, 0.0
        %v5561 = vmax.f32 %v5529, 0.0
        %v5562 = vmax.f32 %v5530, 0.0
        %v5563 = vmax.f32 %v5531, 0.0
        %v5564 = vmax.f32 %v5532, 0.0
        %v5565 = vmax.f32 %v5533, 0.0
        %v5566 = vmax.f32 %v5534, 0.0
        %v5567 = vmax.f32 %v5535, 0.0
        %v5568 = vmax.f32 %v5536, 0.0
        %v5569 = vmax.f32 %v5537, 0.0
        %v5570 = vmax.f32 %v5538, 0.0
        %v5571 = vmax.f32 %v5539, 0.0
        %v5572 = vmax.f32 %v5540, 0.0
        %v5573 = vmax.f32 %v5541, 0.0
        %v5574 = vmax.f32 %v5542, 0.0
        %v5575 = vmax.f32 %v5543, 0.0
        %v5576 = vmax.f32 %v5544, 0.0
        %v5577 = vmax.f32 %v5545, 0.0
        %v5578 = vmax.f32 %v5546, 0.0
        %v5579 = vmax.f32 %v5547, 0.0
        %v5580 = vmax.f32 %v5548, 0.0
        %v5581 = vmax.f32 %v5549, 0.0
        %v5582 = vmax.f32 %v5550, 0.0
        %v5583 = vmax.f32 %v5551, 0.0
        %v5584 = vmax.f32 %v5552, 0.0
        %v5585 = vmax.f32 %v5553, 0.0
        %v5586 = vmax.f32 %v5554, 0.0
        %v5587 = vmax.f32 %v5555, 0.0
        %5588 = vst [vmem:[%s418] sm:$0xff] %v5556
        %5589 = vst [vmem:[%s418 + $0x8] sm:$0xff] %v5557
        %5590 = vst [vmem:[%s418 + $0x10] sm:$0xff] %v5558
        %5591 = vst [vmem:[%s418 + $0x18] sm:$0xff] %v5559
        %5592 = vst [vmem:[%s418 + $0x20] sm:$0xff] %v5560
        %5593 = vst [vmem:[%s418 + $0x28] sm:$0xff] %v5561
        %5594 = vst [vmem:[%s418 + $0x30] sm:$0xff] %v5562
        %5595 = vst [vmem:[%s418 + $0x38] sm:$0xff] %v5563
        %5596 = vst [vmem:[%s418 + $0x40] sm:$0xff] %v5564
        %5597 = vst [vmem:[%s418 + $0x48] sm:$0xff] %v5565
        %5598 = vst [vmem:[%s418 + $0x50] sm:$0xff] %v5566
        %5599 = vst [vmem:[%s418 + $0x58] sm:$0xff] %v5567
        %5600 = vst [vmem:[%s418 + $0x60] sm:$0xff] %v5568
        %5601 = vst [vmem:[%s418 + $0x68] sm:$0xff] %v5569
        %5602 = vst [vmem:[%s418 + $0x70] sm:$0xff] %v5570
        %5603 = vst [vmem:[%s418 + $0x78] sm:$0xff] %v5571
        %5604 = vst [vmem:[%s418 + $0x80] sm:$0xff] %v5572
        %5605 = vst [vmem:[%s418 + $0x88] sm:$0xff] %v5573
        %5606 = vst [vmem:[%s418 + $0x90] sm:$0xff] %v5574
        %5607 = vst [vmem:[%s418 + $0x98] sm:$0xff] %v5575
        %5608 = vst [vmem:[%s418 + $0xa0] sm:$0xff] %v5576
        %5609 = vst [vmem:[%s418 + $0xa8] sm:$0xff] %v5577
        %5610 = vst [vmem:[%s418 + $0xb0] sm:$0xff] %v5578
        %5611 = vst [vmem:[%s418 + $0xb8] sm:$0xff] %v5579
        %5612 = vst [vmem:[%s418 + $0xc0] sm:$0xff] %v5580
        %5613 = vst [vmem:[%s418 + $0xc8] sm:$0xff] %v5581
        %5614 = vst [vmem:[%s418 + $0xd0] sm:$0xff] %v5582
        %5615 = vst [vmem:[%s418 + $0xd8] sm:$0xff] %v5583
        %5616 = vst [vmem:[%s418 + $0xe0] sm:$0xff] %v5584
        %5617 = vst [vmem:[%s418 + $0xe8] sm:$0xff] %v5585
        %5618 = vst [vmem:[%s418 + $0xf0] sm:$0xff] %v5586
        %5619 = vst [vmem:[%s418 + $0xf8] sm:$0xff] %v5587
        %s5620 = sand.u32 %s230, 1
        %s5621 = scalar_lea.sflag [#allocation5], %s5620
        %s5622 = sand.u32 %s230, 1
        %s5623 = smul.addr %s5622, 256
        %s5624 = scalar_lea.vmem [#allocation12], %s5623
        // Predicated region
        $region77: #{tpu_custom_call.1} parent=55 // pred_check
          %p5625 = pneg %p240
        $region78: #{tpu_custom_call.1} parent=55 // pred_check_branch
          %5627 = sbr.rel (%p5625) target = $region80
        $region79: #{tpu_custom_call.1} parent=55 // pred_region
          %5629 = vsyncadd %s5621, 0
          %s5630 = smul.addr %s28, 32
          %s5631 = smul.addr %s5630, 8
          %s5632 = scalar_lea.hbm %s9, %s5631
          %s5633 = sshll.u32 %s5624, 4
          %s5634 = int_to_ptr.vmem [resolvable:$true] %s5633
          %s5635 = sshll.u32 %s5632, 4
          %s5636 = int_to_ptr.hbm [resolvable:$true] %s5635
          %5641 = dma.vmem_to_hbm [thread:$0]  %s5634, 4096, %s5636, %s5621, 128, 128, 8
        $region80: #{tpu_custom_call.1} parent=55 // pred_fallthru
          _
      $region56: #{tpu_custom_call.1} parent=5 // pred_fallthru
        _
      %p5642 = scmp.le.s32.totalorder 2, %s23
      // Predicated region
      $region81: #{tpu_custom_call.1} parent=5 // pred_check
        %p5643 = pneg %p5642
      $region82: #{tpu_custom_call.1} parent=5 // pred_check_branch
        %5645 = sbr.rel (%p5643) target = $region84
      $region83: #{tpu_custom_call.1} parent=5 // pred_region
        %s5646 = ssub.s32 %s23, 2
        // Predicated region
        $region85: #{tpu_custom_call.1} parent=83 // pred_check
          %p5647 = pneg %p246
        $region86: #{tpu_custom_call.1} parent=83 // pred_check_branch
          %5649 = sbr.rel (%p5647) target = $region88
        $region87: #{tpu_custom_call.1} parent=83 // pred_region
          %s5650 = sand.u32 %s231, 1
          %s5651 = scalar_lea.sflag [#allocation5], %s5650
          %s5652 = sand.u32 %s231, 1
          %s5653 = smul.addr %s5652, 256
          %s5654 = scalar_lea.vmem [#allocation12], %s5653
          %5656 = dma.done %s5651, 4096
        $region88: #{tpu_custom_call.1} parent=83 // pred_fallthru
          _
      $region84: #{tpu_custom_call.1} parent=5 // pred_fallthru
        _
    $region6: #{tpu_custom_call.1} parent=1 // loop_footer
      %s27 = sadd.s32 1, %s23
    $region7: #{tpu_custom_call.1} parent=1 // loop_footer_branch
      %22 = sbr.rel target = $region3
    $region8: #{tpu_custom_call.1} parent=1 // loop_exit
      _
    %5657 = vsyncpa [#allocation4], 1
    %s5658 = scalar_lea.sflag [#allocation4], 1
    %5659 = vsyncpa %s5658, 1
    %5660 = vsyncpa [#allocation7], 1
    %5661 = vsyncpa [#allocation10], 1
    %5662 = vsyncpa [#allocation5], 1
    %s5663 = scalar_lea.sflag [#allocation5], 1
    %5664 = vsyncpa %s5663, 1

</llo_original>
